<compile_context>
chip_gen: v6e
topology: v6e:2x2x1
jax: 0.10.0
libtpu: 0.0.40
codegen_flags: <defaults>
</compile_context>

<pallas_src>
import functools
import math

import numpy as np
import jax
import jax.numpy as jnp
from jax.experimental import pallas as pl
from jax.experimental.pallas import tpu as pltpu


# Eval-mode BatchNorm2d with default (untrained) running stats:
#   y = (x - 0) / sqrt(1 + 1e-5) * 1 + 0
# TODO(synk): training-mode BatchNorm (batch statistics / learned affine) not reproduced.
_BN_SCALE = 1.0 / math.sqrt(1.0 + 1e-5)


def _round_up(v, m):
    return ((v + m - 1) // m) * m


# ----------------------------------------------------------------------------
# Pallas kernel: tiled matmul, f32 accumulator, fused bias/BN/ReLU/residual
# ----------------------------------------------------------------------------
def _mm_accumulate(x_ref, w_ref, acc_ref):
    @pl.when(pl.program_id(2) == 0)
    def _():
        acc_ref[...] = jnp.zeros_like(acc_ref)

    acc_ref[...] += jnp.dot(
        x_ref[...], w_ref[...], preferred_element_type=jnp.float32
    )


def _epilogue(acc, b_ref, r_ref, o_ref, act, has_residual):
    acc = acc + b_ref[...]
    if act == "relu":
        acc = jnp.maximum(acc, 0.0)
    elif act == "bn_relu":
        acc = jnp.maximum(acc * _BN_SCALE, 0.0)
    if has_residual:
        acc = acc + r_ref[...]
    o_ref[...] = acc.astype(o_ref.dtype)


def _mm_kernel_factory(act, has_residual):
    if has_residual:
        def kernel(x_ref, w_ref, b_ref, r_ref, o_ref, acc_ref):
            _mm_accumulate(x_ref, w_ref, acc_ref)

            @pl.when(pl.program_id(2) == pl.num_programs(2) - 1)
            def _():
                _epilogue(acc_ref[...], b_ref, r_ref, o_ref, act, True)
    else:
        def kernel(x_ref, w_ref, b_ref, o_ref, acc_ref):
            _mm_accumulate(x_ref, w_ref, acc_ref)

            @pl.when(pl.program_id(2) == pl.num_programs(2) - 1)
            def _():
                _epilogue(acc_ref[...], b_ref, None, o_ref, act, False)

    return kernel


def _k_pad(K):
    # K tile: single step up to 512, otherwise 512-wide K steps.
    return _round_up(K, 128) if K <= 512 else _round_up(K, 512)


def matmul_bias_act(patches, wp, act="none", residual=None, keep_padded=False,
                    out_dtype=jnp.float32):
    """patches: (M, K) bf16 (or f32).  wp: pre-padded weight dict.
    Returns (M, N) out_dtype (or the padded (Mp, Np) array if keep_padded)."""
    M, K = patches.shape
    assert K == wp["K"], (K, wp["K"])
    Kp, Np, N = wp["Kp"], wp["Np"], wp["N"]

    # Large tiles (better HBM-roofline fraction); multiples of 16 so bf16
    # operands / outputs stay on native (16, 128) tiles.
    tm = min(512, _round_up(M, 16))
    Mp = _round_up(M, tm)
    tk = min(Kp, 512)
    tn = 256 if (Np % 256 == 0 and Np >= 256) else 128

    # Only the activation side is padded inside jit (bf16 -> native MXU path).
    xpad = jnp.pad(patches.astype(jnp.bfloat16), ((0, Mp - M), (0, Kp - K)))

    inputs = [xpad, wp["wmat"], wp["bias"]]
    in_specs = [
        pl.BlockSpec((tm, tk), lambda i, j, k: (i, k)),
        pl.BlockSpec((tk, tn), lambda i, j, k: (k, j)),
        pl.BlockSpec((1, tn), lambda i, j, k: (0, j)),
    ]
    has_res = residual is not None
    if has_res:
        assert residual.shape == (Mp, Np), (residual.shape, (Mp, Np))
        inputs.append(residual.astype(jnp.float32))
        in_specs.append(pl.BlockSpec((tm, tn), lambda i, j, k: (i, j)))

    grid = (Mp // tm, Np // tn, Kp // tk)
    out_bytes = Mp * Np * jnp.dtype(out_dtype).itemsize
    flops = 2 * Mp * Kp * Np
    bytes_accessed = (Mp * Kp + Kp * Np) * 2 + Np * 4 + out_bytes
    if has_res:
        bytes_accessed += Mp * Np * 4

    out = pl.pallas_call(
        _mm_kernel_factory(act, has_res),
        out_shape=jax.ShapeDtypeStruct((Mp, Np), out_dtype),
        grid=grid,
        in_specs=in_specs,
        out_specs=pl.BlockSpec((tm, tn), lambda i, j, k: (i, j)),
        scratch_shapes=[pltpu.VMEM((tm, tn), jnp.float32)],
        compiler_params=pltpu.CompilerParams(
            dimension_semantics=("parallel", "parallel", "arbitrary")
        ),
        cost_estimate=pl.CostEstimate(
            flops=flops, transcendentals=0, bytes_accessed=bytes_accessed
        ),
    )(*inputs)

    if keep_padded:
        return out
    return out[:M, :N]


# ----------------------------------------------------------------------------
# Conv / pixel-shuffle glue (NHWC, lane-preserving im2col, bf16)
# ----------------------------------------------------------------------------
def conv2d_nhwc(x, wp, act="none", residual=None, keep_padded=False,
                out_dtype=jnp.float32):
    """'same' conv on NHWC input using the pre-padded weight dict `wp`."""
    B, H, W, C = x.shape
    assert C == wp["cin"], (C, wp["cin"])
    x = x.astype(jnp.bfloat16)          # build patches directly in bf16
    k = wp["ksize"]
    if k == 1:
        patches = x.reshape(B * H * W, C)
    else:
        pad = k // 2
        xp = jnp.pad(x, ((0, 0), (pad, pad), (pad, pad), (0, 0)))
        # Channels-last shifted slices: lane-preserving, no transposes.
        cols = [xp[:, i:i + H, j:j + W, :] for i in range(k) for j in range(k)]
        patches = jnp.concatenate(cols, axis=-1).reshape(B * H * W, k * k * C)

    out = matmul_bias_act(patches, wp, act=act, residual=residual,
                          keep_padded=keep_padded, out_dtype=out_dtype)
    if keep_padded:
        return out
    return out.reshape(B, H, W, wp["cout"])


def pixel_shuffle2_nhwc(x):
    """PyTorch PixelShuffle(2) semantics, NHWC layout."""
    B, H, W, C = x.shape
    r = 2
    co = C // (r * r)
    x = x.reshape(B, H, W, co, r, r)
    x = x.transpose(0, 1, 4, 2, 5, 3)
    return x.reshape(B, H * r, W * r, co)


# ----------------------------------------------------------------------------
# Module forwards
# ----------------------------------------------------------------------------
def res_double_conv(x, p):
    # channel-adjust 1x1 conv; kept in padded (Mp, Np) f32 layout so it can be
    # added inside the second conv's epilogue (no slice + re-pad round trip).
    adj_padded = conv2d_nhwc(x, p["adj"], keep_padded=True)
    # first conv + BN + ReLU, bf16 output (feeds the next conv's bf16 patches).
    h = conv2d_nhwc(x, p["c1"], act="bn_relu", out_dtype=jnp.bfloat16)
    # conv2 + BN + ReLU + residual add, all fused in one kernel epilogue (f32).
    return conv2d_nhwc(h, p["c2"], act="bn_relu", residual=adj_padded)


def res_up(x1, x2, p):
    """x1: (B, H, W, C_in) NHWC; x2: (B, ~2H, ~2W, C_in//2) NHWC."""
    x1 = pixel_shuffle2_nhwc(x1)
    # up-conv output stays bf16: it is only consumed as bf16 MXU input later.
    x1 = conv2d_nhwc(x1, p["up"], out_dtype=jnp.bfloat16)
    diffY = x2.shape[1] - x1.shape[1]
    diffX = x2.shape[2] - x1.shape[2]
    x1 = jnp.pad(
        x1,
        ((0, 0),
         (diffY // 2, diffY - diffY // 2),
         (diffX // 2, diffX - diffX // 2),
         (0, 0)),
    )
    x = jnp.concatenate([x2.astype(jnp.bfloat16), x1], axis=-1)  # cat([x2, x1], dim=1)
    return res_double_conv(x, p["conv"])


def res_up_forward(x1_nchw, x2_nchw, params):
    """NCHW in / NCHW out (PyTorch interface); NHWC internally."""
    x1 = jnp.transpose(x1_nchw, (0, 2, 3, 1))
    x2 = jnp.transpose(x2_nchw, (0, 2, 3, 1))
    out = res_up(x1, x2, params)
    return jnp.transpose(out, (0, 3, 1, 2))


# ----------------------------------------------------------------------------
# Parameter construction (PyTorch-style init, weights pre-padded ONCE)
# ----------------------------------------------------------------------------
class ParamGen:
    def __init__(self, seed=0):
        self.key = jax.random.PRNGKey(seed)

    def _next(self):
        self.key, sub = jax.random.split(self.key)
        return sub

    def conv(self, cout, cin, k):
        bound = 1.0 / np.sqrt(cin * k * k)
        w = jax.random.uniform(self._next(), (cout, cin, k, k), jnp.float32,
                               -bound, bound)
        b = jax.random.uniform(self._next(), (cout,), jnp.float32, -bound, bound)
        return w, b


def prep_conv(w, b):
    """PyTorch OIHW weight -> pre-transposed, pre-padded (Kp, Np) bf16 matrix
    for NHWC im2col ordering (tap-major, channel-minor) plus padded bias."""
    cout, cin, kh, kw = w.shape
    K = kh * kw * cin
    N = cout
    Kp = _k_pad(K)
    Np = _round_up(N, 128)
    wmat = jnp.transpose(w, (2, 3, 1, 0)).reshape(K, N)   # k index = (i*kw+j)*cin + c
    wpad = jnp.zeros((Kp, Np), jnp.bfloat16).at[:K, :N].set(wmat.astype(jnp.bfloat16))
    bpad = jnp.zeros((1, Np), jnp.float32).at[0, :N].set(b.astype(jnp.float32))
    return {"wmat": wpad, "bias": bpad, "ksize": kh,
            "cin": cin, "cout": cout, "K": K, "N": N, "Kp": Kp, "Np": Np}


def make_resup_params(pg, in_channels, out_channels, kernel_size=3):
    p = {}
    # self.up = PixelShuffle(2) -> Conv2d(in//4, in//2, k, padding=k//2)
    w, b = pg.conv(in_channels // 2, in_channels // 4, kernel_size)
    p["up"] = prep_conv(w, b)
    # self.conv = ResDoubleConv(in_channels, out_channels)  (mid = out)
    conv = {}
    w, b = pg.conv(out_channels, in_channels, 3)
    conv["c1"] = prep_conv(w, b)
    w, b = pg.conv(out_channels, out_channels, 3)
    conv["c2"] = prep_conv(w, b)
    w, b = pg.conv(out_channels, in_channels, 1)
    conv["adj"] = prep_conv(w, b)
    p["conv"] = conv
    return p


# ----------------------------------------------------------------------------
if __name__ == "__main__":
    # ResUp(in_channels=16, out_channels=8, kernel_size=3)
    # x1: low-res / high-channel feature map, x2: skip connection.
    in_channels, out_channels, ksize = 16, 8, 3

    key = jax.random.PRNGKey(0)
    k1, k2 = jax.random.split(key)
    x1 = jax.random.normal(k1, (2, in_channels, 8, 8), jnp.float32)
    x2 = jax.random.normal(k2, (2, in_channels // 2, 16, 16), jnp.float32)

    pg = ParamGen(seed=0)
    params = make_resup_params(pg, in_channels, out_channels, ksize)

    fwd = jax.jit(functools.partial(res_up_forward, params=params))
    out = fwd(x1, x2)
    out = jax.block_until_ready(out)

    assert out.shape == (2, out_channels, 16, 16), out.shape
    assert bool(jnp.all(jnp.isfinite(out)))
    print("KERNEL_OK")
</pallas_src>

<mosaic_0001>
module attributes {stable_mosaic.version = 11 : i64} {
  func.func @kernel(%arg0: i32, %arg1: i32, %arg2: i32, %arg3: memref<512x128xbf16, #tpu.memory_space<vmem>>, %arg4: memref<128x128xbf16, #tpu.memory_space<vmem>>, %arg5: memref<1x128xf32, #tpu.memory_space<vmem>>, %arg6: memref<512x128xbf16, #tpu.memory_space<vmem>>, %arg7: memref<512x128xf32, #tpu.memory_space<vmem>>) attributes {dimension_semantics = [#tpu.dimension_semantics<parallel>, #tpu.dimension_semantics<parallel>, #tpu.dimension_semantics<arbitrary>], iteration_bounds = array<i64: 1, 1, 1>, scalar_prefetch = 0 : i64, scratch_operands = 1 : i64, tpu.core_type = #tpu.core_type<tc>, window_params = [{transform_indices = @transform_0, window_bounds = array<i64: 512, 128>}, {transform_indices = @transform_1, window_bounds = array<i64: 128, 128>}, {transform_indices = @transform_2, window_bounds = array<i64: 1, 128>}, {transform_indices = @transform_3, window_bounds = array<i64: 512, 128>}]} {
    %c0_i32 = arith.constant 0 : i32
    %0 = arith.cmpi eq, %arg2, %c0_i32 : i32
    %1 = arith.extui %0 : i1 to i32
    %c0_i32_0 = arith.constant 0 : i32
    %2 = arith.cmpi ne, %1, %c0_i32_0 : i32
    scf.if %2 {
      %cst_10 = arith.constant 0.000000e+00 : f32
      %12 = vector.broadcast %cst_10 : f32 to vector<512x128xf32>
      %c0_11 = arith.constant 0 : index
      %c0_12 = arith.constant 0 : index
      %13 = vector.load %arg7[%c0_11, %c0_12] : memref<512x128xf32, #tpu.memory_space<vmem>>, vector<512x128xf32>
      tpu.vector_store %arg7[%c0_11, %c0_12], %12 {strides = array<i32>} : memref<512x128xf32, #tpu.memory_space<vmem>>, vector<512x128xf32>,
    } else {
    }
    %c0 = arith.constant 0 : index
    %c0_1 = arith.constant 0 : index
    %3 = vector.load %arg7[%c0, %c0_1] : memref<512x128xf32, #tpu.memory_space<vmem>>, vector<512x128xf32>
    %c0_2 = arith.constant 0 : index
    %c0_3 = arith.constant 0 : index
    %4 = vector.load %arg3[%c0_2, %c0_3] : memref<512x128xbf16, #tpu.memory_space<vmem>>, vector<512x128xbf16>
    %c0_4 = arith.constant 0 : index
    %c0_5 = arith.constant 0 : index
    %5 = vector.load %arg4[%c0_4, %c0_5] : memref<128x128xbf16, #tpu.memory_space<vmem>>, vector<128x128xbf16>
    %cst = arith.constant dense<0.000000e+00> : vector<512x128xf32>
    %6 = tpu.matmul %4, %5, %cst {dimension_numbers = #tpu.dot_dimension_numbers<[1], [0], [0], [1], [0, 0, 1, 1], [], []>} : vector<512x128xbf16>, vector<128x128xbf16>, vector<512x128xf32> -> vector<512x128xf32>
    %7 = arith.addf %3, %6 : vector<512x128xf32>
    %c0_6 = arith.constant 0 : index
    %c0_7 = arith.constant 0 : index
    %8 = vector.load %arg7[%c0_6, %c0_7] : memref<512x128xf32, #tpu.memory_space<vmem>>, vector<512x128xf32>
    tpu.vector_store %arg7[%c0_6, %c0_7], %7 {strides = array<i32>} : memref<512x128xf32, #tpu.memory_space<vmem>>, vector<512x128xf32>,
    %c0_i32_8 = arith.constant 0 : i32
    %9 = arith.cmpi eq, %arg2, %c0_i32_8 : i32
    %10 = arith.extui %9 : i1 to i32
    %c0_i32_9 = arith.constant 0 : i32
    %11 = arith.cmpi ne, %10, %c0_i32_9 : i32
    scf.if %11 {
      %c0_10 = arith.constant 0 : index
      %c0_11 = arith.constant 0 : index
      %12 = vector.load %arg7[%c0_10, %c0_11] : memref<512x128xf32, #tpu.memory_space<vmem>>, vector<512x128xf32>
      %c0_12 = arith.constant 0 : index
      %c0_13 = arith.constant 0 : index
      %13 = vector.load %arg5[%c0_12, %c0_13] : memref<1x128xf32, #tpu.memory_space<vmem>>, vector<1x128xf32>
      %14 = vector.broadcast %13 : vector<1x128xf32> to vector<512x128xf32>
      %15 = arith.addf %12, %14 : vector<512x128xf32>
      %16 = arith.truncf %15 : vector<512x128xf32> to vector<512x128xbf16>
      %c0_14 = arith.constant 0 : index
      %c0_15 = arith.constant 0 : index
      %17 = vector.load %arg6[%c0_14, %c0_15] : memref<512x128xbf16, #tpu.memory_space<vmem>>, vector<512x128xbf16>
      tpu.vector_store %arg6[%c0_14, %c0_15], %16 {strides = array<i32>} : memref<512x128xbf16, #tpu.memory_space<vmem>>, vector<512x128xbf16>,
    } else {
    }
    return
  }
  func.func @transform_0(%arg0: i32, %arg1: i32, %arg2: i32) -> (i32, i32) {
    %c0_i32 = arith.constant 0 : i32
    return %arg0, %arg2 : i32, i32
  }
  func.func @transform_1(%arg0: i32, %arg1: i32, %arg2: i32) -> (i32, i32) {
    %c0_i32 = arith.constant 0 : i32
    return %arg2, %arg1 : i32, i32
  }
  func.func @transform_2(%arg0: i32, %arg1: i32, %arg2: i32) -> (i32, i32) {
    %c0_i32 = arith.constant 0 : i32
    %c0_i32_0 = arith.constant 0 : i32
    return %c0_i32, %arg1 : i32, i32
  }
  func.func @transform_3(%arg0: i32, %arg1: i32, %arg2: i32) -> (i32, i32) {
    %c0_i32 = arith.constant 0 : i32
    return %arg0, %arg1 : i32, i32
  }
}

module attributes {stable_mosaic.version = 11 : i64} {
  func.func @kernel(%arg0: i32, %arg1: i32, %arg2: i32, %arg3: memref<512x256xbf16, #tpu.memory_space<vmem>>, %arg4: memref<256x128xbf16, #tpu.memory_space<vmem>>, %arg5: memref<1x128xf32, #tpu.memory_space<vmem>>, %arg6: memref<512x128xbf16, #tpu.memory_space<vmem>>, %arg7: memref<512x128xf32, #tpu.memory_space<vmem>>) attributes {dimension_semantics = [#tpu.dimension_semantics<parallel>, #tpu.dimension_semantics<parallel>, #tpu.dimension_semantics<arbitrary>], iteration_bounds = array<i64: 1, 1, 1>, scalar_prefetch = 0 : i64, scratch_operands = 1 : i64, tpu.core_type = #tpu.core_type<tc>, window_params = [{transform_indices = @transform_0, window_bounds = array<i64: 512, 256>}, {transform_indices = @transform_1, window_bounds = array<i64: 256, 128>}, {transform_indices = @transform_2, window_bounds = array<i64: 1, 128>}, {transform_indices = @transform_3, window_bounds = array<i64: 512, 128>}]} {
    %c0_i32 = arith.constant 0 : i32
    %0 = arith.cmpi eq, %arg2, %c0_i32 : i32
    %1 = arith.extui %0 : i1 to i32
    %c0_i32_0 = arith.constant 0 : i32
    %2 = arith.cmpi ne, %1, %c0_i32_0 : i32
    scf.if %2 {
      %cst_10 = arith.constant 0.000000e+00 : f32
      %12 = vector.broadcast %cst_10 : f32 to vector<512x128xf32>
      %c0_11 = arith.constant 0 : index
      %c0_12 = arith.constant 0 : index
      %13 = vector.load %arg7[%c0_11, %c0_12] : memref<512x128xf32, #tpu.memory_space<vmem>>, vector<512x128xf32>
      tpu.vector_store %arg7[%c0_11, %c0_12], %12 {strides = array<i32>} : memref<512x128xf32, #tpu.memory_space<vmem>>, vector<512x128xf32>,
    } else {
    }
    %c0 = arith.constant 0 : index
    %c0_1 = arith.constant 0 : index
    %3 = vector.load %arg7[%c0, %c0_1] : memref<512x128xf32, #tpu.memory_space<vmem>>, vector<512x128xf32>
    %c0_2 = arith.constant 0 : index
    %c0_3 = arith.constant 0 : index
    %4 = vector.load %arg3[%c0_2, %c0_3] : memref<512x256xbf16, #tpu.memory_space<vmem>>, vector<512x256xbf16>
    %c0_4 = arith.constant 0 : index
    %c0_5 = arith.constant 0 : index
    %5 = vector.load %arg4[%c0_4, %c0_5] : memref<256x128xbf16, #tpu.memory_space<vmem>>, vector<256x128xbf16>
    %cst = arith.constant dense<0.000000e+00> : vector<512x128xf32>
    %6 = tpu.matmul %4, %5, %cst {dimension_numbers = #tpu.dot_dimension_numbers<[1], [0], [0], [1], [0, 0, 1, 1], [], []>} : vector<512x256xbf16>, vector<256x128xbf16>, vector<512x128xf32> -> vector<512x128xf32>
    %7 = arith.addf %3, %6 : vector<512x128xf32>
    %c0_6 = arith.constant 0 : index
    %c0_7 = arith.constant 0 : index
    %8 = vector.load %arg7[%c0_6, %c0_7] : memref<512x128xf32, #tpu.memory_space<vmem>>, vector<512x128xf32>
    tpu.vector_store %arg7[%c0_6, %c0_7], %7 {strides = array<i32>} : memref<512x128xf32, #tpu.memory_space<vmem>>, vector<512x128xf32>,
    %c0_i32_8 = arith.constant 0 : i32
    %9 = arith.cmpi eq, %arg2, %c0_i32_8 : i32
    %10 = arith.extui %9 : i1 to i32
    %c0_i32_9 = arith.constant 0 : i32
    %11 = arith.cmpi ne, %10, %c0_i32_9 : i32
    scf.if %11 {
      %c0_10 = arith.constant 0 : index
      %c0_11 = arith.constant 0 : index
      %12 = vector.load %arg7[%c0_10, %c0_11] : memref<512x128xf32, #tpu.memory_space<vmem>>, vector<512x128xf32>
      %c0_12 = arith.constant 0 : index
      %c0_13 = arith.constant 0 : index
      %13 = vector.load %arg5[%c0_12, %c0_13] : memref<1x128xf32, #tpu.memory_space<vmem>>, vector<1x128xf32>
      %14 = vector.broadcast %13 : vector<1x128xf32> to vector<512x128xf32>
      %15 = arith.addf %12, %14 : vector<512x128xf32>
      %cst_14 = arith.constant 0.999994993 : f32
      %16 = vector.broadcast %cst_14 : f32 to vector<512x128xf32>
      %17 = arith.mulf %15, %16 : vector<512x128xf32>
      %cst_15 = arith.constant 0.000000e+00 : f32
      %18 = vector.broadcast %cst_15 : f32 to vector<512x128xf32>
      %19 = arith.maximumf %17, %18 : vector<512x128xf32>
      %20 = arith.truncf %19 : vector<512x128xf32> to vector<512x128xbf16>
      %c0_16 = arith.constant 0 : index
      %c0_17 = arith.constant 0 : index
      %21 = vector.load %arg6[%c0_16, %c0_17] : memref<512x128xbf16, #tpu.memory_space<vmem>>, vector<512x128xbf16>
      tpu.vector_store %arg6[%c0_16, %c0_17], %20 {strides = array<i32>} : memref<512x128xbf16, #tpu.memory_space<vmem>>, vector<512x128xbf16>,
    } else {
    }
    return
  }
  func.func @transform_0(%arg0: i32, %arg1: i32, %arg2: i32) -> (i32, i32) {
    %c0_i32 = arith.constant 0 : i32
    return %arg0, %arg2 : i32, i32
  }
  func.func @transform_1(%arg0: i32, %arg1: i32, %arg2: i32) -> (i32, i32) {
    %c0_i32 = arith.constant 0 : i32
    return %arg2, %arg1 : i32, i32
  }
  func.func @transform_2(%arg0: i32, %arg1: i32, %arg2: i32) -> (i32, i32) {
    %c0_i32 = arith.constant 0 : i32
    %c0_i32_0 = arith.constant 0 : i32
    return %c0_i32, %arg1 : i32, i32
  }
  func.func @transform_3(%arg0: i32, %arg1: i32, %arg2: i32) -> (i32, i32) {
    %c0_i32 = arith.constant 0 : i32
    return %arg0, %arg1 : i32, i32
  }
}

module attributes {stable_mosaic.version = 11 : i64} {
  func.func @kernel(%arg0: i32, %arg1: i32, %arg2: i32, %arg3: memref<512x128xbf16, #tpu.memory_space<vmem>>, %arg4: memref<128x128xbf16, #tpu.memory_space<vmem>>, %arg5: memref<1x128xf32, #tpu.memory_space<vmem>>, %arg6: memref<512x128xf32, #tpu.memory_space<vmem>>, %arg7: memref<512x128xf32, #tpu.memory_space<vmem>>) attributes {dimension_semantics = [#tpu.dimension_semantics<parallel>, #tpu.dimension_semantics<parallel>, #tpu.dimension_semantics<arbitrary>], iteration_bounds = array<i64: 1, 1, 1>, scalar_prefetch = 0 : i64, scratch_operands = 1 : i64, tpu.core_type = #tpu.core_type<tc>, window_params = [{transform_indices = @transform_0, window_bounds = array<i64: 512, 128>}, {transform_indices = @transform_1, window_bounds = array<i64: 128, 128>}, {transform_indices = @transform_2, window_bounds = array<i64: 1, 128>}, {transform_indices = @transform_3, window_bounds = array<i64: 512, 128>}]} {
    %c0_i32 = arith.constant 0 : i32
    %0 = arith.cmpi eq, %arg2, %c0_i32 : i32
    %1 = arith.extui %0 : i1 to i32
    %c0_i32_0 = arith.constant 0 : i32
    %2 = arith.cmpi ne, %1, %c0_i32_0 : i32
    scf.if %2 {
      %cst_10 = arith.constant 0.000000e+00 : f32
      %12 = vector.broadcast %cst_10 : f32 to vector<512x128xf32>
      %c0_11 = arith.constant 0 : index
      %c0_12 = arith.constant 0 : index
      %13 = vector.load %arg7[%c0_11, %c0_12] : memref<512x128xf32, #tpu.memory_space<vmem>>, vector<512x128xf32>
      tpu.vector_store %arg7[%c0_11, %c0_12], %12 {strides = array<i32>} : memref<512x128xf32, #tpu.memory_space<vmem>>, vector<512x128xf32>,
    } else {
    }
    %c0 = arith.constant 0 : index
    %c0_1 = arith.constant 0 : index
    %3 = vector.load %arg7[%c0, %c0_1] : memref<512x128xf32, #tpu.memory_space<vmem>>, vector<512x128xf32>
    %c0_2 = arith.constant 0 : index
    %c0_3 = arith.constant 0 : index
    %4 = vector.load %arg3[%c0_2, %c0_3] : memref<512x128xbf16, #tpu.memory_space<vmem>>, vector<512x128xbf16>
    %c0_4 = arith.constant 0 : index
    %c0_5 = arith.constant 0 : index
    %5 = vector.load %arg4[%c0_4, %c0_5] : memref<128x128xbf16, #tpu.memory_space<vmem>>, vector<128x128xbf16>
    %cst = arith.constant dense<0.000000e+00> : vector<512x128xf32>
    %6 = tpu.matmul %4, %5, %cst {dimension_numbers = #tpu.dot_dimension_numbers<[1], [0], [0], [1], [0, 0, 1, 1], [], []>} : vector<512x128xbf16>, vector<128x128xbf16>, vector<512x128xf32> -> vector<512x128xf32>
    %7 = arith.addf %3, %6 : vector<512x128xf32>
    %c0_6 = arith.constant 0 : index
    %c0_7 = arith.constant 0 : index
    %8 = vector.load %arg7[%c0_6, %c0_7] : memref<512x128xf32, #tpu.memory_space<vmem>>, vector<512x128xf32>
    tpu.vector_store %arg7[%c0_6, %c0_7], %7 {strides = array<i32>} : memref<512x128xf32, #tpu.memory_space<vmem>>, vector<512x128xf32>,
    %c0_i32_8 = arith.constant 0 : i32
    %9 = arith.cmpi eq, %arg2, %c0_i32_8 : i32
    %10 = arith.extui %9 : i1 to i32
    %c0_i32_9 = arith.constant 0 : i32
    %11 = arith.cmpi ne, %10, %c0_i32_9 : i32
    scf.if %11 {
      %c0_10 = arith.constant 0 : index
      %c0_11 = arith.constant 0 : index
      %12 = vector.load %arg7[%c0_10, %c0_11] : memref<512x128xf32, #tpu.memory_space<vmem>>, vector<512x128xf32>
      %c0_12 = arith.constant 0 : index
      %c0_13 = arith.constant 0 : index
      %13 = vector.load %arg5[%c0_12, %c0_13] : memref<1x128xf32, #tpu.memory_space<vmem>>, vector<1x128xf32>
      %14 = vector.broadcast %13 : vector<1x128xf32> to vector<512x128xf32>
      %15 = arith.addf %12, %14 : vector<512x128xf32>
      %c0_14 = arith.constant 0 : index
      %c0_15 = arith.constant 0 : index
      %16 = vector.load %arg6[%c0_14, %c0_15] : memref<512x128xf32, #tpu.memory_space<vmem>>, vector<512x128xf32>
      tpu.vector_store %arg6[%c0_14, %c0_15], %15 {strides = array<i32>} : memref<512x128xf32, #tpu.memory_space<vmem>>, vector<512x128xf32>,
    } else {
    }
    return
  }
  func.func @transform_0(%arg0: i32, %arg1: i32, %arg2: i32) -> (i32, i32) {
    %c0_i32 = arith.constant 0 : i32
    return %arg0, %arg2 : i32, i32
  }
  func.func @transform_1(%arg0: i32, %arg1: i32, %arg2: i32) -> (i32, i32) {
    %c0_i32 = arith.constant 0 : i32
    return %arg2, %arg1 : i32, i32
  }
  func.func @transform_2(%arg0: i32, %arg1: i32, %arg2: i32) -> (i32, i32) {
    %c0_i32 = arith.constant 0 : i32
    %c0_i32_0 = arith.constant 0 : i32
    return %c0_i32, %arg1 : i32, i32
  }
  func.func @transform_3(%arg0: i32, %arg1: i32, %arg2: i32) -> (i32, i32) {
    %c0_i32 = arith.constant 0 : i32
    return %arg0, %arg1 : i32, i32
  }
}

module attributes {stable_mosaic.version = 11 : i64} {
  func.func @kernel(%arg0: i32, %arg1: i32, %arg2: i32, %arg3: memref<512x128xbf16, #tpu.memory_space<vmem>>, %arg4: memref<128x128xbf16, #tpu.memory_space<vmem>>, %arg5: memref<1x128xf32, #tpu.memory_space<vmem>>, %arg6: memref<512x128xf32, #tpu.memory_space<vmem>>, %arg7: memref<512x128xf32, #tpu.memory_space<vmem>>, %arg8: memref<512x128xf32, #tpu.memory_space<vmem>>) attributes {dimension_semantics = [#tpu.dimension_semantics<parallel>, #tpu.dimension_semantics<parallel>, #tpu.dimension_semantics<arbitrary>], iteration_bounds = array<i64: 1, 1, 1>, scalar_prefetch = 0 : i64, scratch_operands = 1 : i64, tpu.core_type = #tpu.core_type<tc>, window_params = [{transform_indices = @transform_0, window_bounds = array<i64: 512, 128>}, {transform_indices = @transform_1, window_bounds = array<i64: 128, 128>}, {transform_indices = @transform_2, window_bounds = array<i64: 1, 128>}, {transform_indices = @transform_3, window_bounds = array<i64: 512, 128>}, {transform_indices = @transform_4, window_bounds = array<i64: 512, 128>}]} {
    %c0_i32 = arith.constant 0 : i32
    %0 = arith.cmpi eq, %arg2, %c0_i32 : i32
    %1 = arith.extui %0 : i1 to i32
    %c0_i32_0 = arith.constant 0 : i32
    %2 = arith.cmpi ne, %1, %c0_i32_0 : i32
    scf.if %2 {
      %cst_10 = arith.constant 0.000000e+00 : f32
      %12 = vector.broadcast %cst_10 : f32 to vector<512x128xf32>
      %c0_11 = arith.constant 0 : index
      %c0_12 = arith.constant 0 : index
      %13 = vector.load %arg8[%c0_11, %c0_12] : memref<512x128xf32, #tpu.memory_space<vmem>>, vector<512x128xf32>
      tpu.vector_store %arg8[%c0_11, %c0_12], %12 {strides = array<i32>} : memref<512x128xf32, #tpu.memory_space<vmem>>, vector<512x128xf32>,
    } else {
    }
    %c0 = arith.constant 0 : index
    %c0_1 = arith.constant 0 : index
    %3 = vector.load %arg8[%c0, %c0_1] : memref<512x128xf32, #tpu.memory_space<vmem>>, vector<512x128xf32>
    %c0_2 = arith.constant 0 : index
    %c0_3 = arith.constant 0 : index
    %4 = vector.load %arg3[%c0_2, %c0_3] : memref<512x128xbf16, #tpu.memory_space<vmem>>, vector<512x128xbf16>
    %c0_4 = arith.constant 0 : index
    %c0_5 = arith.constant 0 : index
    %5 = vector.load %arg4[%c0_4, %c0_5] : memref<128x128xbf16, #tpu.memory_space<vmem>>, vector<128x128xbf16>
    %cst = arith.constant dense<0.000000e+00> : vector<512x128xf32>
    %6 = tpu.matmul %4, %5, %cst {dimension_numbers = #tpu.dot_dimension_numbers<[1], [0], [0], [1], [0, 0, 1, 1], [], []>} : vector<512x128xbf16>, vector<128x128xbf16>, vector<512x128xf32> -> vector<512x128xf32>
    %7 = arith.addf %3, %6 : vector<512x128xf32>
    %c0_6 = arith.constant 0 : index
    %c0_7 = arith.constant 0 : index
    %8 = vector.load %arg8[%c0_6, %c0_7] : memref<512x128xf32, #tpu.memory_space<vmem>>, vector<512x128xf32>
    tpu.vector_store %arg8[%c0_6, %c0_7], %7 {strides = array<i32>} : memref<512x128xf32, #tpu.memory_space<vmem>>, vector<512x128xf32>,
    %c0_i32_8 = arith.constant 0 : i32
    %9 = arith.cmpi eq, %arg2, %c0_i32_8 : i32
    %10 = arith.extui %9 : i1 to i32
    %c0_i32_9 = arith.constant 0 : i32
    %11 = arith.cmpi ne, %10, %c0_i32_9 : i32
    scf.if %11 {
      %c0_10 = arith.constant 0 : index
      %c0_11 = arith.constant 0 : index
      %12 = vector.load %arg8[%c0_10, %c0_11] : memref<512x128xf32, #tpu.memory_space<vmem>>, vector<512x128xf32>
      %c0_12 = arith.constant 0 : index
      %c0_13 = arith.constant 0 : index
      %13 = vector.load %arg5[%c0_12, %c0_13] : memref<1x128xf32, #tpu.memory_space<vmem>>, vector<1x128xf32>
      %14 = vector.broadcast %13 : vector<1x128xf32> to vector<512x128xf32>
      %15 = arith.addf %12, %14 : vector<512x128xf32>
      %cst_14 = arith.constant 0.999994993 : f32
      %16 = vector.broadcast %cst_14 : f32 to vector<512x128xf32>
      %17 = arith.mulf %15, %16 : vector<512x128xf32>
      %cst_15 = arith.constant 0.000000e+00 : f32
      %18 = vector.broadcast %cst_15 : f32 to vector<512x128xf32>
      %19 = arith.maximumf %17, %18 : vector<512x128xf32>
      %c0_16 = arith.constant 0 : index
      %c0_17 = arith.constant 0 : index
      %20 = vector.load %arg6[%c0_16, %c0_17] : memref<512x128xf32, #tpu.memory_space<vmem>>, vector<512x128xf32>
      %21 = arith.addf %19, %20 : vector<512x128xf32>
      %c0_18 = arith.constant 0 : index
      %c0_19 = arith.constant 0 : index
      %22 = vector.load %arg7[%c0_18, %c0_19] : memref<512x128xf32, #tpu.memory_space<vmem>>, vector<512x128xf32>
      tpu.vector_store %arg7[%c0_18, %c0_19], %21 {strides = array<i32>} : memref<512x128xf32, #tpu.memory_space<vmem>>, vector<512x128xf32>,
    } else {
    }
    return
  }
  func.func @transform_0(%arg0: i32, %arg1: i32, %arg2: i32) -> (i32, i32) {
    %c0_i32 = arith.constant 0 : i32
    return %arg0, %arg2 : i32, i32
  }
  func.func @transform_1(%arg0: i32, %arg1: i32, %arg2: i32) -> (i32, i32) {
    %c0_i32 = arith.constant 0 : i32
    return %arg2, %arg1 : i32, i32
  }
  func.func @transform_2(%arg0: i32, %arg1: i32, %arg2: i32) -> (i32, i32) {
    %c0_i32 = arith.constant 0 : i32
    %c0_i32_0 = arith.constant 0 : i32
    return %c0_i32, %arg1 : i32, i32
  }
  func.func @transform_3(%arg0: i32, %arg1: i32, %arg2: i32) -> (i32, i32) {
    %c0_i32 = arith.constant 0 : i32
    return %arg0, %arg1 : i32, i32
  }
  func.func @transform_4(%arg0: i32, %arg1: i32, %arg2: i32) -> (i32, i32) {
    %c0_i32 = arith.constant 0 : i32
    return %arg0, %arg1 : i32, i32
  }
}

</mosaic_0001>

<llo_original>
// kernel: res_up_forward.4
$region0: #{res_up_forward.4}
  #allocation0 [shape = 'u32[]', space=smem, size = 0x4, offset = 0x4, fixed_abs, tag = 'smem constant byte address 0x4 - core index']
  #allocation1 [shape = 'u32[144,128]{1,0:T(1,128)}', space=vmem, size = 0x12000, scoped, tag = 'internal scratch']
  #allocation2 [shape = 'f32[512,128]{1,0:T(8,128)}', space=vmem, size = 0x40000, scoped, tag = 'scratch operand']
  %s0 = inlined_call_operand.vmem [shape: bf16[512,128], index: 0, kind: input, shape index: {}]
  %s1 = inlined_call_operand.vmem [shape: bf16[128,128], index: 1, kind: input, shape index: {}]
  %s2 = inlined_call_operand.vmem [shape: f32[1,128], index: 2, kind: input, shape index: {}]
  %s3 = inlined_call_operand.vmem [shape: bf16[512,128], index: 3, kind: output, shape index: {}]
  %s4 = sld [smem:[#allocation0]]
  $region30: #{res_up_forward.4} parent=0
    _
  %s6 = ssub.s32 1, %s4
  %s7 = scalar_select 0, %s6, %s4
  // Predicated region
  $region2: #{res_up_forward.4} parent=0 // pred_check
    _
  $region3: #{res_up_forward.4} parent=0 // pred_check_branch
    %9 = sbr.rel (0) target = $region5
  $region4: #{res_up_forward.4} parent=0 // pred_region
    _
  $region5: #{res_up_forward.4} parent=0 // pred_fallthru
    _
  // Predicated region
  $region6: #{res_up_forward.4} parent=0 // pred_check
    _
  $region7: #{res_up_forward.4} parent=0 // pred_check_branch
    %11 = sbr.rel (0) target = $region9
  $region8: #{res_up_forward.4} parent=0 // pred_region
    _
  $region9: #{res_up_forward.4} parent=0 // pred_fallthru
    _
  // Predicated region
  $region10: #{res_up_forward.4} parent=0 // pred_check
    _
  $region11: #{res_up_forward.4} parent=0 // pred_check_branch
    %13 = sbr.rel (0) target = $region13
  $region12: #{res_up_forward.4} parent=0 // pred_region
    _
  $region13: #{res_up_forward.4} parent=0 // pred_fallthru
    _
  %p15 = scmp.eq.s32.totalorder 0, 0
  // Predicated region
  $region14: #{res_up_forward.4} parent=0 // pred_check
    %p16 = pneg %p15
  $region15: #{res_up_forward.4} parent=0 // pred_check_branch
    %18 = sbr.rel (%p16) target = $region17
  $region16: #{res_up_forward.4} parent=0 // pred_region
    %19 = vst [vmem:[#allocation2] sm:$0xff] 0.0
    %20 = vst [vmem:[#allocation2 + $0x8] sm:$0xff] 0.0
    %21 = vst [vmem:[#allocation2 + $0x10] sm:$0xff] 0.0
    %22 = vst [vmem:[#allocation2 + $0x18] sm:$0xff] 0.0
    %23 = vst [vmem:[#allocation2 + $0x20] sm:$0xff] 0.0
    %24 = vst [vmem:[#allocation2 + $0x28] sm:$0xff] 0.0
    %25 = vst [vmem:[#allocation2 + $0x30] sm:$0xff] 0.0
    %26 = vst [vmem:[#allocation2 + $0x38] sm:$0xff] 0.0
    %27 = vst [vmem:[#allocation2 + $0x40] sm:$0xff] 0.0
    %28 = vst [vmem:[#allocation2 + $0x48] sm:$0xff] 0.0
    %29 = vst [vmem:[#allocation2 + $0x50] sm:$0xff] 0.0
    %30 = vst [vmem:[#allocation2 + $0x58] sm:$0xff] 0.0
    %31 = vst [vmem:[#allocation2 + $0x60] sm:$0xff] 0.0
    %32 = vst [vmem:[#allocation2 + $0x68] sm:$0xff] 0.0
    %33 = vst [vmem:[#allocation2 + $0x70] sm:$0xff] 0.0
    %34 = vst [vmem:[#allocation2 + $0x78] sm:$0xff] 0.0
    %35 = vst [vmem:[#allocation2 + $0x80] sm:$0xff] 0.0
    %36 = vst [vmem:[#allocation2 + $0x88] sm:$0xff] 0.0
    %37 = vst [vmem:[#allocation2 + $0x90] sm:$0xff] 0.0
    %38 = vst [vmem:[#allocation2 + $0x98] sm:$0xff] 0.0
    %39 = vst [vmem:[#allocation2 + $0xa0] sm:$0xff] 0.0
    %40 = vst [vmem:[#allocation2 + $0xa8] sm:$0xff] 0.0
    %41 = vst [vmem:[#allocation2 + $0xb0] sm:$0xff] 0.0
    %42 = vst [vmem:[#allocation2 + $0xb8] sm:$0xff] 0.0
    %43 = vst [vmem:[#allocation2 + $0xc0] sm:$0xff] 0.0
    %44 = vst [vmem:[#allocation2 + $0xc8] sm:$0xff] 0.0
    %45 = vst [vmem:[#allocation2 + $0xd0] sm:$0xff] 0.0
    %46 = vst [vmem:[#allocation2 + $0xd8] sm:$0xff] 0.0
    %47 = vst [vmem:[#allocation2 + $0xe0] sm:$0xff] 0.0
    %48 = vst [vmem:[#allocation2 + $0xe8] sm:$0xff] 0.0
    %49 = vst [vmem:[#allocation2 + $0xf0] sm:$0xff] 0.0
    %50 = vst [vmem:[#allocation2 + $0xf8] sm:$0xff] 0.0
    %51 = vst [vmem:[#allocation2 + $0x100] sm:$0xff] 0.0
    %52 = vst [vmem:[#allocation2 + $0x108] sm:$0xff] 0.0
    %53 = vst [vmem:[#allocation2 + $0x110] sm:$0xff] 0.0
    %54 = vst [vmem:[#allocation2 + $0x118] sm:$0xff] 0.0
    %55 = vst [vmem:[#allocation2 + $0x120] sm:$0xff] 0.0
    %56 = vst [vmem:[#allocation2 + $0x128] sm:$0xff] 0.0
    %57 = vst [vmem:[#allocation2 + $0x130] sm:$0xff] 0.0
    %58 = vst [vmem:[#allocation2 + $0x138] sm:$0xff] 0.0
    %59 = vst [vmem:[#allocation2 + $0x140] sm:$0xff] 0.0
    %60 = vst [vmem:[#allocation2 + $0x148] sm:$0xff] 0.0
    %61 = vst [vmem:[#allocation2 + $0x150] sm:$0xff] 0.0
    %62 = vst [vmem:[#allocation2 + $0x158] sm:$0xff] 0.0
    %63 = vst [vmem:[#allocation2 + $0x160] sm:$0xff] 0.0
    %64 = vst [vmem:[#allocation2 + $0x168] sm:$0xff] 0.0
    %65 = vst [vmem:[#allocation2 + $0x170] sm:$0xff] 0.0
    %66 = vst [vmem:[#allocation2 + $0x178] sm:$0xff] 0.0
    %67 = vst [vmem:[#allocation2 + $0x180] sm:$0xff] 0.0
    %68 = vst [vmem:[#allocation2 + $0x188] sm:$0xff] 0.0
    %69 = vst [vmem:[#allocation2 + $0x190] sm:$0xff] 0.0
    %70 = vst [vmem:[#allocation2 + $0x198] sm:$0xff] 0.0
    %71 = vst [vmem:[#allocation2 + $0x1a0] sm:$0xff] 0.0
    %72 = vst [vmem:[#allocation2 + $0x1a8] sm:$0xff] 0.0
    %73 = vst [vmem:[#allocation2 + $0x1b0] sm:$0xff] 0.0
    %74 = vst [vmem:[#allocation2 + $0x1b8] sm:$0xff] 0.0
    %75 = vst [vmem:[#allocation2 + $0x1c0] sm:$0xff] 0.0
    %76 = vst [vmem:[#allocation2 + $0x1c8] sm:$0xff] 0.0
    %77 = vst [vmem:[#allocation2 + $0x1d0] sm:$0xff] 0.0
    %78 = vst [vmem:[#allocation2 + $0x1d8] sm:$0xff] 0.0
    %79 = vst [vmem:[#allocation2 + $0x1e0] sm:$0xff] 0.0
    %80 = vst [vmem:[#allocation2 + $0x1e8] sm:$0xff] 0.0
    %81 = vst [vmem:[#allocation2 + $0x1f0] sm:$0xff] 0.0
    %82 = vst [vmem:[#allocation2 + $0x1f8] sm:$0xff] 0.0
  $region17: #{res_up_forward.4} parent=0 // pred_fallthru
    _
  %v83 = vld [vmem:[#allocation2] sm:$0xff]
  %v84 = vld [vmem:[#allocation2 + $0x8] sm:$0xff]
  %v85 = vld [vmem:[#allocation2 + $0x10] sm:$0xff]
  %v86 = vld [vmem:[#allocation2 + $0x18] sm:$0xff]
  %v87 = vld [vmem:[#allocation2 + $0x20] sm:$0xff]
  %v88 = vld [vmem:[#allocation2 + $0x28] sm:$0xff]
  %v89 = vld [vmem:[#allocation2 + $0x30] sm:$0xff]
  %v90 = vld [vmem:[#allocation2 + $0x38] sm:$0xff]
  %v91 = vld [vmem:[#allocation2 + $0x40] sm:$0xff]
  %v92 = vld [vmem:[#allocation2 + $0x48] sm:$0xff]
  %v93 = vld [vmem:[#allocation2 + $0x50] sm:$0xff]
  %v94 = vld [vmem:[#allocation2 + $0x58] sm:$0xff]
  %v95 = vld [vmem:[#allocation2 + $0x60] sm:$0xff]
  %v96 = vld [vmem:[#allocation2 + $0x68] sm:$0xff]
  %v97 = vld [vmem:[#allocation2 + $0x70] sm:$0xff]
  %v98 = vld [vmem:[#allocation2 + $0x78] sm:$0xff]
  %v99 = vld [vmem:[#allocation2 + $0x80] sm:$0xff]
  %v100 = vld [vmem:[#allocation2 + $0x88] sm:$0xff]
  %v101 = vld [vmem:[#allocation2 + $0x90] sm:$0xff]
  %v102 = vld [vmem:[#allocation2 + $0x98] sm:$0xff]
  %v103 = vld [vmem:[#allocation2 + $0xa0] sm:$0xff]
  %v104 = vld [vmem:[#allocation2 + $0xa8] sm:$0xff]
  %v105 = vld [vmem:[#allocation2 + $0xb0] sm:$0xff]
  %v106 = vld [vmem:[#allocation2 + $0xb8] sm:$0xff]
  %v107 = vld [vmem:[#allocation2 + $0xc0] sm:$0xff]
  %v108 = vld [vmem:[#allocation2 + $0xc8] sm:$0xff]
  %v109 = vld [vmem:[#allocation2 + $0xd0] sm:$0xff]
  %v110 = vld [vmem:[#allocation2 + $0xd8] sm:$0xff]
  %v111 = vld [vmem:[#allocation2 + $0xe0] sm:$0xff]
  %v112 = vld [vmem:[#allocation2 + $0xe8] sm:$0xff]
  %v113 = vld [vmem:[#allocation2 + $0xf0] sm:$0xff]
  %v114 = vld [vmem:[#allocation2 + $0xf8] sm:$0xff]
  %v115 = vld [vmem:[#allocation2 + $0x100] sm:$0xff]
  %v116 = vld [vmem:[#allocation2 + $0x108] sm:$0xff]
  %v117 = vld [vmem:[#allocation2 + $0x110] sm:$0xff]
  %v118 = vld [vmem:[#allocation2 + $0x118] sm:$0xff]
  %v119 = vld [vmem:[#allocation2 + $0x120] sm:$0xff]
  %v120 = vld [vmem:[#allocation2 + $0x128] sm:$0xff]
  %v121 = vld [vmem:[#allocation2 + $0x130] sm:$0xff]
  %v122 = vld [vmem:[#allocation2 + $0x138] sm:$0xff]
  %v123 = vld [vmem:[#allocation2 + $0x140] sm:$0xff]
  %v124 = vld [vmem:[#allocation2 + $0x148] sm:$0xff]
  %v125 = vld [vmem:[#allocation2 + $0x150] sm:$0xff]
  %v126 = vld [vmem:[#allocation2 + $0x158] sm:$0xff]
  %v127 = vld [vmem:[#allocation2 + $0x160] sm:$0xff]
  %v128 = vld [vmem:[#allocation2 + $0x168] sm:$0xff]
  %v129 = vld [vmem:[#allocation2 + $0x170] sm:$0xff]
  %v130 = vld [vmem:[#allocation2 + $0x178] sm:$0xff]
  %v131 = vld [vmem:[#allocation2 + $0x180] sm:$0xff]
  %v132 = vld [vmem:[#allocation2 + $0x188] sm:$0xff]
  %v133 = vld [vmem:[#allocation2 + $0x190] sm:$0xff]
  %v134 = vld [vmem:[#allocation2 + $0x198] sm:$0xff]
  %v135 = vld [vmem:[#allocation2 + $0x1a0] sm:$0xff]
  %v136 = vld [vmem:[#allocation2 + $0x1a8] sm:$0xff]
  %v137 = vld [vmem:[#allocation2 + $0x1b0] sm:$0xff]
  %v138 = vld [vmem:[#allocation2 + $0x1b8] sm:$0xff]
  %v139 = vld [vmem:[#allocation2 + $0x1c0] sm:$0xff]
  %v140 = vld [vmem:[#allocation2 + $0x1c8] sm:$0xff]
  %v141 = vld [vmem:[#allocation2 + $0x1d0] sm:$0xff]
  %v142 = vld [vmem:[#allocation2 + $0x1d8] sm:$0xff]
  %v143 = vld [vmem:[#allocation2 + $0x1e0] sm:$0xff]
  %v144 = vld [vmem:[#allocation2 + $0x1e8] sm:$0xff]
  %v145 = vld [vmem:[#allocation2 + $0x1f0] sm:$0xff]
  %v146 = vld [vmem:[#allocation2 + $0x1f8] sm:$0xff]
  %v147 = vld [vmem:[%s0] sm:$0xf]
  %v148 = vld [vmem:[%s0 + $0x4] sm:$0xf]
  %v149 = vld [vmem:[%s0 + $0x8] sm:$0xf]
  %v150 = vld [vmem:[%s0 + $0xc] sm:$0xf]
  %v151 = vld [vmem:[%s0 + $0x10] sm:$0xf]
  %v152 = vld [vmem:[%s0 + $0x14] sm:$0xf]
  %v153 = vld [vmem:[%s0 + $0x18] sm:$0xf]
  %v154 = vld [vmem:[%s0 + $0x1c] sm:$0xf]
  %v155 = vld [vmem:[%s0 + $0x20] sm:$0xf]
  %v156 = vld [vmem:[%s0 + $0x24] sm:$0xf]
  %v157 = vld [vmem:[%s0 + $0x28] sm:$0xf]
  %v158 = vld [vmem:[%s0 + $0x2c] sm:$0xf]
  %v159 = vld [vmem:[%s0 + $0x30] sm:$0xf]
  %v160 = vld [vmem:[%s0 + $0x34] sm:$0xf]
  %v161 = vld [vmem:[%s0 + $0x38] sm:$0xf]
  %v162 = vld [vmem:[%s0 + $0x3c] sm:$0xf]
  %v163 = vld [vmem:[%s0 + $0x40] sm:$0xf]
  %v164 = vld [vmem:[%s0 + $0x44] sm:$0xf]
  %v165 = vld [vmem:[%s0 + $0x48] sm:$0xf]
  %v166 = vld [vmem:[%s0 + $0x4c] sm:$0xf]
  %v167 = vld [vmem:[%s0 + $0x50] sm:$0xf]
  %v168 = vld [vmem:[%s0 + $0x54] sm:$0xf]
  %v169 = vld [vmem:[%s0 + $0x58] sm:$0xf]
  %v170 = vld [vmem:[%s0 + $0x5c] sm:$0xf]
  %v171 = vld [vmem:[%s0 + $0x60] sm:$0xf]
  %v172 = vld [vmem:[%s0 + $0x64] sm:$0xf]
  %v173 = vld [vmem:[%s0 + $0x68] sm:$0xf]
  %v174 = vld [vmem:[%s0 + $0x6c] sm:$0xf]
  %v175 = vld [vmem:[%s0 + $0x70] sm:$0xf]
  %v176 = vld [vmem:[%s0 + $0x74] sm:$0xf]
  %v177 = vld [vmem:[%s0 + $0x78] sm:$0xf]
  %v178 = vld [vmem:[%s0 + $0x7c] sm:$0xf]
  %v179 = vld [vmem:[%s0 + $0x80] sm:$0xf]
  %v180 = vld [vmem:[%s0 + $0x84] sm:$0xf]
  %v181 = vld [vmem:[%s0 + $0x88] sm:$0xf]
  %v182 = vld [vmem:[%s0 + $0x8c] sm:$0xf]
  %v183 = vld [vmem:[%s0 + $0x90] sm:$0xf]
  %v184 = vld [vmem:[%s0 + $0x94] sm:$0xf]
  %v185 = vld [vmem:[%s0 + $0x98] sm:$0xf]
  %v186 = vld [vmem:[%s0 + $0x9c] sm:$0xf]
  %v187 = vld [vmem:[%s0 + $0xa0] sm:$0xf]
  %v188 = vld [vmem:[%s0 + $0xa4] sm:$0xf]
  %v189 = vld [vmem:[%s0 + $0xa8] sm:$0xf]
  %v190 = vld [vmem:[%s0 + $0xac] sm:$0xf]
  %v191 = vld [vmem:[%s0 + $0xb0] sm:$0xf]
  %v192 = vld [vmem:[%s0 + $0xb4] sm:$0xf]
  %v193 = vld [vmem:[%s0 + $0xb8] sm:$0xf]
  %v194 = vld [vmem:[%s0 + $0xbc] sm:$0xf]
  %v195 = vld [vmem:[%s0 + $0xc0] sm:$0xf]
  %v196 = vld [vmem:[%s0 + $0xc4] sm:$0xf]
  %v197 = vld [vmem:[%s0 + $0xc8] sm:$0xf]
  %v198 = vld [vmem:[%s0 + $0xcc] sm:$0xf]
  %v199 = vld [vmem:[%s0 + $0xd0] sm:$0xf]
  %v200 = vld [vmem:[%s0 + $0xd4] sm:$0xf]
  %v201 = vld [vmem:[%s0 + $0xd8] sm:$0xf]
  %v202 = vld [vmem:[%s0 + $0xdc] sm:$0xf]
  %v203 = vld [vmem:[%s0 + $0xe0] sm:$0xf]
  %v204 = vld [vmem:[%s0 + $0xe4] sm:$0xf]
  %v205 = vld [vmem:[%s0 + $0xe8] sm:$0xf]
  %v206 = vld [vmem:[%s0 + $0xec] sm:$0xf]
  %v207 = vld [vmem:[%s0 + $0xf0] sm:$0xf]
  %v208 = vld [vmem:[%s0 + $0xf4] sm:$0xf]
  %v209 = vld [vmem:[%s0 + $0xf8] sm:$0xf]
  %v210 = vld [vmem:[%s0 + $0xfc] sm:$0xf]
  %v211 = vld [vmem:[%s1] sm:$0xf]
  %v212 = vld [vmem:[%s1 + $0x4] sm:$0xf]
  %v213 = vld [vmem:[%s1 + $0x8] sm:$0xf]
  %v214 = vld [vmem:[%s1 + $0xc] sm:$0xf]
  %v215 = vld [vmem:[%s1 + $0x10] sm:$0xf]
  %v216 = vld [vmem:[%s1 + $0x14] sm:$0xf]
  %v217 = vld [vmem:[%s1 + $0x18] sm:$0xf]
  %v218 = vld [vmem:[%s1 + $0x1c] sm:$0xf]
  %v219 = vld [vmem:[%s1 + $0x20] sm:$0xf]
  %v220 = vld [vmem:[%s1 + $0x24] sm:$0xf]
  %v221 = vld [vmem:[%s1 + $0x28] sm:$0xf]
  %v222 = vld [vmem:[%s1 + $0x2c] sm:$0xf]
  %v223 = vld [vmem:[%s1 + $0x30] sm:$0xf]
  %v224 = vld [vmem:[%s1 + $0x34] sm:$0xf]
  %v225 = vld [vmem:[%s1 + $0x38] sm:$0xf]
  %v226 = vld [vmem:[%s1 + $0x3c] sm:$0xf]
  %v291 = vunpack.c.l.b16 %v147
  %v292 = vunpack.c.l.b16 %v148
  %v293 = vunpack.c.l.b16 %v149
  %v294 = vunpack.c.l.b16 %v150
  %v295 = vunpack.c.l.b16 %v151
  %v296 = vunpack.c.l.b16 %v152
  %v297 = vunpack.c.l.b16 %v153
  %v298 = vunpack.c.l.b16 %v154
  %v299 = vunpack.c.l.b16 %v155
  %v300 = vunpack.c.l.b16 %v156
  %v301 = vunpack.c.l.b16 %v157
  %v302 = vunpack.c.l.b16 %v158
  %v303 = vunpack.c.l.b16 %v159
  %v304 = vunpack.c.l.b16 %v160
  %v305 = vunpack.c.l.b16 %v161
  %v306 = vunpack.c.l.b16 %v162
  %v307 = vunpack.c.l.b16 %v163
  %v308 = vunpack.c.l.b16 %v164
  %v309 = vunpack.c.l.b16 %v165
  %v310 = vunpack.c.l.b16 %v166
  %v311 = vunpack.c.l.b16 %v167
  %v312 = vunpack.c.l.b16 %v168
  %v313 = vunpack.c.l.b16 %v169
  %v314 = vunpack.c.l.b16 %v170
  %v315 = vunpack.c.l.b16 %v171
  %v316 = vunpack.c.l.b16 %v172
  %v317 = vunpack.c.l.b16 %v173
  %v318 = vunpack.c.l.b16 %v174
  %v319 = vunpack.c.l.b16 %v175
  %v320 = vunpack.c.l.b16 %v176
  %v321 = vunpack.c.l.b16 %v177
  %v322 = vunpack.c.l.b16 %v178
  %v323 = vunpack.c.l.b16 %v179
  %v324 = vunpack.c.l.b16 %v180
  %v325 = vunpack.c.l.b16 %v181
  %v326 = vunpack.c.l.b16 %v182
  %v327 = vunpack.c.l.b16 %v183
  %v328 = vunpack.c.l.b16 %v184
  %v329 = vunpack.c.l.b16 %v185
  %v330 = vunpack.c.l.b16 %v186
  %v331 = vunpack.c.l.b16 %v187
  %v332 = vunpack.c.l.b16 %v188
  %v333 = vunpack.c.l.b16 %v189
  %v334 = vunpack.c.l.b16 %v190
  %v335 = vunpack.c.l.b16 %v191
  %v336 = vunpack.c.l.b16 %v192
  %v337 = vunpack.c.l.b16 %v193
  %v338 = vunpack.c.l.b16 %v194
  %v339 = vunpack.c.l.b16 %v195
  %v340 = vunpack.c.l.b16 %v196
  %v341 = vunpack.c.l.b16 %v197
  %v342 = vunpack.c.l.b16 %v198
  %v343 = vunpack.c.l.b16 %v199
  %v344 = vunpack.c.l.b16 %v200
  %v345 = vunpack.c.l.b16 %v201
  %v346 = vunpack.c.l.b16 %v202
  %v347 = vunpack.c.l.b16 %v203
  %v348 = vunpack.c.l.b16 %v204
  %v349 = vunpack.c.l.b16 %v205
  %v350 = vunpack.c.l.b16 %v206
  %v351 = vunpack.c.l.b16 %v207
  %v352 = vunpack.c.l.b16 %v208
  %v353 = vunpack.c.l.b16 %v209
  %v354 = vunpack.c.l.b16 %v210
  %v355 = vpack.c.b16 %v292, %v291
  %v356 = vpack.c.b16 %v294, %v293
  %v357 = vpack.c.b16 %v296, %v295
  %v358 = vpack.c.b16 %v298, %v297
  %v359 = vpack.c.b16 %v300, %v299
  %v360 = vpack.c.b16 %v302, %v301
  %v361 = vpack.c.b16 %v304, %v303
  %v362 = vpack.c.b16 %v306, %v305
  %v363 = vpack.c.b16 %v308, %v307
  %v364 = vpack.c.b16 %v310, %v309
  %v365 = vpack.c.b16 %v312, %v311
  %v366 = vpack.c.b16 %v314, %v313
  %v367 = vpack.c.b16 %v316, %v315
  %v368 = vpack.c.b16 %v318, %v317
  %v369 = vpack.c.b16 %v320, %v319
  %v370 = vpack.c.b16 %v322, %v321
  %v371 = vpack.c.b16 %v324, %v323
  %v372 = vpack.c.b16 %v326, %v325
  %v373 = vpack.c.b16 %v328, %v327
  %v374 = vpack.c.b16 %v330, %v329
  %v375 = vpack.c.b16 %v332, %v331
  %v376 = vpack.c.b16 %v334, %v333
  %v377 = vpack.c.b16 %v336, %v335
  %v378 = vpack.c.b16 %v338, %v337
  %v379 = vpack.c.b16 %v340, %v339
  %v380 = vpack.c.b16 %v342, %v341
  %v381 = vpack.c.b16 %v344, %v343
  %v382 = vpack.c.b16 %v346, %v345
  %v383 = vpack.c.b16 %v348, %v347
  %v384 = vpack.c.b16 %v350, %v349
  %v385 = vpack.c.b16 %v352, %v351
  %v386 = vpack.c.b16 %v354, %v353
  %v435 = vunpack.c.l.b16 %v211
  %v436 = vunpack.c.l.b16 %v212
  %v437 = vunpack.c.l.b16 %v213
  %v438 = vunpack.c.l.b16 %v214
  %v439 = vunpack.c.l.b16 %v215
  %v440 = vunpack.c.l.b16 %v216
  %v441 = vunpack.c.l.b16 %v217
  %v442 = vunpack.c.l.b16 %v218
  %v443 = vunpack.c.l.b16 %v219
  %v444 = vunpack.c.l.b16 %v220
  %v445 = vunpack.c.l.b16 %v221
  %v446 = vunpack.c.l.b16 %v222
  %v447 = vunpack.c.l.b16 %v223
  %v448 = vunpack.c.l.b16 %v224
  %v449 = vunpack.c.l.b16 %v225
  %v450 = vunpack.c.l.b16 %v226
  %v451 = vpack.c.b16 %v436, %v435
  %v452 = vpack.c.b16 %v438, %v437
  %v453 = vpack.c.b16 %v440, %v439
  %v454 = vpack.c.b16 %v442, %v441
  %v455 = vpack.c.b16 %v444, %v443
  %v456 = vpack.c.b16 %v446, %v445
  %v457 = vpack.c.b16 %v448, %v447
  %v458 = vpack.c.b16 %v450, %v449
  %467 = vmatprep.subr.bf16.mxu0 0
  %468 = vmatpush1.bf16.msra.mxu0 %v458
  %469 = vmatprep.subr.bf16.mxu0 0
  %470 = vmatpush1.bf16.msra.mxu0 %v457
  %471 = vmatprep.subr.bf16.mxu0 0
  %472 = vmatpush1.bf16.msra.mxu0 %v456
  %473 = vmatprep.subr.bf16.mxu0 0
  %474 = vmatpush1.bf16.msra.mxu0 %v455
  %475 = vmatprep.subr.bf16.mxu0 0
  %476 = vmatpush1.bf16.msra.mxu0 %v454
  %477 = vmatprep.subr.bf16.mxu0 0
  %478 = vmatpush1.bf16.msra.mxu0 %v453
  %479 = vmatprep.subr.bf16.mxu0 0
  %480 = vmatpush1.bf16.msra.mxu0 %v452
  %481 = vmatprep.subr.bf16.mxu0 0
  %482 = vmatpush1.bf16.msra.mxu0 %v451
  %483 = vmatprep.subr.bf16.mxu0 0
  %484 = vmatpush2.bf16.msra.mxu0 0
  %485 = vmatprep.subr.bf16.mxu0 0
  %486 = vmatpush2.bf16.msra.mxu0 0
  %487 = vmatprep.subr.bf16.mxu0 0
  %488 = vmatpush2.bf16.msra.mxu0 0
  %489 = vmatprep.subr.bf16.mxu0 0
  %490 = vmatpush2.bf16.msra.mxu0 0
  %491 = vmatprep.subr.bf16.mxu0 0
  %492 = vmatpush2.bf16.msra.mxu0 0
  %493 = vmatprep.subr.bf16.mxu0 0
  %494 = vmatpush2.bf16.msra.mxu0 0
  %495 = vmatprep.subr.bf16.mxu0 0
  %496 = vmatpush2.bf16.msra.mxu0 0
  %497 = vmatprep.subr.bf16.mxu0 0
  %498 = vmatpush2.bf16.msra.mxu0 0
  %499 = vmatprep.mubr.bf16.mxu0 0
  %500 = vmatmul.mubr.bf16.gmra.mxu0 %v355
  %v501 = vpop.f32.mrf.mxu0
  %v502 = vadd.f32 0.0, %v501
  %v503 = vpop.f32.mrf.mxu0
  %v504 = vpop.f32.mrf.mxu0
  %v505 = vadd.f32 0.0, %v504
  %v506 = vpop.f32.mrf.mxu0
  %507 = vmatprep.mubr.bf16.mxu0 0
  %508 = vmatmul.mubr.bf16.gmra.mxu0 %v356
  %v509 = vpop.f32.mrf.mxu0
  %v510 = vadd.f32 0.0, %v509
  %v511 = vpop.f32.mrf.mxu0
  %v512 = vpop.f32.mrf.mxu0
  %v513 = vadd.f32 0.0, %v512
  %v514 = vpop.f32.mrf.mxu0
  %515 = vmatprep.mubr.bf16.mxu0 0
  %516 = vmatmul.mubr.bf16.gmra.mxu0 %v357
  %v517 = vpop.f32.mrf.mxu0
  %v518 = vadd.f32 0.0, %v517
  %v519 = vpop.f32.mrf.mxu0
  %v520 = vpop.f32.mrf.mxu0
  %v521 = vadd.f32 0.0, %v520
  %v522 = vpop.f32.mrf.mxu0
  %523 = vmatprep.mubr.bf16.mxu0 0
  %524 = vmatmul.mubr.bf16.gmra.mxu0 %v358
  %v525 = vpop.f32.mrf.mxu0
  %v526 = vadd.f32 0.0, %v525
  %v527 = vpop.f32.mrf.mxu0
  %v528 = vpop.f32.mrf.mxu0
  %v529 = vadd.f32 0.0, %v528
  %v530 = vpop.f32.mrf.mxu0
  %531 = vmatprep.mubr.bf16.mxu0 0
  %532 = vmatmul.mubr.bf16.gmra.mxu0 %v359
  %v533 = vpop.f32.mrf.mxu0
  %v534 = vadd.f32 0.0, %v533
  %v535 = vpop.f32.mrf.mxu0
  %v536 = vpop.f32.mrf.mxu0
  %v537 = vadd.f32 0.0, %v536
  %v538 = vpop.f32.mrf.mxu0
  %539 = vmatprep.mubr.bf16.mxu0 0
  %540 = vmatmul.mubr.bf16.gmra.mxu0 %v360
  %v541 = vpop.f32.mrf.mxu0
  %v542 = vadd.f32 0.0, %v541
  %v543 = vpop.f32.mrf.mxu0
  %v544 = vpop.f32.mrf.mxu0
  %v545 = vadd.f32 0.0, %v544
  %v546 = vpop.f32.mrf.mxu0
  %547 = vmatprep.mubr.bf16.mxu0 0
  %548 = vmatmul.mubr.bf16.gmra.mxu0 %v361
  %v549 = vpop.f32.mrf.mxu0
  %v550 = vadd.f32 0.0, %v549
  %v551 = vpop.f32.mrf.mxu0
  %v552 = vpop.f32.mrf.mxu0
  %v553 = vadd.f32 0.0, %v552
  %v554 = vpop.f32.mrf.mxu0
  %555 = vmatprep.mubr.bf16.mxu0 0
  %556 = vmatmul.mubr.bf16.gmra.mxu0 %v362
  %v557 = vpop.f32.mrf.mxu0
  %v558 = vadd.f32 0.0, %v557
  %v559 = vpop.f32.mrf.mxu0
  %v560 = vpop.f32.mrf.mxu0
  %v561 = vadd.f32 0.0, %v560
  %v562 = vpop.f32.mrf.mxu0
  %563 = vmatprep.mubr.bf16.mxu0 0
  %564 = vmatmul.mubr.bf16.gmra.mxu0 %v363
  %v565 = vpop.f32.mrf.mxu0
  %v566 = vadd.f32 0.0, %v565
  %v567 = vpop.f32.mrf.mxu0
  %v568 = vpop.f32.mrf.mxu0
  %v569 = vadd.f32 0.0, %v568
  %v570 = vpop.f32.mrf.mxu0
  %571 = vmatprep.mubr.bf16.mxu0 0
  %572 = vmatmul.mubr.bf16.gmra.mxu0 %v364
  %v573 = vpop.f32.mrf.mxu0
  %v574 = vadd.f32 0.0, %v573
  %v575 = vpop.f32.mrf.mxu0
  %v576 = vpop.f32.mrf.mxu0
  %v577 = vadd.f32 0.0, %v576
  %v578 = vpop.f32.mrf.mxu0
  %579 = vmatprep.mubr.bf16.mxu0 0
  %580 = vmatmul.mubr.bf16.gmra.mxu0 %v365
  %v581 = vpop.f32.mrf.mxu0
  %v582 = vadd.f32 0.0, %v581
  %v583 = vpop.f32.mrf.mxu0
  %v584 = vpop.f32.mrf.mxu0
  %v585 = vadd.f32 0.0, %v584
  %v586 = vpop.f32.mrf.mxu0
  %587 = vmatprep.mubr.bf16.mxu0 0
  %588 = vmatmul.mubr.bf16.gmra.mxu0 %v366
  %v589 = vpop.f32.mrf.mxu0
  %v590 = vadd.f32 0.0, %v589
  %v591 = vpop.f32.mrf.mxu0
  %v592 = vpop.f32.mrf.mxu0
  %v593 = vadd.f32 0.0, %v592
  %v594 = vpop.f32.mrf.mxu0
  %595 = vmatprep.mubr.bf16.mxu0 0
  %596 = vmatmul.mubr.bf16.gmra.mxu0 %v367
  %v597 = vpop.f32.mrf.mxu0
  %v598 = vadd.f32 0.0, %v597
  %v599 = vpop.f32.mrf.mxu0
  %v600 = vpop.f32.mrf.mxu0
  %v601 = vadd.f32 0.0, %v600
  %v602 = vpop.f32.mrf.mxu0
  %603 = vmatprep.mubr.bf16.mxu0 0
  %604 = vmatmul.mubr.bf16.gmra.mxu0 %v368
  %v605 = vpop.f32.mrf.mxu0
  %v606 = vadd.f32 0.0, %v605
  %v607 = vpop.f32.mrf.mxu0
  %v608 = vpop.f32.mrf.mxu0
  %v609 = vadd.f32 0.0, %v608
  %v610 = vpop.f32.mrf.mxu0
  %611 = vmatprep.mubr.bf16.mxu0 0
  %612 = vmatmul.mubr.bf16.gmra.mxu0 %v369
  %v613 = vpop.f32.mrf.mxu0
  %v614 = vadd.f32 0.0, %v613
  %v615 = vpop.f32.mrf.mxu0
  %v616 = vpop.f32.mrf.mxu0
  %v617 = vadd.f32 0.0, %v616
  %v618 = vpop.f32.mrf.mxu0
  %619 = vmatprep.mubr.bf16.mxu0 0
  %620 = vmatmul.mubr.bf16.gmra.mxu0 %v370
  %v621 = vpop.f32.mrf.mxu0
  %v622 = vadd.f32 0.0, %v621
  %v623 = vpop.f32.mrf.mxu0
  %v624 = vpop.f32.mrf.mxu0
  %v625 = vadd.f32 0.0, %v624
  %v626 = vpop.f32.mrf.mxu0
  %627 = vmatprep.mubr.bf16.mxu0 0
  %628 = vmatmul.mubr.bf16.gmra.mxu0 %v371
  %v629 = vpop.f32.mrf.mxu0
  %v630 = vadd.f32 0.0, %v629
  %v631 = vpop.f32.mrf.mxu0
  %v632 = vpop.f32.mrf.mxu0
  %v633 = vadd.f32 0.0, %v632
  %v634 = vpop.f32.mrf.mxu0
  %635 = vmatprep.mubr.bf16.mxu0 0
  %636 = vmatmul.mubr.bf16.gmra.mxu0 %v372
  %v637 = vpop.f32.mrf.mxu0
  %v638 = vadd.f32 0.0, %v637
  %v639 = vpop.f32.mrf.mxu0
  %v640 = vpop.f32.mrf.mxu0
  %v641 = vadd.f32 0.0, %v640
  %v642 = vpop.f32.mrf.mxu0
  %643 = vmatprep.mubr.bf16.mxu0 0
  %644 = vmatmul.mubr.bf16.gmra.mxu0 %v373
  %v645 = vpop.f32.mrf.mxu0
  %v646 = vadd.f32 0.0, %v645
  %v647 = vpop.f32.mrf.mxu0
  %v648 = vpop.f32.mrf.mxu0
  %v649 = vadd.f32 0.0, %v648
  %v650 = vpop.f32.mrf.mxu0
  %651 = vmatprep.mubr.bf16.mxu0 0
  %652 = vmatmul.mubr.bf16.gmra.mxu0 %v374
  %v653 = vpop.f32.mrf.mxu0
  %v654 = vadd.f32 0.0, %v653
  %v655 = vpop.f32.mrf.mxu0
  %v656 = vpop.f32.mrf.mxu0
  %v657 = vadd.f32 0.0, %v656
  %v658 = vpop.f32.mrf.mxu0
  %659 = vmatprep.mubr.bf16.mxu0 0
  %660 = vmatmul.mubr.bf16.gmra.mxu0 %v375
  %v661 = vpop.f32.mrf.mxu0
  %v662 = vadd.f32 0.0, %v661
  %v663 = vpop.f32.mrf.mxu0
  %v664 = vpop.f32.mrf.mxu0
  %v665 = vadd.f32 0.0, %v664
  %v666 = vpop.f32.mrf.mxu0
  %667 = vmatprep.mubr.bf16.mxu0 0
  %668 = vmatmul.mubr.bf16.gmra.mxu0 %v376
  %v669 = vpop.f32.mrf.mxu0
  %v670 = vadd.f32 0.0, %v669
  %v671 = vpop.f32.mrf.mxu0
  %v672 = vpop.f32.mrf.mxu0
  %v673 = vadd.f32 0.0, %v672
  %v674 = vpop.f32.mrf.mxu0
  %675 = vmatprep.mubr.bf16.mxu0 0
  %676 = vmatmul.mubr.bf16.gmra.mxu0 %v377
  %v677 = vpop.f32.mrf.mxu0
  %v678 = vadd.f32 0.0, %v677
  %v679 = vpop.f32.mrf.mxu0
  %v680 = vpop.f32.mrf.mxu0
  %v681 = vadd.f32 0.0, %v680
  %v682 = vpop.f32.mrf.mxu0
  %683 = vmatprep.mubr.bf16.mxu0 0
  %684 = vmatmul.mubr.bf16.gmra.mxu0 %v378
  %v685 = vpop.f32.mrf.mxu0
  %v686 = vadd.f32 0.0, %v685
  %v687 = vpop.f32.mrf.mxu0
  %v688 = vpop.f32.mrf.mxu0
  %v689 = vadd.f32 0.0, %v688
  %v690 = vpop.f32.mrf.mxu0
  %691 = vmatprep.mubr.bf16.mxu0 0
  %692 = vmatmul.mubr.bf16.gmra.mxu0 %v379
  %v693 = vpop.f32.mrf.mxu0
  %v694 = vadd.f32 0.0, %v693
  %v695 = vpop.f32.mrf.mxu0
  %v696 = vpop.f32.mrf.mxu0
  %v697 = vadd.f32 0.0, %v696
  %v698 = vpop.f32.mrf.mxu0
  %699 = vmatprep.mubr.bf16.mxu0 0
  %700 = vmatmul.mubr.bf16.gmra.mxu0 %v380
  %v701 = vpop.f32.mrf.mxu0
  %v702 = vadd.f32 0.0, %v701
  %v703 = vpop.f32.mrf.mxu0
  %v704 = vpop.f32.mrf.mxu0
  %v705 = vadd.f32 0.0, %v704
  %v706 = vpop.f32.mrf.mxu0
  %707 = vmatprep.mubr.bf16.mxu0 0
  %708 = vmatmul.mubr.bf16.gmra.mxu0 %v381
  %v709 = vpop.f32.mrf.mxu0
  %v710 = vadd.f32 0.0, %v709
  %v711 = vpop.f32.mrf.mxu0
  %v712 = vpop.f32.mrf.mxu0
  %v713 = vadd.f32 0.0, %v712
  %v714 = vpop.f32.mrf.mxu0
  %715 = vmatprep.mubr.bf16.mxu0 0
  %716 = vmatmul.mubr.bf16.gmra.mxu0 %v382
  %v717 = vpop.f32.mrf.mxu0
  %v718 = vadd.f32 0.0, %v717
  %v719 = vpop.f32.mrf.mxu0
  %v720 = vpop.f32.mrf.mxu0
  %v721 = vadd.f32 0.0, %v720
  %v722 = vpop.f32.mrf.mxu0
  %723 = vmatprep.mubr.bf16.mxu0 0
  %724 = vmatmul.mubr.bf16.gmra.mxu0 %v383
  %v725 = vpop.f32.mrf.mxu0
  %v726 = vadd.f32 0.0, %v725
  %v727 = vpop.f32.mrf.mxu0
  %v728 = vpop.f32.mrf.mxu0
  %v729 = vadd.f32 0.0, %v728
  %v730 = vpop.f32.mrf.mxu0
  %731 = vmatprep.mubr.bf16.mxu0 0
  %732 = vmatmul.mubr.bf16.gmra.mxu0 %v384
  %v733 = vpop.f32.mrf.mxu0
  %v734 = vadd.f32 0.0, %v733
  %v735 = vpop.f32.mrf.mxu0
  %v736 = vpop.f32.mrf.mxu0
  %v737 = vadd.f32 0.0, %v736
  %v738 = vpop.f32.mrf.mxu0
  %739 = vmatprep.mubr.bf16.mxu0 0
  %740 = vmatmul.mubr.bf16.gmra.mxu0 %v385
  %v741 = vpop.f32.mrf.mxu0
  %v742 = vadd.f32 0.0, %v741
  %v743 = vpop.f32.mrf.mxu0
  %v744 = vpop.f32.mrf.mxu0
  %v745 = vadd.f32 0.0, %v744
  %v746 = vpop.f32.mrf.mxu0
  %747 = vmatprep.mubr.bf16.mxu0 0
  %748 = vmatmul.mubr.bf16.gmra.mxu0 %v386
  %v749 = vpop.f32.mrf.mxu0
  %v750 = vadd.f32 0.0, %v749
  %v751 = vpop.f32.mrf.mxu0
  %v752 = vpop.f32.mrf.mxu0
  %v753 = vadd.f32 0.0, %v752
  %v754 = vpop.f32.mrf.mxu0
  %755 = vdwg.mxu0
  %v756 = vadd.f32 %v83, %v502
  %v757 = vadd.f32 %v84, %v505
  %v758 = vadd.f32 %v85, %v510
  %v759 = vadd.f32 %v86, %v513
  %v760 = vadd.f32 %v87, %v518
  %v761 = vadd.f32 %v88, %v521
  %v762 = vadd.f32 %v89, %v526
  %v763 = vadd.f32 %v90, %v529
  %v764 = vadd.f32 %v91, %v534
  %v765 = vadd.f32 %v92, %v537
  %v766 = vadd.f32 %v93, %v542
  %v767 = vadd.f32 %v94, %v545
  %v768 = vadd.f32 %v95, %v550
  %v769 = vadd.f32 %v96, %v553
  %v770 = vadd.f32 %v97, %v558
  %v771 = vadd.f32 %v98, %v561
  %v772 = vadd.f32 %v99, %v566
  %v773 = vadd.f32 %v100, %v569
  %v774 = vadd.f32 %v101, %v574
  %v775 = vadd.f32 %v102, %v577
  %v776 = vadd.f32 %v103, %v582
  %v777 = vadd.f32 %v104, %v585
  %v778 = vadd.f32 %v105, %v590
  %v779 = vadd.f32 %v106, %v593
  %v780 = vadd.f32 %v107, %v598
  %v781 = vadd.f32 %v108, %v601
  %v782 = vadd.f32 %v109, %v606
  %v783 = vadd.f32 %v110, %v609
  %v784 = vadd.f32 %v111, %v614
  %v785 = vadd.f32 %v112, %v617
  %v786 = vadd.f32 %v113, %v622
  %v787 = vadd.f32 %v114, %v625
  %v788 = vadd.f32 %v115, %v630
  %v789 = vadd.f32 %v116, %v633
  %v790 = vadd.f32 %v117, %v638
  %v791 = vadd.f32 %v118, %v641
  %v792 = vadd.f32 %v119, %v646
  %v793 = vadd.f32 %v120, %v649
  %v794 = vadd.f32 %v121, %v654
  %v795 = vadd.f32 %v122, %v657
  %v796 = vadd.f32 %v123, %v662
  %v797 = vadd.f32 %v124, %v665
  %v798 = vadd.f32 %v125, %v670
  %v799 = vadd.f32 %v126, %v673
  %v800 = vadd.f32 %v127, %v678
  %v801 = vadd.f32 %v128, %v681
  %v802 = vadd.f32 %v129, %v686
  %v803 = vadd.f32 %v130, %v689
  %v804 = vadd.f32 %v131, %v694
  %v805 = vadd.f32 %v132, %v697
  %v806 = vadd.f32 %v133, %v702
  %v807 = vadd.f32 %v134, %v705
  %v808 = vadd.f32 %v135, %v710
  %v809 = vadd.f32 %v136, %v713
  %v810 = vadd.f32 %v137, %v718
  %v811 = vadd.f32 %v138, %v721
  %v812 = vadd.f32 %v139, %v726
  %v813 = vadd.f32 %v140, %v729
  %v814 = vadd.f32 %v141, %v734
  %v815 = vadd.f32 %v142, %v737
  %v816 = vadd.f32 %v143, %v742
  %v817 = vadd.f32 %v144, %v745
  %v818 = vadd.f32 %v145, %v750
  %v819 = vadd.f32 %v146, %v753
  %820 = vst [vmem:[#allocation2] sm:$0xff] %v756
  %821 = vst [vmem:[#allocation2 + $0x8] sm:$0xff] %v757
  %822 = vst [vmem:[#allocation2 + $0x10] sm:$0xff] %v758
  %823 = vst [vmem:[#allocation2 + $0x18] sm:$0xff] %v759
  %824 = vst [vmem:[#allocation2 + $0x20] sm:$0xff] %v760
  %825 = vst [vmem:[#allocation2 + $0x28] sm:$0xff] %v761
  %826 = vst [vmem:[#allocation2 + $0x30] sm:$0xff] %v762
  %827 = vst [vmem:[#allocation2 + $0x38] sm:$0xff] %v763
  %828 = vst [vmem:[#allocation2 + $0x40] sm:$0xff] %v764
  %829 = vst [vmem:[#allocation2 + $0x48] sm:$0xff] %v765
  %830 = vst [vmem:[#allocation2 + $0x50] sm:$0xff] %v766
  %831 = vst [vmem:[#allocation2 + $0x58] sm:$0xff] %v767
  %832 = vst [vmem:[#allocation2 + $0x60] sm:$0xff] %v768
  %833 = vst [vmem:[#allocation2 + $0x68] sm:$0xff] %v769
  %834 = vst [vmem:[#allocation2 + $0x70] sm:$0xff] %v770
  %835 = vst [vmem:[#allocation2 + $0x78] sm:$0xff] %v771
  %836 = vst [vmem:[#allocation2 + $0x80] sm:$0xff] %v772
  %837 = vst [vmem:[#allocation2 + $0x88] sm:$0xff] %v773
  %838 = vst [vmem:[#allocation2 + $0x90] sm:$0xff] %v774
  %839 = vst [vmem:[#allocation2 + $0x98] sm:$0xff] %v775
  %840 = vst [vmem:[#allocation2 + $0xa0] sm:$0xff] %v776
  %841 = vst [vmem:[#allocation2 + $0xa8] sm:$0xff] %v777
  %842 = vst [vmem:[#allocation2 + $0xb0] sm:$0xff] %v778
  %843 = vst [vmem:[#allocation2 + $0xb8] sm:$0xff] %v779
  %844 = vst [vmem:[#allocation2 + $0xc0] sm:$0xff] %v780
  %845 = vst [vmem:[#allocation2 + $0xc8] sm:$0xff] %v781
  %846 = vst [vmem:[#allocation2 + $0xd0] sm:$0xff] %v782
  %847 = vst [vmem:[#allocation2 + $0xd8] sm:$0xff] %v783
  %848 = vst [vmem:[#allocation2 + $0xe0] sm:$0xff] %v784
  %849 = vst [vmem:[#allocation2 + $0xe8] sm:$0xff] %v785
  %850 = vst [vmem:[#allocation2 + $0xf0] sm:$0xff] %v786
  %851 = vst [vmem:[#allocation2 + $0xf8] sm:$0xff] %v787
  %852 = vst [vmem:[#allocation2 + $0x100] sm:$0xff] %v788
  %853 = vst [vmem:[#allocation2 + $0x108] sm:$0xff] %v789
  %854 = vst [vmem:[#allocation2 + $0x110] sm:$0xff] %v790
  %855 = vst [vmem:[#allocation2 + $0x118] sm:$0xff] %v791
  %856 = vst [vmem:[#allocation2 + $0x120] sm:$0xff] %v792
  %857 = vst [vmem:[#allocation2 + $0x128] sm:$0xff] %v793
  %858 = vst [vmem:[#allocation2 + $0x130] sm:$0xff] %v794
  %859 = vst [vmem:[#allocation2 + $0x138] sm:$0xff] %v795
  %860 = vst [vmem:[#allocation2 + $0x140] sm:$0xff] %v796
  %861 = vst [vmem:[#allocation2 + $0x148] sm:$0xff] %v797
  %862 = vst [vmem:[#allocation2 + $0x150] sm:$0xff] %v798
  %863 = vst [vmem:[#allocation2 + $0x158] sm:$0xff] %v799
  %864 = vst [vmem:[#allocation2 + $0x160] sm:$0xff] %v800
  %865 = vst [vmem:[#allocation2 + $0x168] sm:$0xff] %v801
  %866 = vst [vmem:[#allocation2 + $0x170] sm:$0xff] %v802
  %867 = vst [vmem:[#allocation2 + $0x178] sm:$0xff] %v803
  %868 = vst [vmem:[#allocation2 + $0x180] sm:$0xff] %v804
  %869 = vst [vmem:[#allocation2 + $0x188] sm:$0xff] %v805
  %870 = vst [vmem:[#allocation2 + $0x190] sm:$0xff] %v806
  %871 = vst [vmem:[#allocation2 + $0x198] sm:$0xff] %v807
  %872 = vst [vmem:[#allocation2 + $0x1a0] sm:$0xff] %v808
  %873 = vst [vmem:[#allocation2 + $0x1a8] sm:$0xff] %v809
  %874 = vst [vmem:[#allocation2 + $0x1b0] sm:$0xff] %v810
  %875 = vst [vmem:[#allocation2 + $0x1b8] sm:$0xff] %v811
  %876 = vst [vmem:[#allocation2 + $0x1c0] sm:$0xff] %v812
  %877 = vst [vmem:[#allocation2 + $0x1c8] sm:$0xff] %v813
  %878 = vst [vmem:[#allocation2 + $0x1d0] sm:$0xff] %v814
  %879 = vst [vmem:[#allocation2 + $0x1d8] sm:$0xff] %v815
  %880 = vst [vmem:[#allocation2 + $0x1e0] sm:$0xff] %v816
  %881 = vst [vmem:[#allocation2 + $0x1e8] sm:$0xff] %v817
  %882 = vst [vmem:[#allocation2 + $0x1f0] sm:$0xff] %v818
  %883 = vst [vmem:[#allocation2 + $0x1f8] sm:$0xff] %v819
  // Predicated region
  $region18: #{res_up_forward.4} parent=0 // pred_check
    %p884 = pneg %p15
  $region19: #{res_up_forward.4} parent=0 // pred_check_branch
    %886 = sbr.rel (%p884) target = $region21
  $region20: #{res_up_forward.4} parent=0 // pred_region
    %v887 = vld [vmem:[#allocation2] sm:$0xff]
    %v888 = vld [vmem:[#allocation2 + $0x8] sm:$0xff]
    %v889 = vld [vmem:[#allocation2 + $0x10] sm:$0xff]
    %v890 = vld [vmem:[#allocation2 + $0x18] sm:$0xff]
    %v891 = vld [vmem:[#allocation2 + $0x20] sm:$0xff]
    %v892 = vld [vmem:[#allocation2 + $0x28] sm:$0xff]
    %v893 = vld [vmem:[#allocation2 + $0x30] sm:$0xff]
    %v894 = vld [vmem:[#allocation2 + $0x38] sm:$0xff]
    %v895 = vld [vmem:[#allocation2 + $0x40] sm:$0xff]
    %v896 = vld [vmem:[#allocation2 + $0x48] sm:$0xff]
    %v897 = vld [vmem:[#allocation2 + $0x50] sm:$0xff]
    %v898 = vld [vmem:[#allocation2 + $0x58] sm:$0xff]
    %v899 = vld [vmem:[#allocation2 + $0x60] sm:$0xff]
    %v900 = vld [vmem:[#allocation2 + $0x68] sm:$0xff]
    %v901 = vld [vmem:[#allocation2 + $0x70] sm:$0xff]
    %v902 = vld [vmem:[#allocation2 + $0x78] sm:$0xff]
    %v903 = vld [vmem:[#allocation2 + $0x80] sm:$0xff]
    %v904 = vld [vmem:[#allocation2 + $0x88] sm:$0xff]
    %v905 = vld [vmem:[#allocation2 + $0x90] sm:$0xff]
    %v906 = vld [vmem:[#allocation2 + $0x98] sm:$0xff]
    %v907 = vld [vmem:[#allocation2 + $0xa0] sm:$0xff]
    %v908 = vld [vmem:[#allocation2 + $0xa8] sm:$0xff]
    %v909 = vld [vmem:[#allocation2 + $0xb0] sm:$0xff]
    %v910 = vld [vmem:[#allocation2 + $0xb8] sm:$0xff]
    %v911 = vld [vmem:[#allocation2 + $0xc0] sm:$0xff]
    %v912 = vld [vmem:[#allocation2 + $0xc8] sm:$0xff]
    %v913 = vld [vmem:[#allocation2 + $0xd0] sm:$0xff]
    %v914 = vld [vmem:[#allocation2 + $0xd8] sm:$0xff]
    %v915 = vld [vmem:[#allocation2 + $0xe0] sm:$0xff]
    %v916 = vld [vmem:[#allocation2 + $0xe8] sm:$0xff]
    %v917 = vld [vmem:[#allocation2 + $0xf0] sm:$0xff]
    %v918 = vld [vmem:[#allocation2 + $0xf8] sm:$0xff]
    %v919 = vld [vmem:[#allocation2 + $0x100] sm:$0xff]
    %v920 = vld [vmem:[#allocation2 + $0x108] sm:$0xff]
    %v921 = vld [vmem:[#allocation2 + $0x110] sm:$0xff]
    %v922 = vld [vmem:[#allocation2 + $0x118] sm:$0xff]
    %v923 = vld [vmem:[#allocation2 + $0x120] sm:$0xff]
    %v924 = vld [vmem:[#allocation2 + $0x128] sm:$0xff]
    %v925 = vld [vmem:[#allocation2 + $0x130] sm:$0xff]
    %v926 = vld [vmem:[#allocation2 + $0x138] sm:$0xff]
    %v927 = vld [vmem:[#allocation2 + $0x140] sm:$0xff]
    %v928 = vld [vmem:[#allocation2 + $0x148] sm:$0xff]
    %v929 = vld [vmem:[#allocation2 + $0x150] sm:$0xff]
    %v930 = vld [vmem:[#allocation2 + $0x158] sm:$0xff]
    %v931 = vld [vmem:[#allocation2 + $0x160] sm:$0xff]
    %v932 = vld [vmem:[#allocation2 + $0x168] sm:$0xff]
    %v933 = vld [vmem:[#allocation2 + $0x170] sm:$0xff]
    %v934 = vld [vmem:[#allocation2 + $0x178] sm:$0xff]
    %v935 = vld [vmem:[#allocation2 + $0x180] sm:$0xff]
    %v936 = vld [vmem:[#allocation2 + $0x188] sm:$0xff]
    %v937 = vld [vmem:[#allocation2 + $0x190] sm:$0xff]
    %v938 = vld [vmem:[#allocation2 + $0x198] sm:$0xff]
    %v939 = vld [vmem:[#allocation2 + $0x1a0] sm:$0xff]
    %v940 = vld [vmem:[#allocation2 + $0x1a8] sm:$0xff]
    %v941 = vld [vmem:[#allocation2 + $0x1b0] sm:$0xff]
    %v942 = vld [vmem:[#allocation2 + $0x1b8] sm:$0xff]
    %v943 = vld [vmem:[#allocation2 + $0x1c0] sm:$0xff]
    %v944 = vld [vmem:[#allocation2 + $0x1c8] sm:$0xff]
    %v945 = vld [vmem:[#allocation2 + $0x1d0] sm:$0xff]
    %v946 = vld [vmem:[#allocation2 + $0x1d8] sm:$0xff]
    %v947 = vld [vmem:[#allocation2 + $0x1e0] sm:$0xff]
    %v948 = vld [vmem:[#allocation2 + $0x1e8] sm:$0xff]
    %v949 = vld [vmem:[#allocation2 + $0x1f0] sm:$0xff]
    %v950 = vld [vmem:[#allocation2 + $0x1f8] sm:$0xff]
    %v951 = vld [vmem:[%s2] sm:$0x1]
    %v953 = vlaneseq
    %v954 = vshrl.u32 %v953, 7
    %v955 = vsub.s32 0, %v954
    %v956 = vrot.slane %v951, %v955
    %v958 = vadd.f32 %v887, %v956
    %v959 = vadd.f32 %v888, %v956
    %v960 = vadd.f32 %v889, %v956
    %v961 = vadd.f32 %v890, %v956
    %v962 = vadd.f32 %v891, %v956
    %v963 = vadd.f32 %v892, %v956
    %v964 = vadd.f32 %v893, %v956
    %v965 = vadd.f32 %v894, %v956
    %v966 = vadd.f32 %v895, %v956
    %v967 = vadd.f32 %v896, %v956
    %v968 = vadd.f32 %v897, %v956
    %v969 = vadd.f32 %v898, %v956
    %v970 = vadd.f32 %v899, %v956
    %v971 = vadd.f32 %v900, %v956
    %v972 = vadd.f32 %v901, %v956
    %v973 = vadd.f32 %v902, %v956
    %v974 = vadd.f32 %v903, %v956
    %v975 = vadd.f32 %v904, %v956
    %v976 = vadd.f32 %v905, %v956
    %v977 = vadd.f32 %v906, %v956
    %v978 = vadd.f32 %v907, %v956
    %v979 = vadd.f32 %v908, %v956
    %v980 = vadd.f32 %v909, %v956
    %v981 = vadd.f32 %v910, %v956
    %v982 = vadd.f32 %v911, %v956
    %v983 = vadd.f32 %v912, %v956
    %v984 = vadd.f32 %v913, %v956
    %v985 = vadd.f32 %v914, %v956
    %v986 = vadd.f32 %v915, %v956
    %v987 = vadd.f32 %v916, %v956
    %v988 = vadd.f32 %v917, %v956
    %v989 = vadd.f32 %v918, %v956
    %v990 = vadd.f32 %v919, %v956
    %v991 = vadd.f32 %v920, %v956
    %v992 = vadd.f32 %v921, %v956
    %v993 = vadd.f32 %v922, %v956
    %v994 = vadd.f32 %v923, %v956
    %v995 = vadd.f32 %v924, %v956
    %v996 = vadd.f32 %v925, %v956
    %v997 = vadd.f32 %v926, %v956
    %v998 = vadd.f32 %v927, %v956
    %v999 = vadd.f32 %v928, %v956
    %v1000 = vadd.f32 %v929, %v956
    %v1001 = vadd.f32 %v930, %v956
    %v1002 = vadd.f32 %v931, %v956
    %v1003 = vadd.f32 %v932, %v956
    %v1004 = vadd.f32 %v933, %v956
    %v1005 = vadd.f32 %v934, %v956
    %v1006 = vadd.f32 %v935, %v956
    %v1007 = vadd.f32 %v936, %v956
    %v1008 = vadd.f32 %v937, %v956
    %v1009 = vadd.f32 %v938, %v956
    %v1010 = vadd.f32 %v939, %v956
    %v1011 = vadd.f32 %v940, %v956
    %v1012 = vadd.f32 %v941, %v956
    %v1013 = vadd.f32 %v942, %v956
    %v1014 = vadd.f32 %v943, %v956
    %v1015 = vadd.f32 %v944, %v956
    %v1016 = vadd.f32 %v945, %v956
    %v1017 = vadd.f32 %v946, %v956
    %v1018 = vadd.f32 %v947, %v956
    %v1019 = vadd.f32 %v948, %v956
    %v1020 = vadd.f32 %v949, %v956
    %v1021 = vadd.f32 %v950, %v956
    %v1022 = vpack.c.bf16 %v959, %v958
    %v1023 = vpack.c.bf16 %v961, %v960
    %v1024 = vpack.c.bf16 %v963, %v962
    %v1025 = vpack.c.bf16 %v965, %v964
    %v1026 = vpack.c.bf16 %v967, %v966
    %v1027 = vpack.c.bf16 %v969, %v968
    %v1028 = vpack.c.bf16 %v971, %v970
    %v1029 = vpack.c.bf16 %v973, %v972
    %v1030 = vpack.c.bf16 %v975, %v974
    %v1031 = vpack.c.bf16 %v977, %v976
    %v1032 = vpack.c.bf16 %v979, %v978
    %v1033 = vpack.c.bf16 %v981, %v980
    %v1034 = vpack.c.bf16 %v983, %v982
    %v1035 = vpack.c.bf16 %v985, %v984
    %v1036 = vpack.c.bf16 %v987, %v986
    %v1037 = vpack.c.bf16 %v989, %v988
    %v1038 = vpack.c.bf16 %v991, %v990
    %v1039 = vpack.c.bf16 %v993, %v992
    %v1040 = vpack.c.bf16 %v995, %v994
    %v1041 = vpack.c.bf16 %v997, %v996
    %v1042 = vpack.c.bf16 %v999, %v998
    %v1043 = vpack.c.bf16 %v1001, %v1000
    %v1044 = vpack.c.bf16 %v1003, %v1002
    %v1045 = vpack.c.bf16 %v1005, %v1004
    %v1046 = vpack.c.bf16 %v1007, %v1006
    %v1047 = vpack.c.bf16 %v1009, %v1008
    %v1048 = vpack.c.bf16 %v1011, %v1010
    %v1049 = vpack.c.bf16 %v1013, %v1012
    %v1050 = vpack.c.bf16 %v1015, %v1014
    %v1051 = vpack.c.bf16 %v1017, %v1016
    %v1052 = vpack.c.bf16 %v1019, %v1018
    %v1053 = vpack.c.bf16 %v1021, %v1020
    %v1086 = vunpack.c.l.b16 %v1022
    %v1087 = vunpack.c.h.b16 %v1022
    %v1088 = vunpack.c.l.b16 %v1023
    %v1089 = vunpack.c.h.b16 %v1023
    %v1090 = vunpack.c.l.b16 %v1024
    %v1091 = vunpack.c.h.b16 %v1024
    %v1092 = vunpack.c.l.b16 %v1025
    %v1093 = vunpack.c.h.b16 %v1025
    %v1094 = vunpack.c.l.b16 %v1026
    %v1095 = vunpack.c.h.b16 %v1026
    %v1096 = vunpack.c.l.b16 %v1027
    %v1097 = vunpack.c.h.b16 %v1027
    %v1098 = vunpack.c.l.b16 %v1028
    %v1099 = vunpack.c.h.b16 %v1028
    %v1100 = vunpack.c.l.b16 %v1029
    %v1101 = vunpack.c.h.b16 %v1029
    %v1102 = vunpack.c.l.b16 %v1030
    %v1103 = vunpack.c.h.b16 %v1030
    %v1104 = vunpack.c.l.b16 %v1031
    %v1105 = vunpack.c.h.b16 %v1031
    %v1106 = vunpack.c.l.b16 %v1032
    %v1107 = vunpack.c.h.b16 %v1032
    %v1108 = vunpack.c.l.b16 %v1033
    %v1109 = vunpack.c.h.b16 %v1033
    %v1110 = vunpack.c.l.b16 %v1034
    %v1111 = vunpack.c.h.b16 %v1034
    %v1112 = vunpack.c.l.b16 %v1035
    %v1113 = vunpack.c.h.b16 %v1035
    %v1114 = vunpack.c.l.b16 %v1036
    %v1115 = vunpack.c.h.b16 %v1036
    %v1116 = vunpack.c.l.b16 %v1037
    %v1117 = vunpack.c.h.b16 %v1037
    %v1118 = vunpack.c.l.b16 %v1038
    %v1119 = vunpack.c.h.b16 %v1038
    %v1120 = vunpack.c.l.b16 %v1039
    %v1121 = vunpack.c.h.b16 %v1039
    %v1122 = vunpack.c.l.b16 %v1040
    %v1123 = vunpack.c.h.b16 %v1040
    %v1124 = vunpack.c.l.b16 %v1041
    %v1125 = vunpack.c.h.b16 %v1041
    %v1126 = vunpack.c.l.b16 %v1042
    %v1127 = vunpack.c.h.b16 %v1042
    %v1128 = vunpack.c.l.b16 %v1043
    %v1129 = vunpack.c.h.b16 %v1043
    %v1130 = vunpack.c.l.b16 %v1044
    %v1131 = vunpack.c.h.b16 %v1044
    %v1132 = vunpack.c.l.b16 %v1045
    %v1133 = vunpack.c.h.b16 %v1045
    %v1134 = vunpack.c.l.b16 %v1046
    %v1135 = vunpack.c.h.b16 %v1046
    %v1136 = vunpack.c.l.b16 %v1047
    %v1137 = vunpack.c.h.b16 %v1047
    %v1138 = vunpack.c.l.b16 %v1048
    %v1139 = vunpack.c.h.b16 %v1048
    %v1140 = vunpack.c.l.b16 %v1049
    %v1141 = vunpack.c.h.b16 %v1049
    %v1142 = vunpack.c.l.b16 %v1050
    %v1143 = vunpack.c.h.b16 %v1050
    %v1144 = vunpack.c.l.b16 %v1051
    %v1145 = vunpack.c.h.b16 %v1051
    %v1146 = vunpack.c.l.b16 %v1052
    %v1147 = vunpack.c.h.b16 %v1052
    %v1148 = vunpack.c.l.b16 %v1053
    %v1149 = vunpack.c.h.b16 %v1053
    %v1150 = vpack.c.b16 %v1086, %v1086
    %v1151 = vpack.c.b16 %v1087, %v1087
    %v1152 = vpack.c.b16 %v1088, %v1088
    %v1153 = vpack.c.b16 %v1089, %v1089
    %v1154 = vpack.c.b16 %v1090, %v1090
    %v1155 = vpack.c.b16 %v1091, %v1091
    %v1156 = vpack.c.b16 %v1092, %v1092
    %v1157 = vpack.c.b16 %v1093, %v1093
    %v1158 = vpack.c.b16 %v1094, %v1094
    %v1159 = vpack.c.b16 %v1095, %v1095
    %v1160 = vpack.c.b16 %v1096, %v1096
    %v1161 = vpack.c.b16 %v1097, %v1097
    %v1162 = vpack.c.b16 %v1098, %v1098
    %v1163 = vpack.c.b16 %v1099, %v1099
    %v1164 = vpack.c.b16 %v1100, %v1100
    %v1165 = vpack.c.b16 %v1101, %v1101
    %v1166 = vpack.c.b16 %v1102, %v1102
    %v1167 = vpack.c.b16 %v1103, %v1103
    %v1168 = vpack.c.b16 %v1104, %v1104
    %v1169 = vpack.c.b16 %v1105, %v1105
    %v1170 = vpack.c.b16 %v1106, %v1106
    %v1171 = vpack.c.b16 %v1107, %v1107
    %v1172 = vpack.c.b16 %v1108, %v1108
    %v1173 = vpack.c.b16 %v1109, %v1109
    %v1174 = vpack.c.b16 %v1110, %v1110
    %v1175 = vpack.c.b16 %v1111, %v1111
    %v1176 = vpack.c.b16 %v1112, %v1112
    %v1177 = vpack.c.b16 %v1113, %v1113
    %v1178 = vpack.c.b16 %v1114, %v1114
    %v1179 = vpack.c.b16 %v1115, %v1115
    %v1180 = vpack.c.b16 %v1116, %v1116
    %v1181 = vpack.c.b16 %v1117, %v1117
    %v1182 = vpack.c.b16 %v1118, %v1118
    %v1183 = vpack.c.b16 %v1119, %v1119
    %v1184 = vpack.c.b16 %v1120, %v1120
    %v1185 = vpack.c.b16 %v1121, %v1121
    %v1186 = vpack.c.b16 %v1122, %v1122
    %v1187 = vpack.c.b16 %v1123, %v1123
    %v1188 = vpack.c.b16 %v1124, %v1124
    %v1189 = vpack.c.b16 %v1125, %v1125
    %v1190 = vpack.c.b16 %v1126, %v1126
    %v1191 = vpack.c.b16 %v1127, %v1127
    %v1192 = vpack.c.b16 %v1128, %v1128
    %v1193 = vpack.c.b16 %v1129, %v1129
    %v1194 = vpack.c.b16 %v1130, %v1130
    %v1195 = vpack.c.b16 %v1131, %v1131
    %v1196 = vpack.c.b16 %v1132, %v1132
    %v1197 = vpack.c.b16 %v1133, %v1133
    %v1198 = vpack.c.b16 %v1134, %v1134
    %v1199 = vpack.c.b16 %v1135, %v1135
    %v1200 = vpack.c.b16 %v1136, %v1136
    %v1201 = vpack.c.b16 %v1137, %v1137
    %v1202 = vpack.c.b16 %v1138, %v1138
    %v1203 = vpack.c.b16 %v1139, %v1139
    %v1204 = vpack.c.b16 %v1140, %v1140
    %v1205 = vpack.c.b16 %v1141, %v1141
    %v1206 = vpack.c.b16 %v1142, %v1142
    %v1207 = vpack.c.b16 %v1143, %v1143
    %v1208 = vpack.c.b16 %v1144, %v1144
    %v1209 = vpack.c.b16 %v1145, %v1145
    %v1210 = vpack.c.b16 %v1146, %v1146
    %v1211 = vpack.c.b16 %v1147, %v1147
    %v1212 = vpack.c.b16 %v1148, %v1148
    %v1213 = vpack.c.b16 %v1149, %v1149
    %1278 = vst [vmem:[%s3] sm:$0xf] %v1150
    %1279 = vst [vmem:[%s3 + $0x4] sm:$0xf] %v1151
    %1280 = vst [vmem:[%s3 + $0x8] sm:$0xf] %v1152
    %1281 = vst [vmem:[%s3 + $0xc] sm:$0xf] %v1153
    %1282 = vst [vmem:[%s3 + $0x10] sm:$0xf] %v1154
    %1283 = vst [vmem:[%s3 + $0x14] sm:$0xf] %v1155
    %1284 = vst [vmem:[%s3 + $0x18] sm:$0xf] %v1156
    %1285 = vst [vmem:[%s3 + $0x1c] sm:$0xf] %v1157
    %1286 = vst [vmem:[%s3 + $0x20] sm:$0xf] %v1158
    %1287 = vst [vmem:[%s3 + $0x24] sm:$0xf] %v1159
    %1288 = vst [vmem:[%s3 + $0x28] sm:$0xf] %v1160
    %1289 = vst [vmem:[%s3 + $0x2c] sm:$0xf] %v1161
    %1290 = vst [vmem:[%s3 + $0x30] sm:$0xf] %v1162
    %1291 = vst [vmem:[%s3 + $0x34] sm:$0xf] %v1163
    %1292 = vst [vmem:[%s3 + $0x38] sm:$0xf] %v1164
    %1293 = vst [vmem:[%s3 + $0x3c] sm:$0xf] %v1165
    %1294 = vst [vmem:[%s3 + $0x40] sm:$0xf] %v1166
    %1295 = vst [vmem:[%s3 + $0x44] sm:$0xf] %v1167
    %1296 = vst [vmem:[%s3 + $0x48] sm:$0xf] %v1168
    %1297 = vst [vmem:[%s3 + $0x4c] sm:$0xf] %v1169
    %1298 = vst [vmem:[%s3 + $0x50] sm:$0xf] %v1170
    %1299 = vst [vmem:[%s3 + $0x54] sm:$0xf] %v1171
    %1300 = vst [vmem:[%s3 + $0x58] sm:$0xf] %v1172
    %1301 = vst [vmem:[%s3 + $0x5c] sm:$0xf] %v1173
    %1302 = vst [vmem:[%s3 + $0x60] sm:$0xf] %v1174
    %1303 = vst [vmem:[%s3 + $0x64] sm:$0xf] %v1175
    %1304 = vst [vmem:[%s3 + $0x68] sm:$0xf] %v1176
    %1305 = vst [vmem:[%s3 + $0x6c] sm:$0xf] %v1177
    %1306 = vst [vmem:[%s3 + $0x70] sm:$0xf] %v1178
    %1307 = vst [vmem:[%s3 + $0x74] sm:$0xf] %v1179
    %1308 = vst [vmem:[%s3 + $0x78] sm:$0xf] %v1180
    %1309 = vst [vmem:[%s3 + $0x7c] sm:$0xf] %v1181
    %1310 = vst [vmem:[%s3 + $0x80] sm:$0xf] %v1182
    %1311 = vst [vmem:[%s3 + $0x84] sm:$0xf] %v1183
    %1312 = vst [vmem:[%s3 + $0x88] sm:$0xf] %v1184
    %1313 = vst [vmem:[%s3 + $0x8c] sm:$0xf] %v1185
    %1314 = vst [vmem:[%s3 + $0x90] sm:$0xf] %v1186
    %1315 = vst [vmem:[%s3 + $0x94] sm:$0xf] %v1187
    %1316 = vst [vmem:[%s3 + $0x98] sm:$0xf] %v1188
    %1317 = vst [vmem:[%s3 + $0x9c] sm:$0xf] %v1189
    %1318 = vst [vmem:[%s3 + $0xa0] sm:$0xf] %v1190
    %1319 = vst [vmem:[%s3 + $0xa4] sm:$0xf] %v1191
    %1320 = vst [vmem:[%s3 + $0xa8] sm:$0xf] %v1192
    %1321 = vst [vmem:[%s3 + $0xac] sm:$0xf] %v1193
    %1322 = vst [vmem:[%s3 + $0xb0] sm:$0xf] %v1194
    %1323 = vst [vmem:[%s3 + $0xb4] sm:$0xf] %v1195
    %1324 = vst [vmem:[%s3 + $0xb8] sm:$0xf] %v1196
    %1325 = vst [vmem:[%s3 + $0xbc] sm:$0xf] %v1197
    %1326 = vst [vmem:[%s3 + $0xc0] sm:$0xf] %v1198
    %1327 = vst [vmem:[%s3 + $0xc4] sm:$0xf] %v1199
    %1328 = vst [vmem:[%s3 + $0xc8] sm:$0xf] %v1200
    %1329 = vst [vmem:[%s3 + $0xcc] sm:$0xf] %v1201
    %1330 = vst [vmem:[%s3 + $0xd0] sm:$0xf] %v1202
    %1331 = vst [vmem:[%s3 + $0xd4] sm:$0xf] %v1203
    %1332 = vst [vmem:[%s3 + $0xd8] sm:$0xf] %v1204
    %1333 = vst [vmem:[%s3 + $0xdc] sm:$0xf] %v1205
    %1334 = vst [vmem:[%s3 + $0xe0] sm:$0xf] %v1206
    %1335 = vst [vmem:[%s3 + $0xe4] sm:$0xf] %v1207
    %1336 = vst [vmem:[%s3 + $0xe8] sm:$0xf] %v1208
    %1337 = vst [vmem:[%s3 + $0xec] sm:$0xf] %v1209
    %1338 = vst [vmem:[%s3 + $0xf0] sm:$0xf] %v1210
    %1339 = vst [vmem:[%s3 + $0xf4] sm:$0xf] %v1211
    %1340 = vst [vmem:[%s3 + $0xf8] sm:$0xf] %v1212
    %1341 = vst [vmem:[%s3 + $0xfc] sm:$0xf] %v1213
  $region21: #{res_up_forward.4} parent=0 // pred_fallthru
    _
  // Predicated region
  $region22: #{res_up_forward.4} parent=0 // pred_check
    _
  $region23: #{res_up_forward.4} parent=0 // pred_check_branch
    %1343 = sbr.rel (0) target = $region25
  $region24: #{res_up_forward.4} parent=0 // pred_region
    _
  $region25: #{res_up_forward.4} parent=0 // pred_fallthru
    _
  // Predicated region
  $region26: #{res_up_forward.4} parent=0 // pred_check
    _
  $region27: #{res_up_forward.4} parent=0 // pred_check_branch
    %1345 = sbr.rel (0) target = $region29
  $region28: #{res_up_forward.4} parent=0 // pred_region
    _
  $region29: #{res_up_forward.4} parent=0 // pred_fallthru
    _

// kernel: res_up_forward.6
$region0: #{res_up_forward.6}
  #allocation0 [shape = 'u32[]', space=smem, size = 0x4, offset = 0x4, fixed_abs, tag = 'smem constant byte address 0x4 - core index']
  #allocation1 [shape = 'u32[144,128]{1,0:T(1,128)}', space=vmem, size = 0x12000, scoped, tag = 'internal scratch']
  #allocation2 [shape = 'f32[512,128]{1,0:T(8,128)}', space=vmem, size = 0x40000, scoped, tag = 'scratch operand']
  %s0 = inlined_call_operand.vmem [shape: bf16[512,256], index: 0, kind: input, shape index: {}]
  %s1 = inlined_call_operand.vmem [shape: bf16[256,128], index: 1, kind: input, shape index: {}]
  %s2 = inlined_call_operand.vmem [shape: f32[1,128], index: 2, kind: input, shape index: {}]
  %s3 = inlined_call_operand.vmem [shape: bf16[512,128], index: 3, kind: output, shape index: {}]
  %s4 = sld [smem:[#allocation0]]
  $region30: #{res_up_forward.6} parent=0
    _
  %s6 = ssub.s32 1, %s4
  %s7 = scalar_select 0, %s6, %s4
  // Predicated region
  $region2: #{res_up_forward.6} parent=0 // pred_check
    _
  $region3: #{res_up_forward.6} parent=0 // pred_check_branch
    %9 = sbr.rel (0) target = $region5
  $region4: #{res_up_forward.6} parent=0 // pred_region
    _
  $region5: #{res_up_forward.6} parent=0 // pred_fallthru
    _
  // Predicated region
  $region6: #{res_up_forward.6} parent=0 // pred_check
    _
  $region7: #{res_up_forward.6} parent=0 // pred_check_branch
    %11 = sbr.rel (0) target = $region9
  $region8: #{res_up_forward.6} parent=0 // pred_region
    _
  $region9: #{res_up_forward.6} parent=0 // pred_fallthru
    _
  // Predicated region
  $region10: #{res_up_forward.6} parent=0 // pred_check
    _
  $region11: #{res_up_forward.6} parent=0 // pred_check_branch
    %13 = sbr.rel (0) target = $region13
  $region12: #{res_up_forward.6} parent=0 // pred_region
    _
  $region13: #{res_up_forward.6} parent=0 // pred_fallthru
    _
  %p15 = scmp.eq.s32.totalorder 0, 0
  // Predicated region
  $region14: #{res_up_forward.6} parent=0 // pred_check
    %p16 = pneg %p15
  $region15: #{res_up_forward.6} parent=0 // pred_check_branch
    %18 = sbr.rel (%p16) target = $region17
  $region16: #{res_up_forward.6} parent=0 // pred_region
    %19 = vst [vmem:[#allocation2] sm:$0xff] 0.0
    %20 = vst [vmem:[#allocation2 + $0x8] sm:$0xff] 0.0
    %21 = vst [vmem:[#allocation2 + $0x10] sm:$0xff] 0.0
    %22 = vst [vmem:[#allocation2 + $0x18] sm:$0xff] 0.0
    %23 = vst [vmem:[#allocation2 + $0x20] sm:$0xff] 0.0
    %24 = vst [vmem:[#allocation2 + $0x28] sm:$0xff] 0.0
    %25 = vst [vmem:[#allocation2 + $0x30] sm:$0xff] 0.0
    %26 = vst [vmem:[#allocation2 + $0x38] sm:$0xff] 0.0
    %27 = vst [vmem:[#allocation2 + $0x40] sm:$0xff] 0.0
    %28 = vst [vmem:[#allocation2 + $0x48] sm:$0xff] 0.0
    %29 = vst [vmem:[#allocation2 + $0x50] sm:$0xff] 0.0
    %30 = vst [vmem:[#allocation2 + $0x58] sm:$0xff] 0.0
    %31 = vst [vmem:[#allocation2 + $0x60] sm:$0xff] 0.0
    %32 = vst [vmem:[#allocation2 + $0x68] sm:$0xff] 0.0
    %33 = vst [vmem:[#allocation2 + $0x70] sm:$0xff] 0.0
    %34 = vst [vmem:[#allocation2 + $0x78] sm:$0xff] 0.0
    %35 = vst [vmem:[#allocation2 + $0x80] sm:$0xff] 0.0
    %36 = vst [vmem:[#allocation2 + $0x88] sm:$0xff] 0.0
    %37 = vst [vmem:[#allocation2 + $0x90] sm:$0xff] 0.0
    %38 = vst [vmem:[#allocation2 + $0x98] sm:$0xff] 0.0
    %39 = vst [vmem:[#allocation2 + $0xa0] sm:$0xff] 0.0
    %40 = vst [vmem:[#allocation2 + $0xa8] sm:$0xff] 0.0
    %41 = vst [vmem:[#allocation2 + $0xb0] sm:$0xff] 0.0
    %42 = vst [vmem:[#allocation2 + $0xb8] sm:$0xff] 0.0
    %43 = vst [vmem:[#allocation2 + $0xc0] sm:$0xff] 0.0
    %44 = vst [vmem:[#allocation2 + $0xc8] sm:$0xff] 0.0
    %45 = vst [vmem:[#allocation2 + $0xd0] sm:$0xff] 0.0
    %46 = vst [vmem:[#allocation2 + $0xd8] sm:$0xff] 0.0
    %47 = vst [vmem:[#allocation2 + $0xe0] sm:$0xff] 0.0
    %48 = vst [vmem:[#allocation2 + $0xe8] sm:$0xff] 0.0
    %49 = vst [vmem:[#allocation2 + $0xf0] sm:$0xff] 0.0
    %50 = vst [vmem:[#allocation2 + $0xf8] sm:$0xff] 0.0
    %51 = vst [vmem:[#allocation2 + $0x100] sm:$0xff] 0.0
    %52 = vst [vmem:[#allocation2 + $0x108] sm:$0xff] 0.0
    %53 = vst [vmem:[#allocation2 + $0x110] sm:$0xff] 0.0
    %54 = vst [vmem:[#allocation2 + $0x118] sm:$0xff] 0.0
    %55 = vst [vmem:[#allocation2 + $0x120] sm:$0xff] 0.0
    %56 = vst [vmem:[#allocation2 + $0x128] sm:$0xff] 0.0
    %57 = vst [vmem:[#allocation2 + $0x130] sm:$0xff] 0.0
    %58 = vst [vmem:[#allocation2 + $0x138] sm:$0xff] 0.0
    %59 = vst [vmem:[#allocation2 + $0x140] sm:$0xff] 0.0
    %60 = vst [vmem:[#allocation2 + $0x148] sm:$0xff] 0.0
    %61 = vst [vmem:[#allocation2 + $0x150] sm:$0xff] 0.0
    %62 = vst [vmem:[#allocation2 + $0x158] sm:$0xff] 0.0
    %63 = vst [vmem:[#allocation2 + $0x160] sm:$0xff] 0.0
    %64 = vst [vmem:[#allocation2 + $0x168] sm:$0xff] 0.0
    %65 = vst [vmem:[#allocation2 + $0x170] sm:$0xff] 0.0
    %66 = vst [vmem:[#allocation2 + $0x178] sm:$0xff] 0.0
    %67 = vst [vmem:[#allocation2 + $0x180] sm:$0xff] 0.0
    %68 = vst [vmem:[#allocation2 + $0x188] sm:$0xff] 0.0
    %69 = vst [vmem:[#allocation2 + $0x190] sm:$0xff] 0.0
    %70 = vst [vmem:[#allocation2 + $0x198] sm:$0xff] 0.0
    %71 = vst [vmem:[#allocation2 + $0x1a0] sm:$0xff] 0.0
    %72 = vst [vmem:[#allocation2 + $0x1a8] sm:$0xff] 0.0
    %73 = vst [vmem:[#allocation2 + $0x1b0] sm:$0xff] 0.0
    %74 = vst [vmem:[#allocation2 + $0x1b8] sm:$0xff] 0.0
    %75 = vst [vmem:[#allocation2 + $0x1c0] sm:$0xff] 0.0
    %76 = vst [vmem:[#allocation2 + $0x1c8] sm:$0xff] 0.0
    %77 = vst [vmem:[#allocation2 + $0x1d0] sm:$0xff] 0.0
    %78 = vst [vmem:[#allocation2 + $0x1d8] sm:$0xff] 0.0
    %79 = vst [vmem:[#allocation2 + $0x1e0] sm:$0xff] 0.0
    %80 = vst [vmem:[#allocation2 + $0x1e8] sm:$0xff] 0.0
    %81 = vst [vmem:[#allocation2 + $0x1f0] sm:$0xff] 0.0
    %82 = vst [vmem:[#allocation2 + $0x1f8] sm:$0xff] 0.0
  $region17: #{res_up_forward.6} parent=0 // pred_fallthru
    _
  %v83 = vld [vmem:[#allocation2] sm:$0xff]
  %v84 = vld [vmem:[#allocation2 + $0x8] sm:$0xff]
  %v85 = vld [vmem:[#allocation2 + $0x10] sm:$0xff]
  %v86 = vld [vmem:[#allocation2 + $0x18] sm:$0xff]
  %v87 = vld [vmem:[#allocation2 + $0x20] sm:$0xff]
  %v88 = vld [vmem:[#allocation2 + $0x28] sm:$0xff]
  %v89 = vld [vmem:[#allocation2 + $0x30] sm:$0xff]
  %v90 = vld [vmem:[#allocation2 + $0x38] sm:$0xff]
  %v91 = vld [vmem:[#allocation2 + $0x40] sm:$0xff]
  %v92 = vld [vmem:[#allocation2 + $0x48] sm:$0xff]
  %v93 = vld [vmem:[#allocation2 + $0x50] sm:$0xff]
  %v94 = vld [vmem:[#allocation2 + $0x58] sm:$0xff]
  %v95 = vld [vmem:[#allocation2 + $0x60] sm:$0xff]
  %v96 = vld [vmem:[#allocation2 + $0x68] sm:$0xff]
  %v97 = vld [vmem:[#allocation2 + $0x70] sm:$0xff]
  %v98 = vld [vmem:[#allocation2 + $0x78] sm:$0xff]
  %v99 = vld [vmem:[#allocation2 + $0x80] sm:$0xff]
  %v100 = vld [vmem:[#allocation2 + $0x88] sm:$0xff]
  %v101 = vld [vmem:[#allocation2 + $0x90] sm:$0xff]
  %v102 = vld [vmem:[#allocation2 + $0x98] sm:$0xff]
  %v103 = vld [vmem:[#allocation2 + $0xa0] sm:$0xff]
  %v104 = vld [vmem:[#allocation2 + $0xa8] sm:$0xff]
  %v105 = vld [vmem:[#allocation2 + $0xb0] sm:$0xff]
  %v106 = vld [vmem:[#allocation2 + $0xb8] sm:$0xff]
  %v107 = vld [vmem:[#allocation2 + $0xc0] sm:$0xff]
  %v108 = vld [vmem:[#allocation2 + $0xc8] sm:$0xff]
  %v109 = vld [vmem:[#allocation2 + $0xd0] sm:$0xff]
  %v110 = vld [vmem:[#allocation2 + $0xd8] sm:$0xff]
  %v111 = vld [vmem:[#allocation2 + $0xe0] sm:$0xff]
  %v112 = vld [vmem:[#allocation2 + $0xe8] sm:$0xff]
  %v113 = vld [vmem:[#allocation2 + $0xf0] sm:$0xff]
  %v114 = vld [vmem:[#allocation2 + $0xf8] sm:$0xff]
  %v115 = vld [vmem:[#allocation2 + $0x100] sm:$0xff]
  %v116 = vld [vmem:[#allocation2 + $0x108] sm:$0xff]
  %v117 = vld [vmem:[#allocation2 + $0x110] sm:$0xff]
  %v118 = vld [vmem:[#allocation2 + $0x118] sm:$0xff]
  %v119 = vld [vmem:[#allocation2 + $0x120] sm:$0xff]
  %v120 = vld [vmem:[#allocation2 + $0x128] sm:$0xff]
  %v121 = vld [vmem:[#allocation2 + $0x130] sm:$0xff]
  %v122 = vld [vmem:[#allocation2 + $0x138] sm:$0xff]
  %v123 = vld [vmem:[#allocation2 + $0x140] sm:$0xff]
  %v124 = vld [vmem:[#allocation2 + $0x148] sm:$0xff]
  %v125 = vld [vmem:[#allocation2 + $0x150] sm:$0xff]
  %v126 = vld [vmem:[#allocation2 + $0x158] sm:$0xff]
  %v127 = vld [vmem:[#allocation2 + $0x160] sm:$0xff]
  %v128 = vld [vmem:[#allocation2 + $0x168] sm:$0xff]
  %v129 = vld [vmem:[#allocation2 + $0x170] sm:$0xff]
  %v130 = vld [vmem:[#allocation2 + $0x178] sm:$0xff]
  %v131 = vld [vmem:[#allocation2 + $0x180] sm:$0xff]
  %v132 = vld [vmem:[#allocation2 + $0x188] sm:$0xff]
  %v133 = vld [vmem:[#allocation2 + $0x190] sm:$0xff]
  %v134 = vld [vmem:[#allocation2 + $0x198] sm:$0xff]
  %v135 = vld [vmem:[#allocation2 + $0x1a0] sm:$0xff]
  %v136 = vld [vmem:[#allocation2 + $0x1a8] sm:$0xff]
  %v137 = vld [vmem:[#allocation2 + $0x1b0] sm:$0xff]
  %v138 = vld [vmem:[#allocation2 + $0x1b8] sm:$0xff]
  %v139 = vld [vmem:[#allocation2 + $0x1c0] sm:$0xff]
  %v140 = vld [vmem:[#allocation2 + $0x1c8] sm:$0xff]
  %v141 = vld [vmem:[#allocation2 + $0x1d0] sm:$0xff]
  %v142 = vld [vmem:[#allocation2 + $0x1d8] sm:$0xff]
  %v143 = vld [vmem:[#allocation2 + $0x1e0] sm:$0xff]
  %v144 = vld [vmem:[#allocation2 + $0x1e8] sm:$0xff]
  %v145 = vld [vmem:[#allocation2 + $0x1f0] sm:$0xff]
  %v146 = vld [vmem:[#allocation2 + $0x1f8] sm:$0xff]
  %v147 = vld [vmem:[%s0] sm:$0xff]
  %v148 = vld [vmem:[%s0 + $0x8] sm:$0xff]
  %v149 = vld [vmem:[%s0 + $0x10] sm:$0xff]
  %v150 = vld [vmem:[%s0 + $0x18] sm:$0xff]
  %v151 = vld [vmem:[%s0 + $0x20] sm:$0xff]
  %v152 = vld [vmem:[%s0 + $0x28] sm:$0xff]
  %v153 = vld [vmem:[%s0 + $0x30] sm:$0xff]
  %v154 = vld [vmem:[%s0 + $0x38] sm:$0xff]
  %v155 = vld [vmem:[%s0 + $0x40] sm:$0xff]
  %v156 = vld [vmem:[%s0 + $0x48] sm:$0xff]
  %v157 = vld [vmem:[%s0 + $0x50] sm:$0xff]
  %v158 = vld [vmem:[%s0 + $0x58] sm:$0xff]
  %v159 = vld [vmem:[%s0 + $0x60] sm:$0xff]
  %v160 = vld [vmem:[%s0 + $0x68] sm:$0xff]
  %v161 = vld [vmem:[%s0 + $0x70] sm:$0xff]
  %v162 = vld [vmem:[%s0 + $0x78] sm:$0xff]
  %v163 = vld [vmem:[%s0 + $0x80] sm:$0xff]
  %v164 = vld [vmem:[%s0 + $0x88] sm:$0xff]
  %v165 = vld [vmem:[%s0 + $0x90] sm:$0xff]
  %v166 = vld [vmem:[%s0 + $0x98] sm:$0xff]
  %v167 = vld [vmem:[%s0 + $0xa0] sm:$0xff]
  %v168 = vld [vmem:[%s0 + $0xa8] sm:$0xff]
  %v169 = vld [vmem:[%s0 + $0xb0] sm:$0xff]
  %v170 = vld [vmem:[%s0 + $0xb8] sm:$0xff]
  %v171 = vld [vmem:[%s0 + $0xc0] sm:$0xff]
  %v172 = vld [vmem:[%s0 + $0xc8] sm:$0xff]
  %v173 = vld [vmem:[%s0 + $0xd0] sm:$0xff]
  %v174 = vld [vmem:[%s0 + $0xd8] sm:$0xff]
  %v175 = vld [vmem:[%s0 + $0xe0] sm:$0xff]
  %v176 = vld [vmem:[%s0 + $0xe8] sm:$0xff]
  %v177 = vld [vmem:[%s0 + $0xf0] sm:$0xff]
  %v178 = vld [vmem:[%s0 + $0xf8] sm:$0xff]
  %v179 = vld [vmem:[%s0 + $0x100] sm:$0xff]
  %v180 = vld [vmem:[%s0 + $0x108] sm:$0xff]
  %v181 = vld [vmem:[%s0 + $0x110] sm:$0xff]
  %v182 = vld [vmem:[%s0 + $0x118] sm:$0xff]
  %v183 = vld [vmem:[%s0 + $0x120] sm:$0xff]
  %v184 = vld [vmem:[%s0 + $0x128] sm:$0xff]
  %v185 = vld [vmem:[%s0 + $0x130] sm:$0xff]
  %v186 = vld [vmem:[%s0 + $0x138] sm:$0xff]
  %v187 = vld [vmem:[%s0 + $0x140] sm:$0xff]
  %v188 = vld [vmem:[%s0 + $0x148] sm:$0xff]
  %v189 = vld [vmem:[%s0 + $0x150] sm:$0xff]
  %v190 = vld [vmem:[%s0 + $0x158] sm:$0xff]
  %v191 = vld [vmem:[%s0 + $0x160] sm:$0xff]
  %v192 = vld [vmem:[%s0 + $0x168] sm:$0xff]
  %v193 = vld [vmem:[%s0 + $0x170] sm:$0xff]
  %v194 = vld [vmem:[%s0 + $0x178] sm:$0xff]
  %v195 = vld [vmem:[%s0 + $0x180] sm:$0xff]
  %v196 = vld [vmem:[%s0 + $0x188] sm:$0xff]
  %v197 = vld [vmem:[%s0 + $0x190] sm:$0xff]
  %v198 = vld [vmem:[%s0 + $0x198] sm:$0xff]
  %v199 = vld [vmem:[%s0 + $0x1a0] sm:$0xff]
  %v200 = vld [vmem:[%s0 + $0x1a8] sm:$0xff]
  %v201 = vld [vmem:[%s0 + $0x1b0] sm:$0xff]
  %v202 = vld [vmem:[%s0 + $0x1b8] sm:$0xff]
  %v203 = vld [vmem:[%s0 + $0x1c0] sm:$0xff]
  %v204 = vld [vmem:[%s0 + $0x1c8] sm:$0xff]
  %v205 = vld [vmem:[%s0 + $0x1d0] sm:$0xff]
  %v206 = vld [vmem:[%s0 + $0x1d8] sm:$0xff]
  %v207 = vld [vmem:[%s0 + $0x1e0] sm:$0xff]
  %v208 = vld [vmem:[%s0 + $0x1e8] sm:$0xff]
  %v209 = vld [vmem:[%s0 + $0x1f0] sm:$0xff]
  %v210 = vld [vmem:[%s0 + $0x1f8] sm:$0xff]
  %v211 = vld [vmem:[%s1] sm:$0xf]
  %v212 = vld [vmem:[%s1 + $0x4] sm:$0xf]
  %v213 = vld [vmem:[%s1 + $0x8] sm:$0xf]
  %v214 = vld [vmem:[%s1 + $0xc] sm:$0xf]
  %v215 = vld [vmem:[%s1 + $0x10] sm:$0xf]
  %v216 = vld [vmem:[%s1 + $0x14] sm:$0xf]
  %v217 = vld [vmem:[%s1 + $0x18] sm:$0xf]
  %v218 = vld [vmem:[%s1 + $0x1c] sm:$0xf]
  %v219 = vld [vmem:[%s1 + $0x20] sm:$0xf]
  %v220 = vld [vmem:[%s1 + $0x24] sm:$0xf]
  %v221 = vld [vmem:[%s1 + $0x28] sm:$0xf]
  %v222 = vld [vmem:[%s1 + $0x2c] sm:$0xf]
  %v223 = vld [vmem:[%s1 + $0x30] sm:$0xf]
  %v224 = vld [vmem:[%s1 + $0x34] sm:$0xf]
  %v225 = vld [vmem:[%s1 + $0x38] sm:$0xf]
  %v226 = vld [vmem:[%s1 + $0x3c] sm:$0xf]
  %v227 = vld [vmem:[%s1 + $0x40] sm:$0xf]
  %v228 = vld [vmem:[%s1 + $0x44] sm:$0xf]
  %v229 = vld [vmem:[%s1 + $0x48] sm:$0xf]
  %v230 = vld [vmem:[%s1 + $0x4c] sm:$0xf]
  %v231 = vld [vmem:[%s1 + $0x50] sm:$0xf]
  %v232 = vld [vmem:[%s1 + $0x54] sm:$0xf]
  %v233 = vld [vmem:[%s1 + $0x58] sm:$0xf]
  %v234 = vld [vmem:[%s1 + $0x5c] sm:$0xf]
  %v235 = vld [vmem:[%s1 + $0x60] sm:$0xf]
  %v236 = vld [vmem:[%s1 + $0x64] sm:$0xf]
  %v237 = vld [vmem:[%s1 + $0x68] sm:$0xf]
  %v238 = vld [vmem:[%s1 + $0x6c] sm:$0xf]
  %v239 = vld [vmem:[%s1 + $0x70] sm:$0xf]
  %v240 = vld [vmem:[%s1 + $0x74] sm:$0xf]
  %v241 = vld [vmem:[%s1 + $0x78] sm:$0xf]
  %v242 = vld [vmem:[%s1 + $0x7c] sm:$0xf]
  %v307 = vunpack.c.l.b16 %v147
  %v308 = vunpack.c.h.b16 %v147
  %v309 = vunpack.c.l.b16 %v148
  %v310 = vunpack.c.h.b16 %v148
  %v311 = vunpack.c.l.b16 %v149
  %v312 = vunpack.c.h.b16 %v149
  %v313 = vunpack.c.l.b16 %v150
  %v314 = vunpack.c.h.b16 %v150
  %v315 = vunpack.c.l.b16 %v151
  %v316 = vunpack.c.h.b16 %v151
  %v317 = vunpack.c.l.b16 %v152
  %v318 = vunpack.c.h.b16 %v152
  %v319 = vunpack.c.l.b16 %v153
  %v320 = vunpack.c.h.b16 %v153
  %v321 = vunpack.c.l.b16 %v154
  %v322 = vunpack.c.h.b16 %v154
  %v323 = vunpack.c.l.b16 %v155
  %v324 = vunpack.c.h.b16 %v155
  %v325 = vunpack.c.l.b16 %v156
  %v326 = vunpack.c.h.b16 %v156
  %v327 = vunpack.c.l.b16 %v157
  %v328 = vunpack.c.h.b16 %v157
  %v329 = vunpack.c.l.b16 %v158
  %v330 = vunpack.c.h.b16 %v158
  %v331 = vunpack.c.l.b16 %v159
  %v332 = vunpack.c.h.b16 %v159
  %v333 = vunpack.c.l.b16 %v160
  %v334 = vunpack.c.h.b16 %v160
  %v335 = vunpack.c.l.b16 %v161
  %v336 = vunpack.c.h.b16 %v161
  %v337 = vunpack.c.l.b16 %v162
  %v338 = vunpack.c.h.b16 %v162
  %v339 = vunpack.c.l.b16 %v163
  %v340 = vunpack.c.h.b16 %v163
  %v341 = vunpack.c.l.b16 %v164
  %v342 = vunpack.c.h.b16 %v164
  %v343 = vunpack.c.l.b16 %v165
  %v344 = vunpack.c.h.b16 %v165
  %v345 = vunpack.c.l.b16 %v166
  %v346 = vunpack.c.h.b16 %v166
  %v347 = vunpack.c.l.b16 %v167
  %v348 = vunpack.c.h.b16 %v167
  %v349 = vunpack.c.l.b16 %v168
  %v350 = vunpack.c.h.b16 %v168
  %v351 = vunpack.c.l.b16 %v169
  %v352 = vunpack.c.h.b16 %v169
  %v353 = vunpack.c.l.b16 %v170
  %v354 = vunpack.c.h.b16 %v170
  %v355 = vunpack.c.l.b16 %v171
  %v356 = vunpack.c.h.b16 %v171
  %v357 = vunpack.c.l.b16 %v172
  %v358 = vunpack.c.h.b16 %v172
  %v359 = vunpack.c.l.b16 %v173
  %v360 = vunpack.c.h.b16 %v173
  %v361 = vunpack.c.l.b16 %v174
  %v362 = vunpack.c.h.b16 %v174
  %v363 = vunpack.c.l.b16 %v175
  %v364 = vunpack.c.h.b16 %v175
  %v365 = vunpack.c.l.b16 %v176
  %v366 = vunpack.c.h.b16 %v176
  %v367 = vunpack.c.l.b16 %v177
  %v368 = vunpack.c.h.b16 %v177
  %v369 = vunpack.c.l.b16 %v178
  %v370 = vunpack.c.h.b16 %v178
  %v371 = vunpack.c.l.b16 %v179
  %v372 = vunpack.c.h.b16 %v179
  %v373 = vunpack.c.l.b16 %v180
  %v374 = vunpack.c.h.b16 %v180
  %v375 = vunpack.c.l.b16 %v181
  %v376 = vunpack.c.h.b16 %v181
  %v377 = vunpack.c.l.b16 %v182
  %v378 = vunpack.c.h.b16 %v182
  %v379 = vunpack.c.l.b16 %v183
  %v380 = vunpack.c.h.b16 %v183
  %v381 = vunpack.c.l.b16 %v184
  %v382 = vunpack.c.h.b16 %v184
  %v383 = vunpack.c.l.b16 %v185
  %v384 = vunpack.c.h.b16 %v185
  %v385 = vunpack.c.l.b16 %v186
  %v386 = vunpack.c.h.b16 %v186
  %v387 = vunpack.c.l.b16 %v187
  %v388 = vunpack.c.h.b16 %v187
  %v389 = vunpack.c.l.b16 %v188
  %v390 = vunpack.c.h.b16 %v188
  %v391 = vunpack.c.l.b16 %v189
  %v392 = vunpack.c.h.b16 %v189
  %v393 = vunpack.c.l.b16 %v190
  %v394 = vunpack.c.h.b16 %v190
  %v395 = vunpack.c.l.b16 %v191
  %v396 = vunpack.c.h.b16 %v191
  %v397 = vunpack.c.l.b16 %v192
  %v398 = vunpack.c.h.b16 %v192
  %v399 = vunpack.c.l.b16 %v193
  %v400 = vunpack.c.h.b16 %v193
  %v401 = vunpack.c.l.b16 %v194
  %v402 = vunpack.c.h.b16 %v194
  %v403 = vunpack.c.l.b16 %v195
  %v404 = vunpack.c.h.b16 %v195
  %v405 = vunpack.c.l.b16 %v196
  %v406 = vunpack.c.h.b16 %v196
  %v407 = vunpack.c.l.b16 %v197
  %v408 = vunpack.c.h.b16 %v197
  %v409 = vunpack.c.l.b16 %v198
  %v410 = vunpack.c.h.b16 %v198
  %v411 = vunpack.c.l.b16 %v199
  %v412 = vunpack.c.h.b16 %v199
  %v413 = vunpack.c.l.b16 %v200
  %v414 = vunpack.c.h.b16 %v200
  %v415 = vunpack.c.l.b16 %v201
  %v416 = vunpack.c.h.b16 %v201
  %v417 = vunpack.c.l.b16 %v202
  %v418 = vunpack.c.h.b16 %v202
  %v419 = vunpack.c.l.b16 %v203
  %v420 = vunpack.c.h.b16 %v203
  %v421 = vunpack.c.l.b16 %v204
  %v422 = vunpack.c.h.b16 %v204
  %v423 = vunpack.c.l.b16 %v205
  %v424 = vunpack.c.h.b16 %v205
  %v425 = vunpack.c.l.b16 %v206
  %v426 = vunpack.c.h.b16 %v206
  %v427 = vunpack.c.l.b16 %v207
  %v428 = vunpack.c.h.b16 %v207
  %v429 = vunpack.c.l.b16 %v208
  %v430 = vunpack.c.h.b16 %v208
  %v431 = vunpack.c.l.b16 %v209
  %v432 = vunpack.c.h.b16 %v209
  %v433 = vunpack.c.l.b16 %v210
  %v434 = vunpack.c.h.b16 %v210
  %v435 = vpack.c.b16 %v309, %v307
  %v436 = vpack.c.b16 %v310, %v308
  %v437 = vpack.c.b16 %v313, %v311
  %v438 = vpack.c.b16 %v314, %v312
  %v439 = vpack.c.b16 %v317, %v315
  %v440 = vpack.c.b16 %v318, %v316
  %v441 = vpack.c.b16 %v321, %v319
  %v442 = vpack.c.b16 %v322, %v320
  %v443 = vpack.c.b16 %v325, %v323
  %v444 = vpack.c.b16 %v326, %v324
  %v445 = vpack.c.b16 %v329, %v327
  %v446 = vpack.c.b16 %v330, %v328
  %v447 = vpack.c.b16 %v333, %v331
  %v448 = vpack.c.b16 %v334, %v332
  %v449 = vpack.c.b16 %v337, %v335
  %v450 = vpack.c.b16 %v338, %v336
  %v451 = vpack.c.b16 %v341, %v339
  %v452 = vpack.c.b16 %v342, %v340
  %v453 = vpack.c.b16 %v345, %v343
  %v454 = vpack.c.b16 %v346, %v344
  %v455 = vpack.c.b16 %v349, %v347
  %v456 = vpack.c.b16 %v350, %v348
  %v457 = vpack.c.b16 %v353, %v351
  %v458 = vpack.c.b16 %v354, %v352
  %v459 = vpack.c.b16 %v357, %v355
  %v460 = vpack.c.b16 %v358, %v356
  %v461 = vpack.c.b16 %v361, %v359
  %v462 = vpack.c.b16 %v362, %v360
  %v463 = vpack.c.b16 %v365, %v363
  %v464 = vpack.c.b16 %v366, %v364
  %v465 = vpack.c.b16 %v369, %v367
  %v466 = vpack.c.b16 %v370, %v368
  %v467 = vpack.c.b16 %v373, %v371
  %v468 = vpack.c.b16 %v374, %v372
  %v469 = vpack.c.b16 %v377, %v375
  %v470 = vpack.c.b16 %v378, %v376
  %v471 = vpack.c.b16 %v381, %v379
  %v472 = vpack.c.b16 %v382, %v380
  %v473 = vpack.c.b16 %v385, %v383
  %v474 = vpack.c.b16 %v386, %v384
  %v475 = vpack.c.b16 %v389, %v387
  %v476 = vpack.c.b16 %v390, %v388
  %v477 = vpack.c.b16 %v393, %v391
  %v478 = vpack.c.b16 %v394, %v392
  %v479 = vpack.c.b16 %v397, %v395
  %v480 = vpack.c.b16 %v398, %v396
  %v481 = vpack.c.b16 %v401, %v399
  %v482 = vpack.c.b16 %v402, %v400
  %v483 = vpack.c.b16 %v405, %v403
  %v484 = vpack.c.b16 %v406, %v404
  %v485 = vpack.c.b16 %v409, %v407
  %v486 = vpack.c.b16 %v410, %v408
  %v487 = vpack.c.b16 %v413, %v411
  %v488 = vpack.c.b16 %v414, %v412
  %v489 = vpack.c.b16 %v417, %v415
  %v490 = vpack.c.b16 %v418, %v416
  %v491 = vpack.c.b16 %v421, %v419
  %v492 = vpack.c.b16 %v422, %v420
  %v493 = vpack.c.b16 %v425, %v423
  %v494 = vpack.c.b16 %v426, %v424
  %v495 = vpack.c.b16 %v429, %v427
  %v496 = vpack.c.b16 %v430, %v428
  %v497 = vpack.c.b16 %v433, %v431
  %v498 = vpack.c.b16 %v434, %v432
  %v595 = vunpack.c.l.b16 %v211
  %v596 = vunpack.c.l.b16 %v212
  %v597 = vunpack.c.l.b16 %v213
  %v598 = vunpack.c.l.b16 %v214
  %v599 = vunpack.c.l.b16 %v215
  %v600 = vunpack.c.l.b16 %v216
  %v601 = vunpack.c.l.b16 %v217
  %v602 = vunpack.c.l.b16 %v218
  %v603 = vunpack.c.l.b16 %v219
  %v604 = vunpack.c.l.b16 %v220
  %v605 = vunpack.c.l.b16 %v221
  %v606 = vunpack.c.l.b16 %v222
  %v607 = vunpack.c.l.b16 %v223
  %v608 = vunpack.c.l.b16 %v224
  %v609 = vunpack.c.l.b16 %v225
  %v610 = vunpack.c.l.b16 %v226
  %v611 = vunpack.c.l.b16 %v227
  %v612 = vunpack.c.l.b16 %v228
  %v613 = vunpack.c.l.b16 %v229
  %v614 = vunpack.c.l.b16 %v230
  %v615 = vunpack.c.l.b16 %v231
  %v616 = vunpack.c.l.b16 %v232
  %v617 = vunpack.c.l.b16 %v233
  %v618 = vunpack.c.l.b16 %v234
  %v619 = vunpack.c.l.b16 %v235
  %v620 = vunpack.c.l.b16 %v236
  %v621 = vunpack.c.l.b16 %v237
  %v622 = vunpack.c.l.b16 %v238
  %v623 = vunpack.c.l.b16 %v239
  %v624 = vunpack.c.l.b16 %v240
  %v625 = vunpack.c.l.b16 %v241
  %v626 = vunpack.c.l.b16 %v242
  %v627 = vpack.c.b16 %v596, %v595
  %v628 = vpack.c.b16 %v598, %v597
  %v629 = vpack.c.b16 %v600, %v599
  %v630 = vpack.c.b16 %v602, %v601
  %v631 = vpack.c.b16 %v604, %v603
  %v632 = vpack.c.b16 %v606, %v605
  %v633 = vpack.c.b16 %v608, %v607
  %v634 = vpack.c.b16 %v610, %v609
  %v635 = vpack.c.b16 %v612, %v611
  %v636 = vpack.c.b16 %v614, %v613
  %v637 = vpack.c.b16 %v616, %v615
  %v638 = vpack.c.b16 %v618, %v617
  %v639 = vpack.c.b16 %v620, %v619
  %v640 = vpack.c.b16 %v622, %v621
  %v641 = vpack.c.b16 %v624, %v623
  %v642 = vpack.c.b16 %v626, %v625
  %659 = vmatprep.subr.bf16.mxu0 0
  %660 = vmatpush1.bf16.msra.mxu0 %v634
  %661 = vmatprep.subr.bf16.mxu0 0
  %662 = vmatpush1.bf16.msra.mxu0 %v633
  %663 = vmatprep.subr.bf16.mxu0 0
  %664 = vmatpush1.bf16.msra.mxu0 %v632
  %665 = vmatprep.subr.bf16.mxu0 0
  %666 = vmatpush1.bf16.msra.mxu0 %v631
  %667 = vmatprep.subr.bf16.mxu0 0
  %668 = vmatpush1.bf16.msra.mxu0 %v630
  %669 = vmatprep.subr.bf16.mxu0 0
  %670 = vmatpush1.bf16.msra.mxu0 %v629
  %671 = vmatprep.subr.bf16.mxu0 0
  %672 = vmatpush1.bf16.msra.mxu0 %v628
  %673 = vmatprep.subr.bf16.mxu0 0
  %674 = vmatpush1.bf16.msra.mxu0 %v627
  %675 = vmatprep.subr.bf16.mxu0 0
  %676 = vmatpush2.bf16.msra.mxu0 %v642
  %677 = vmatprep.subr.bf16.mxu0 0
  %678 = vmatpush2.bf16.msra.mxu0 %v641
  %679 = vmatprep.subr.bf16.mxu0 0
  %680 = vmatpush2.bf16.msra.mxu0 %v640
  %681 = vmatprep.subr.bf16.mxu0 0
  %682 = vmatpush2.bf16.msra.mxu0 %v639
  %683 = vmatprep.subr.bf16.mxu0 0
  %684 = vmatpush2.bf16.msra.mxu0 %v638
  %685 = vmatprep.subr.bf16.mxu0 0
  %686 = vmatpush2.bf16.msra.mxu0 %v637
  %687 = vmatprep.subr.bf16.mxu0 0
  %688 = vmatpush2.bf16.msra.mxu0 %v636
  %689 = vmatprep.subr.bf16.mxu0 0
  %690 = vmatpush2.bf16.msra.mxu0 %v635
  %691 = vmatprep.mubr.bf16.mxu0 %v436
  %692 = vmatmul.mubr.bf16.gmra.mxu0 %v435
  %v693 = vpop.f32.mrf.mxu0
  %v694 = vadd.f32 0.0, %v693
  %v695 = vpop.f32.mrf.mxu0
  %v696 = vpop.f32.mrf.mxu0
  %v697 = vadd.f32 0.0, %v696
  %v698 = vpop.f32.mrf.mxu0
  %699 = vmatprep.mubr.bf16.mxu0 %v438
  %700 = vmatmul.mubr.bf16.gmra.mxu0 %v437
  %v701 = vpop.f32.mrf.mxu0
  %v702 = vadd.f32 0.0, %v701
  %v703 = vpop.f32.mrf.mxu0
  %v704 = vpop.f32.mrf.mxu0
  %v705 = vadd.f32 0.0, %v704
  %v706 = vpop.f32.mrf.mxu0
  %707 = vmatprep.mubr.bf16.mxu0 %v440
  %708 = vmatmul.mubr.bf16.gmra.mxu0 %v439
  %v709 = vpop.f32.mrf.mxu0
  %v710 = vadd.f32 0.0, %v709
  %v711 = vpop.f32.mrf.mxu0
  %v712 = vpop.f32.mrf.mxu0
  %v713 = vadd.f32 0.0, %v712
  %v714 = vpop.f32.mrf.mxu0
  %715 = vmatprep.mubr.bf16.mxu0 %v442
  %716 = vmatmul.mubr.bf16.gmra.mxu0 %v441
  %v717 = vpop.f32.mrf.mxu0
  %v718 = vadd.f32 0.0, %v717
  %v719 = vpop.f32.mrf.mxu0
  %v720 = vpop.f32.mrf.mxu0
  %v721 = vadd.f32 0.0, %v720
  %v722 = vpop.f32.mrf.mxu0
  %723 = vmatprep.mubr.bf16.mxu0 %v444
  %724 = vmatmul.mubr.bf16.gmra.mxu0 %v443
  %v725 = vpop.f32.mrf.mxu0
  %v726 = vadd.f32 0.0, %v725
  %v727 = vpop.f32.mrf.mxu0
  %v728 = vpop.f32.mrf.mxu0
  %v729 = vadd.f32 0.0, %v728
  %v730 = vpop.f32.mrf.mxu0
  %731 = vmatprep.mubr.bf16.mxu0 %v446
  %732 = vmatmul.mubr.bf16.gmra.mxu0 %v445
  %v733 = vpop.f32.mrf.mxu0
  %v734 = vadd.f32 0.0, %v733
  %v735 = vpop.f32.mrf.mxu0
  %v736 = vpop.f32.mrf.mxu0
  %v737 = vadd.f32 0.0, %v736
  %v738 = vpop.f32.mrf.mxu0
  %739 = vmatprep.mubr.bf16.mxu0 %v448
  %740 = vmatmul.mubr.bf16.gmra.mxu0 %v447
  %v741 = vpop.f32.mrf.mxu0
  %v742 = vadd.f32 0.0, %v741
  %v743 = vpop.f32.mrf.mxu0
  %v744 = vpop.f32.mrf.mxu0
  %v745 = vadd.f32 0.0, %v744
  %v746 = vpop.f32.mrf.mxu0
  %747 = vmatprep.mubr.bf16.mxu0 %v450
  %748 = vmatmul.mubr.bf16.gmra.mxu0 %v449
  %v749 = vpop.f32.mrf.mxu0
  %v750 = vadd.f32 0.0, %v749
  %v751 = vpop.f32.mrf.mxu0
  %v752 = vpop.f32.mrf.mxu0
  %v753 = vadd.f32 0.0, %v752
  %v754 = vpop.f32.mrf.mxu0
  %755 = vmatprep.mubr.bf16.mxu0 %v452
  %756 = vmatmul.mubr.bf16.gmra.mxu0 %v451
  %v757 = vpop.f32.mrf.mxu0
  %v758 = vadd.f32 0.0, %v757
  %v759 = vpop.f32.mrf.mxu0
  %v760 = vpop.f32.mrf.mxu0
  %v761 = vadd.f32 0.0, %v760
  %v762 = vpop.f32.mrf.mxu0
  %763 = vmatprep.mubr.bf16.mxu0 %v454
  %764 = vmatmul.mubr.bf16.gmra.mxu0 %v453
  %v765 = vpop.f32.mrf.mxu0
  %v766 = vadd.f32 0.0, %v765
  %v767 = vpop.f32.mrf.mxu0
  %v768 = vpop.f32.mrf.mxu0
  %v769 = vadd.f32 0.0, %v768
  %v770 = vpop.f32.mrf.mxu0
  %771 = vmatprep.mubr.bf16.mxu0 %v456
  %772 = vmatmul.mubr.bf16.gmra.mxu0 %v455
  %v773 = vpop.f32.mrf.mxu0
  %v774 = vadd.f32 0.0, %v773
  %v775 = vpop.f32.mrf.mxu0
  %v776 = vpop.f32.mrf.mxu0
  %v777 = vadd.f32 0.0, %v776
  %v778 = vpop.f32.mrf.mxu0
  %779 = vmatprep.mubr.bf16.mxu0 %v458
  %780 = vmatmul.mubr.bf16.gmra.mxu0 %v457
  %v781 = vpop.f32.mrf.mxu0
  %v782 = vadd.f32 0.0, %v781
  %v783 = vpop.f32.mrf.mxu0
  %v784 = vpop.f32.mrf.mxu0
  %v785 = vadd.f32 0.0, %v784
  %v786 = vpop.f32.mrf.mxu0
  %787 = vmatprep.mubr.bf16.mxu0 %v460
  %788 = vmatmul.mubr.bf16.gmra.mxu0 %v459
  %v789 = vpop.f32.mrf.mxu0
  %v790 = vadd.f32 0.0, %v789
  %v791 = vpop.f32.mrf.mxu0
  %v792 = vpop.f32.mrf.mxu0
  %v793 = vadd.f32 0.0, %v792
  %v794 = vpop.f32.mrf.mxu0
  %795 = vmatprep.mubr.bf16.mxu0 %v462
  %796 = vmatmul.mubr.bf16.gmra.mxu0 %v461
  %v797 = vpop.f32.mrf.mxu0
  %v798 = vadd.f32 0.0, %v797
  %v799 = vpop.f32.mrf.mxu0
  %v800 = vpop.f32.mrf.mxu0
  %v801 = vadd.f32 0.0, %v800
  %v802 = vpop.f32.mrf.mxu0
  %803 = vmatprep.mubr.bf16.mxu0 %v464
  %804 = vmatmul.mubr.bf16.gmra.mxu0 %v463
  %v805 = vpop.f32.mrf.mxu0
  %v806 = vadd.f32 0.0, %v805
  %v807 = vpop.f32.mrf.mxu0
  %v808 = vpop.f32.mrf.mxu0
  %v809 = vadd.f32 0.0, %v808
  %v810 = vpop.f32.mrf.mxu0
  %811 = vmatprep.mubr.bf16.mxu0 %v466
  %812 = vmatmul.mubr.bf16.gmra.mxu0 %v465
  %v813 = vpop.f32.mrf.mxu0
  %v814 = vadd.f32 0.0, %v813
  %v815 = vpop.f32.mrf.mxu0
  %v816 = vpop.f32.mrf.mxu0
  %v817 = vadd.f32 0.0, %v816
  %v818 = vpop.f32.mrf.mxu0
  %819 = vmatprep.mubr.bf16.mxu0 %v468
  %820 = vmatmul.mubr.bf16.gmra.mxu0 %v467
  %v821 = vpop.f32.mrf.mxu0
  %v822 = vadd.f32 0.0, %v821
  %v823 = vpop.f32.mrf.mxu0
  %v824 = vpop.f32.mrf.mxu0
  %v825 = vadd.f32 0.0, %v824
  %v826 = vpop.f32.mrf.mxu0
  %827 = vmatprep.mubr.bf16.mxu0 %v470
  %828 = vmatmul.mubr.bf16.gmra.mxu0 %v469
  %v829 = vpop.f32.mrf.mxu0
  %v830 = vadd.f32 0.0, %v829
  %v831 = vpop.f32.mrf.mxu0
  %v832 = vpop.f32.mrf.mxu0
  %v833 = vadd.f32 0.0, %v832
  %v834 = vpop.f32.mrf.mxu0
  %835 = vmatprep.mubr.bf16.mxu0 %v472
  %836 = vmatmul.mubr.bf16.gmra.mxu0 %v471
  %v837 = vpop.f32.mrf.mxu0
  %v838 = vadd.f32 0.0, %v837
  %v839 = vpop.f32.mrf.mxu0
  %v840 = vpop.f32.mrf.mxu0
  %v841 = vadd.f32 0.0, %v840
  %v842 = vpop.f32.mrf.mxu0
  %843 = vmatprep.mubr.bf16.mxu0 %v474
  %844 = vmatmul.mubr.bf16.gmra.mxu0 %v473
  %v845 = vpop.f32.mrf.mxu0
  %v846 = vadd.f32 0.0, %v845
  %v847 = vpop.f32.mrf.mxu0
  %v848 = vpop.f32.mrf.mxu0
  %v849 = vadd.f32 0.0, %v848
  %v850 = vpop.f32.mrf.mxu0
  %851 = vmatprep.mubr.bf16.mxu0 %v476
  %852 = vmatmul.mubr.bf16.gmra.mxu0 %v475
  %v853 = vpop.f32.mrf.mxu0
  %v854 = vadd.f32 0.0, %v853
  %v855 = vpop.f32.mrf.mxu0
  %v856 = vpop.f32.mrf.mxu0
  %v857 = vadd.f32 0.0, %v856
  %v858 = vpop.f32.mrf.mxu0
  %859 = vmatprep.mubr.bf16.mxu0 %v478
  %860 = vmatmul.mubr.bf16.gmra.mxu0 %v477
  %v861 = vpop.f32.mrf.mxu0
  %v862 = vadd.f32 0.0, %v861
  %v863 = vpop.f32.mrf.mxu0
  %v864 = vpop.f32.mrf.mxu0
  %v865 = vadd.f32 0.0, %v864
  %v866 = vpop.f32.mrf.mxu0
  %867 = vmatprep.mubr.bf16.mxu0 %v480
  %868 = vmatmul.mubr.bf16.gmra.mxu0 %v479
  %v869 = vpop.f32.mrf.mxu0
  %v870 = vadd.f32 0.0, %v869
  %v871 = vpop.f32.mrf.mxu0
  %v872 = vpop.f32.mrf.mxu0
  %v873 = vadd.f32 0.0, %v872
  %v874 = vpop.f32.mrf.mxu0
  %875 = vmatprep.mubr.bf16.mxu0 %v482
  %876 = vmatmul.mubr.bf16.gmra.mxu0 %v481
  %v877 = vpop.f32.mrf.mxu0
  %v878 = vadd.f32 0.0, %v877
  %v879 = vpop.f32.mrf.mxu0
  %v880 = vpop.f32.mrf.mxu0
  %v881 = vadd.f32 0.0, %v880
  %v882 = vpop.f32.mrf.mxu0
  %883 = vmatprep.mubr.bf16.mxu0 %v484
  %884 = vmatmul.mubr.bf16.gmra.mxu0 %v483
  %v885 = vpop.f32.mrf.mxu0
  %v886 = vadd.f32 0.0, %v885
  %v887 = vpop.f32.mrf.mxu0
  %v888 = vpop.f32.mrf.mxu0
  %v889 = vadd.f32 0.0, %v888
  %v890 = vpop.f32.mrf.mxu0
  %891 = vmatprep.mubr.bf16.mxu0 %v486
  %892 = vmatmul.mubr.bf16.gmra.mxu0 %v485
  %v893 = vpop.f32.mrf.mxu0
  %v894 = vadd.f32 0.0, %v893
  %v895 = vpop.f32.mrf.mxu0
  %v896 = vpop.f32.mrf.mxu0
  %v897 = vadd.f32 0.0, %v896
  %v898 = vpop.f32.mrf.mxu0
  %899 = vmatprep.mubr.bf16.mxu0 %v488
  %900 = vmatmul.mubr.bf16.gmra.mxu0 %v487
  %v901 = vpop.f32.mrf.mxu0
  %v902 = vadd.f32 0.0, %v901
  %v903 = vpop.f32.mrf.mxu0
  %v904 = vpop.f32.mrf.mxu0
  %v905 = vadd.f32 0.0, %v904
  %v906 = vpop.f32.mrf.mxu0
  %907 = vmatprep.mubr.bf16.mxu0 %v490
  %908 = vmatmul.mubr.bf16.gmra.mxu0 %v489
  %v909 = vpop.f32.mrf.mxu0
  %v910 = vadd.f32 0.0, %v909
  %v911 = vpop.f32.mrf.mxu0
  %v912 = vpop.f32.mrf.mxu0
  %v913 = vadd.f32 0.0, %v912
  %v914 = vpop.f32.mrf.mxu0
  %915 = vmatprep.mubr.bf16.mxu0 %v492
  %916 = vmatmul.mubr.bf16.gmra.mxu0 %v491
  %v917 = vpop.f32.mrf.mxu0
  %v918 = vadd.f32 0.0, %v917
  %v919 = vpop.f32.mrf.mxu0
  %v920 = vpop.f32.mrf.mxu0
  %v921 = vadd.f32 0.0, %v920
  %v922 = vpop.f32.mrf.mxu0
  %923 = vmatprep.mubr.bf16.mxu0 %v494
  %924 = vmatmul.mubr.bf16.gmra.mxu0 %v493
  %v925 = vpop.f32.mrf.mxu0
  %v926 = vadd.f32 0.0, %v925
  %v927 = vpop.f32.mrf.mxu0
  %v928 = vpop.f32.mrf.mxu0
  %v929 = vadd.f32 0.0, %v928
  %v930 = vpop.f32.mrf.mxu0
  %931 = vmatprep.mubr.bf16.mxu0 %v496
  %932 = vmatmul.mubr.bf16.gmra.mxu0 %v495
  %v933 = vpop.f32.mrf.mxu0
  %v934 = vadd.f32 0.0, %v933
  %v935 = vpop.f32.mrf.mxu0
  %v936 = vpop.f32.mrf.mxu0
  %v937 = vadd.f32 0.0, %v936
  %v938 = vpop.f32.mrf.mxu0
  %939 = vmatprep.mubr.bf16.mxu0 %v498
  %940 = vmatmul.mubr.bf16.gmra.mxu0 %v497
  %v941 = vpop.f32.mrf.mxu0
  %v942 = vadd.f32 0.0, %v941
  %v943 = vpop.f32.mrf.mxu0
  %v944 = vpop.f32.mrf.mxu0
  %v945 = vadd.f32 0.0, %v944
  %v946 = vpop.f32.mrf.mxu0
  %947 = vdwg.mxu0
  %v948 = vadd.f32 %v83, %v694
  %v949 = vadd.f32 %v84, %v697
  %v950 = vadd.f32 %v85, %v702
  %v951 = vadd.f32 %v86, %v705
  %v952 = vadd.f32 %v87, %v710
  %v953 = vadd.f32 %v88, %v713
  %v954 = vadd.f32 %v89, %v718
  %v955 = vadd.f32 %v90, %v721
  %v956 = vadd.f32 %v91, %v726
  %v957 = vadd.f32 %v92, %v729
  %v958 = vadd.f32 %v93, %v734
  %v959 = vadd.f32 %v94, %v737
  %v960 = vadd.f32 %v95, %v742
  %v961 = vadd.f32 %v96, %v745
  %v962 = vadd.f32 %v97, %v750
  %v963 = vadd.f32 %v98, %v753
  %v964 = vadd.f32 %v99, %v758
  %v965 = vadd.f32 %v100, %v761
  %v966 = vadd.f32 %v101, %v766
  %v967 = vadd.f32 %v102, %v769
  %v968 = vadd.f32 %v103, %v774
  %v969 = vadd.f32 %v104, %v777
  %v970 = vadd.f32 %v105, %v782
  %v971 = vadd.f32 %v106, %v785
  %v972 = vadd.f32 %v107, %v790
  %v973 = vadd.f32 %v108, %v793
  %v974 = vadd.f32 %v109, %v798
  %v975 = vadd.f32 %v110, %v801
  %v976 = vadd.f32 %v111, %v806
  %v977 = vadd.f32 %v112, %v809
  %v978 = vadd.f32 %v113, %v814
  %v979 = vadd.f32 %v114, %v817
  %v980 = vadd.f32 %v115, %v822
  %v981 = vadd.f32 %v116, %v825
  %v982 = vadd.f32 %v117, %v830
  %v983 = vadd.f32 %v118, %v833
  %v984 = vadd.f32 %v119, %v838
  %v985 = vadd.f32 %v120, %v841
  %v986 = vadd.f32 %v121, %v846
  %v987 = vadd.f32 %v122, %v849
  %v988 = vadd.f32 %v123, %v854
  %v989 = vadd.f32 %v124, %v857
  %v990 = vadd.f32 %v125, %v862
  %v991 = vadd.f32 %v126, %v865
  %v992 = vadd.f32 %v127, %v870
  %v993 = vadd.f32 %v128, %v873
  %v994 = vadd.f32 %v129, %v878
  %v995 = vadd.f32 %v130, %v881
  %v996 = vadd.f32 %v131, %v886
  %v997 = vadd.f32 %v132, %v889
  %v998 = vadd.f32 %v133, %v894
  %v999 = vadd.f32 %v134, %v897
  %v1000 = vadd.f32 %v135, %v902
  %v1001 = vadd.f32 %v136, %v905
  %v1002 = vadd.f32 %v137, %v910
  %v1003 = vadd.f32 %v138, %v913
  %v1004 = vadd.f32 %v139, %v918
  %v1005 = vadd.f32 %v140, %v921
  %v1006 = vadd.f32 %v141, %v926
  %v1007 = vadd.f32 %v142, %v929
  %v1008 = vadd.f32 %v143, %v934
  %v1009 = vadd.f32 %v144, %v937
  %v1010 = vadd.f32 %v145, %v942
  %v1011 = vadd.f32 %v146, %v945
  %1012 = vst [vmem:[#allocation2] sm:$0xff] %v948
  %1013 = vst [vmem:[#allocation2 + $0x8] sm:$0xff] %v949
  %1014 = vst [vmem:[#allocation2 + $0x10] sm:$0xff] %v950
  %1015 = vst [vmem:[#allocation2 + $0x18] sm:$0xff] %v951
  %1016 = vst [vmem:[#allocation2 + $0x20] sm:$0xff] %v952
  %1017 = vst [vmem:[#allocation2 + $0x28] sm:$0xff] %v953
  %1018 = vst [vmem:[#allocation2 + $0x30] sm:$0xff] %v954
  %1019 = vst [vmem:[#allocation2 + $0x38] sm:$0xff] %v955
  %1020 = vst [vmem:[#allocation2 + $0x40] sm:$0xff] %v956
  %1021 = vst [vmem:[#allocation2 + $0x48] sm:$0xff] %v957
  %1022 = vst [vmem:[#allocation2 + $0x50] sm:$0xff] %v958
  %1023 = vst [vmem:[#allocation2 + $0x58] sm:$0xff] %v959
  %1024 = vst [vmem:[#allocation2 + $0x60] sm:$0xff] %v960
  %1025 = vst [vmem:[#allocation2 + $0x68] sm:$0xff] %v961
  %1026 = vst [vmem:[#allocation2 + $0x70] sm:$0xff] %v962
  %1027 = vst [vmem:[#allocation2 + $0x78] sm:$0xff] %v963
  %1028 = vst [vmem:[#allocation2 + $0x80] sm:$0xff] %v964
  %1029 = vst [vmem:[#allocation2 + $0x88] sm:$0xff] %v965
  %1030 = vst [vmem:[#allocation2 + $0x90] sm:$0xff] %v966
  %1031 = vst [vmem:[#allocation2 + $0x98] sm:$0xff] %v967
  %1032 = vst [vmem:[#allocation2 + $0xa0] sm:$0xff] %v968
  %1033 = vst [vmem:[#allocation2 + $0xa8] sm:$0xff] %v969
  %1034 = vst [vmem:[#allocation2 + $0xb0] sm:$0xff] %v970
  %1035 = vst [vmem:[#allocation2 + $0xb8] sm:$0xff] %v971
  %1036 = vst [vmem:[#allocation2 + $0xc0] sm:$0xff] %v972
  %1037 = vst [vmem:[#allocation2 + $0xc8] sm:$0xff] %v973
  %1038 = vst [vmem:[#allocation2 + $0xd0] sm:$0xff] %v974
  %1039 = vst [vmem:[#allocation2 + $0xd8] sm:$0xff] %v975
  %1040 = vst [vmem:[#allocation2 + $0xe0] sm:$0xff] %v976
  %1041 = vst [vmem:[#allocation2 + $0xe8] sm:$0xff] %v977
  %1042 = vst [vmem:[#allocation2 + $0xf0] sm:$0xff] %v978
  %1043 = vst [vmem:[#allocation2 + $0xf8] sm:$0xff] %v979
  %1044 = vst [vmem:[#allocation2 + $0x100] sm:$0xff] %v980
  %1045 = vst [vmem:[#allocation2 + $0x108] sm:$0xff] %v981
  %1046 = vst [vmem:[#allocation2 + $0x110] sm:$0xff] %v982
  %1047 = vst [vmem:[#allocation2 + $0x118] sm:$0xff] %v983
  %1048 = vst [vmem:[#allocation2 + $0x120] sm:$0xff] %v984
  %1049 = vst [vmem:[#allocation2 + $0x128] sm:$0xff] %v985
  %1050 = vst [vmem:[#allocation2 + $0x130] sm:$0xff] %v986
  %1051 = vst [vmem:[#allocation2 + $0x138] sm:$0xff] %v987
  %1052 = vst [vmem:[#allocation2 + $0x140] sm:$0xff] %v988
  %1053 = vst [vmem:[#allocation2 + $0x148] sm:$0xff] %v989
  %1054 = vst [vmem:[#allocation2 + $0x150] sm:$0xff] %v990
  %1055 = vst [vmem:[#allocation2 + $0x158] sm:$0xff] %v991
  %1056 = vst [vmem:[#allocation2 + $0x160] sm:$0xff] %v992
  %1057 = vst [vmem:[#allocation2 + $0x168] sm:$0xff] %v993
  %1058 = vst [vmem:[#allocation2 + $0x170] sm:$0xff] %v994
  %1059 = vst [vmem:[#allocation2 + $0x178] sm:$0xff] %v995
  %1060 = vst [vmem:[#allocation2 + $0x180] sm:$0xff] %v996
  %1061 = vst [vmem:[#allocation2 + $0x188] sm:$0xff] %v997
  %1062 = vst [vmem:[#allocation2 + $0x190] sm:$0xff] %v998
  %1063 = vst [vmem:[#allocation2 + $0x198] sm:$0xff] %v999
  %1064 = vst [vmem:[#allocation2 + $0x1a0] sm:$0xff] %v1000
  %1065 = vst [vmem:[#allocation2 + $0x1a8] sm:$0xff] %v1001
  %1066 = vst [vmem:[#allocation2 + $0x1b0] sm:$0xff] %v1002
  %1067 = vst [vmem:[#allocation2 + $0x1b8] sm:$0xff] %v1003
  %1068 = vst [vmem:[#allocation2 + $0x1c0] sm:$0xff] %v1004
  %1069 = vst [vmem:[#allocation2 + $0x1c8] sm:$0xff] %v1005
  %1070 = vst [vmem:[#allocation2 + $0x1d0] sm:$0xff] %v1006
  %1071 = vst [vmem:[#allocation2 + $0x1d8] sm:$0xff] %v1007
  %1072 = vst [vmem:[#allocation2 + $0x1e0] sm:$0xff] %v1008
  %1073 = vst [vmem:[#allocation2 + $0x1e8] sm:$0xff] %v1009
  %1074 = vst [vmem:[#allocation2 + $0x1f0] sm:$0xff] %v1010
  %1075 = vst [vmem:[#allocation2 + $0x1f8] sm:$0xff] %v1011
  // Predicated region
  $region18: #{res_up_forward.6} parent=0 // pred_check
    %p1076 = pneg %p15
  $region19: #{res_up_forward.6} parent=0 // pred_check_branch
    %1078 = sbr.rel (%p1076) target = $region21
  $region20: #{res_up_forward.6} parent=0 // pred_region
    %v1079 = vld [vmem:[#allocation2] sm:$0xff]
    %v1080 = vld [vmem:[#allocation2 + $0x8] sm:$0xff]
    %v1081 = vld [vmem:[#allocation2 + $0x10] sm:$0xff]
    %v1082 = vld [vmem:[#allocation2 + $0x18] sm:$0xff]
    %v1083 = vld [vmem:[#allocation2 + $0x20] sm:$0xff]
    %v1084 = vld [vmem:[#allocation2 + $0x28] sm:$0xff]
    %v1085 = vld [vmem:[#allocation2 + $0x30] sm:$0xff]
    %v1086 = vld [vmem:[#allocation2 + $0x38] sm:$0xff]
    %v1087 = vld [vmem:[#allocation2 + $0x40] sm:$0xff]
    %v1088 = vld [vmem:[#allocation2 + $0x48] sm:$0xff]
    %v1089 = vld [vmem:[#allocation2 + $0x50] sm:$0xff]
    %v1090 = vld [vmem:[#allocation2 + $0x58] sm:$0xff]
    %v1091 = vld [vmem:[#allocation2 + $0x60] sm:$0xff]
    %v1092 = vld [vmem:[#allocation2 + $0x68] sm:$0xff]
    %v1093 = vld [vmem:[#allocation2 + $0x70] sm:$0xff]
    %v1094 = vld [vmem:[#allocation2 + $0x78] sm:$0xff]
    %v1095 = vld [vmem:[#allocation2 + $0x80] sm:$0xff]
    %v1096 = vld [vmem:[#allocation2 + $0x88] sm:$0xff]
    %v1097 = vld [vmem:[#allocation2 + $0x90] sm:$0xff]
    %v1098 = vld [vmem:[#allocation2 + $0x98] sm:$0xff]
    %v1099 = vld [vmem:[#allocation2 + $0xa0] sm:$0xff]
    %v1100 = vld [vmem:[#allocation2 + $0xa8] sm:$0xff]
    %v1101 = vld [vmem:[#allocation2 + $0xb0] sm:$0xff]
    %v1102 = vld [vmem:[#allocation2 + $0xb8] sm:$0xff]
    %v1103 = vld [vmem:[#allocation2 + $0xc0] sm:$0xff]
    %v1104 = vld [vmem:[#allocation2 + $0xc8] sm:$0xff]
    %v1105 = vld [vmem:[#allocation2 + $0xd0] sm:$0xff]
    %v1106 = vld [vmem:[#allocation2 + $0xd8] sm:$0xff]
    %v1107 = vld [vmem:[#allocation2 + $0xe0] sm:$0xff]
    %v1108 = vld [vmem:[#allocation2 + $0xe8] sm:$0xff]
    %v1109 = vld [vmem:[#allocation2 + $0xf0] sm:$0xff]
    %v1110 = vld [vmem:[#allocation2 + $0xf8] sm:$0xff]
    %v1111 = vld [vmem:[#allocation2 + $0x100] sm:$0xff]
    %v1112 = vld [vmem:[#allocation2 + $0x108] sm:$0xff]
    %v1113 = vld [vmem:[#allocation2 + $0x110] sm:$0xff]
    %v1114 = vld [vmem:[#allocation2 + $0x118] sm:$0xff]
    %v1115 = vld [vmem:[#allocation2 + $0x120] sm:$0xff]
    %v1116 = vld [vmem:[#allocation2 + $0x128] sm:$0xff]
    %v1117 = vld [vmem:[#allocation2 + $0x130] sm:$0xff]
    %v1118 = vld [vmem:[#allocation2 + $0x138] sm:$0xff]
    %v1119 = vld [vmem:[#allocation2 + $0x140] sm:$0xff]
    %v1120 = vld [vmem:[#allocation2 + $0x148] sm:$0xff]
    %v1121 = vld [vmem:[#allocation2 + $0x150] sm:$0xff]
    %v1122 = vld [vmem:[#allocation2 + $0x158] sm:$0xff]
    %v1123 = vld [vmem:[#allocation2 + $0x160] sm:$0xff]
    %v1124 = vld [vmem:[#allocation2 + $0x168] sm:$0xff]
    %v1125 = vld [vmem:[#allocation2 + $0x170] sm:$0xff]
    %v1126 = vld [vmem:[#allocation2 + $0x178] sm:$0xff]
    %v1127 = vld [vmem:[#allocation2 + $0x180] sm:$0xff]
    %v1128 = vld [vmem:[#allocation2 + $0x188] sm:$0xff]
    %v1129 = vld [vmem:[#allocation2 + $0x190] sm:$0xff]
    %v1130 = vld [vmem:[#allocation2 + $0x198] sm:$0xff]
    %v1131 = vld [vmem:[#allocation2 + $0x1a0] sm:$0xff]
    %v1132 = vld [vmem:[#allocation2 + $0x1a8] sm:$0xff]
    %v1133 = vld [vmem:[#allocation2 + $0x1b0] sm:$0xff]
    %v1134 = vld [vmem:[#allocation2 + $0x1b8] sm:$0xff]
    %v1135 = vld [vmem:[#allocation2 + $0x1c0] sm:$0xff]
    %v1136 = vld [vmem:[#allocation2 + $0x1c8] sm:$0xff]
    %v1137 = vld [vmem:[#allocation2 + $0x1d0] sm:$0xff]
    %v1138 = vld [vmem:[#allocation2 + $0x1d8] sm:$0xff]
    %v1139 = vld [vmem:[#allocation2 + $0x1e0] sm:$0xff]
    %v1140 = vld [vmem:[#allocation2 + $0x1e8] sm:$0xff]
    %v1141 = vld [vmem:[#allocation2 + $0x1f0] sm:$0xff]
    %v1142 = vld [vmem:[#allocation2 + $0x1f8] sm:$0xff]
    %v1143 = vld [vmem:[%s2] sm:$0x1]
    %v1145 = vlaneseq
    %v1146 = vshrl.u32 %v1145, 7
    %v1147 = vsub.s32 0, %v1146
    %v1148 = vrot.slane %v1143, %v1147
    %v1150 = vadd.f32 %v1079, %v1148
    %v1151 = vadd.f32 %v1080, %v1148
    %v1152 = vadd.f32 %v1081, %v1148
    %v1153 = vadd.f32 %v1082, %v1148
    %v1154 = vadd.f32 %v1083, %v1148
    %v1155 = vadd.f32 %v1084, %v1148
    %v1156 = vadd.f32 %v1085, %v1148
    %v1157 = vadd.f32 %v1086, %v1148
    %v1158 = vadd.f32 %v1087, %v1148
    %v1159 = vadd.f32 %v1088, %v1148
    %v1160 = vadd.f32 %v1089, %v1148
    %v1161 = vadd.f32 %v1090, %v1148
    %v1162 = vadd.f32 %v1091, %v1148
    %v1163 = vadd.f32 %v1092, %v1148
    %v1164 = vadd.f32 %v1093, %v1148
    %v1165 = vadd.f32 %v1094, %v1148
    %v1166 = vadd.f32 %v1095, %v1148
    %v1167 = vadd.f32 %v1096, %v1148
    %v1168 = vadd.f32 %v1097, %v1148
    %v1169 = vadd.f32 %v1098, %v1148
    %v1170 = vadd.f32 %v1099, %v1148
    %v1171 = vadd.f32 %v1100, %v1148
    %v1172 = vadd.f32 %v1101, %v1148
    %v1173 = vadd.f32 %v1102, %v1148
    %v1174 = vadd.f32 %v1103, %v1148
    %v1175 = vadd.f32 %v1104, %v1148
    %v1176 = vadd.f32 %v1105, %v1148
    %v1177 = vadd.f32 %v1106, %v1148
    %v1178 = vadd.f32 %v1107, %v1148
    %v1179 = vadd.f32 %v1108, %v1148
    %v1180 = vadd.f32 %v1109, %v1148
    %v1181 = vadd.f32 %v1110, %v1148
    %v1182 = vadd.f32 %v1111, %v1148
    %v1183 = vadd.f32 %v1112, %v1148
    %v1184 = vadd.f32 %v1113, %v1148
    %v1185 = vadd.f32 %v1114, %v1148
    %v1186 = vadd.f32 %v1115, %v1148
    %v1187 = vadd.f32 %v1116, %v1148
    %v1188 = vadd.f32 %v1117, %v1148
    %v1189 = vadd.f32 %v1118, %v1148
    %v1190 = vadd.f32 %v1119, %v1148
    %v1191 = vadd.f32 %v1120, %v1148
    %v1192 = vadd.f32 %v1121, %v1148
    %v1193 = vadd.f32 %v1122, %v1148
    %v1194 = vadd.f32 %v1123, %v1148
    %v1195 = vadd.f32 %v1124, %v1148
    %v1196 = vadd.f32 %v1125, %v1148
    %v1197 = vadd.f32 %v1126, %v1148
    %v1198 = vadd.f32 %v1127, %v1148
    %v1199 = vadd.f32 %v1128, %v1148
    %v1200 = vadd.f32 %v1129, %v1148
    %v1201 = vadd.f32 %v1130, %v1148
    %v1202 = vadd.f32 %v1131, %v1148
    %v1203 = vadd.f32 %v1132, %v1148
    %v1204 = vadd.f32 %v1133, %v1148
    %v1205 = vadd.f32 %v1134, %v1148
    %v1206 = vadd.f32 %v1135, %v1148
    %v1207 = vadd.f32 %v1136, %v1148
    %v1208 = vadd.f32 %v1137, %v1148
    %v1209 = vadd.f32 %v1138, %v1148
    %v1210 = vadd.f32 %v1139, %v1148
    %v1211 = vadd.f32 %v1140, %v1148
    %v1212 = vadd.f32 %v1141, %v1148
    %v1213 = vadd.f32 %v1142, %v1148
    %v1214 = vmul.f32 %v1150, 0.999995
    %v1215 = vmul.f32 %v1151, 0.999995
    %v1216 = vmul.f32 %v1152, 0.999995
    %v1217 = vmul.f32 %v1153, 0.999995
    %v1218 = vmul.f32 %v1154, 0.999995
    %v1219 = vmul.f32 %v1155, 0.999995
    %v1220 = vmul.f32 %v1156, 0.999995
    %v1221 = vmul.f32 %v1157, 0.999995
    %v1222 = vmul.f32 %v1158, 0.999995
    %v1223 = vmul.f32 %v1159, 0.999995
    %v1224 = vmul.f32 %v1160, 0.999995
    %v1225 = vmul.f32 %v1161, 0.999995
    %v1226 = vmul.f32 %v1162, 0.999995
    %v1227 = vmul.f32 %v1163, 0.999995
    %v1228 = vmul.f32 %v1164, 0.999995
    %v1229 = vmul.f32 %v1165, 0.999995
    %v1230 = vmul.f32 %v1166, 0.999995
    %v1231 = vmul.f32 %v1167, 0.999995
    %v1232 = vmul.f32 %v1168, 0.999995
    %v1233 = vmul.f32 %v1169, 0.999995
    %v1234 = vmul.f32 %v1170, 0.999995
    %v1235 = vmul.f32 %v1171, 0.999995
    %v1236 = vmul.f32 %v1172, 0.999995
    %v1237 = vmul.f32 %v1173, 0.999995
    %v1238 = vmul.f32 %v1174, 0.999995
    %v1239 = vmul.f32 %v1175, 0.999995
    %v1240 = vmul.f32 %v1176, 0.999995
    %v1241 = vmul.f32 %v1177, 0.999995
    %v1242 = vmul.f32 %v1178, 0.999995
    %v1243 = vmul.f32 %v1179, 0.999995
    %v1244 = vmul.f32 %v1180, 0.999995
    %v1245 = vmul.f32 %v1181, 0.999995
    %v1246 = vmul.f32 %v1182, 0.999995
    %v1247 = vmul.f32 %v1183, 0.999995
    %v1248 = vmul.f32 %v1184, 0.999995
    %v1249 = vmul.f32 %v1185, 0.999995
    %v1250 = vmul.f32 %v1186, 0.999995
    %v1251 = vmul.f32 %v1187, 0.999995
    %v1252 = vmul.f32 %v1188, 0.999995
    %v1253 = vmul.f32 %v1189, 0.999995
    %v1254 = vmul.f32 %v1190, 0.999995
    %v1255 = vmul.f32 %v1191, 0.999995
    %v1256 = vmul.f32 %v1192, 0.999995
    %v1257 = vmul.f32 %v1193, 0.999995
    %v1258 = vmul.f32 %v1194, 0.999995
    %v1259 = vmul.f32 %v1195, 0.999995
    %v1260 = vmul.f32 %v1196, 0.999995
    %v1261 = vmul.f32 %v1197, 0.999995
    %v1262 = vmul.f32 %v1198, 0.999995
    %v1263 = vmul.f32 %v1199, 0.999995
    %v1264 = vmul.f32 %v1200, 0.999995
    %v1265 = vmul.f32 %v1201, 0.999995
    %v1266 = vmul.f32 %v1202, 0.999995
    %v1267 = vmul.f32 %v1203, 0.999995
    %v1268 = vmul.f32 %v1204, 0.999995
    %v1269 = vmul.f32 %v1205, 0.999995
    %v1270 = vmul.f32 %v1206, 0.999995
    %v1271 = vmul.f32 %v1207, 0.999995
    %v1272 = vmul.f32 %v1208, 0.999995
    %v1273 = vmul.f32 %v1209, 0.999995
    %v1274 = vmul.f32 %v1210, 0.999995
    %v1275 = vmul.f32 %v1211, 0.999995
    %v1276 = vmul.f32 %v1212, 0.999995
    %v1277 = vmul.f32 %v1213, 0.999995
    %v1278 = vmax.f32 %v1214, 0.0
    %v1279 = vmax.f32 %v1215, 0.0
    %v1280 = vmax.f32 %v1216, 0.0
    %v1281 = vmax.f32 %v1217, 0.0
    %v1282 = vmax.f32 %v1218, 0.0
    %v1283 = vmax.f32 %v1219, 0.0
    %v1284 = vmax.f32 %v1220, 0.0
    %v1285 = vmax.f32 %v1221, 0.0
    %v1286 = vmax.f32 %v1222, 0.0
    %v1287 = vmax.f32 %v1223, 0.0
    %v1288 = vmax.f32 %v1224, 0.0
    %v1289 = vmax.f32 %v1225, 0.0
    %v1290 = vmax.f32 %v1226, 0.0
    %v1291 = vmax.f32 %v1227, 0.0
    %v1292 = vmax.f32 %v1228, 0.0
    %v1293 = vmax.f32 %v1229, 0.0
    %v1294 = vmax.f32 %v1230, 0.0
    %v1295 = vmax.f32 %v1231, 0.0
    %v1296 = vmax.f32 %v1232, 0.0
    %v1297 = vmax.f32 %v1233, 0.0
    %v1298 = vmax.f32 %v1234, 0.0
    %v1299 = vmax.f32 %v1235, 0.0
    %v1300 = vmax.f32 %v1236, 0.0
    %v1301 = vmax.f32 %v1237, 0.0
    %v1302 = vmax.f32 %v1238, 0.0
    %v1303 = vmax.f32 %v1239, 0.0
    %v1304 = vmax.f32 %v1240, 0.0
    %v1305 = vmax.f32 %v1241, 0.0
    %v1306 = vmax.f32 %v1242, 0.0
    %v1307 = vmax.f32 %v1243, 0.0
    %v1308 = vmax.f32 %v1244, 0.0
    %v1309 = vmax.f32 %v1245, 0.0
    %v1310 = vmax.f32 %v1246, 0.0
    %v1311 = vmax.f32 %v1247, 0.0
    %v1312 = vmax.f32 %v1248, 0.0
    %v1313 = vmax.f32 %v1249, 0.0
    %v1314 = vmax.f32 %v1250, 0.0
    %v1315 = vmax.f32 %v1251, 0.0
    %v1316 = vmax.f32 %v1252, 0.0
    %v1317 = vmax.f32 %v1253, 0.0
    %v1318 = vmax.f32 %v1254, 0.0
    %v1319 = vmax.f32 %v1255, 0.0
    %v1320 = vmax.f32 %v1256, 0.0
    %v1321 = vmax.f32 %v1257, 0.0
    %v1322 = vmax.f32 %v1258, 0.0
    %v1323 = vmax.f32 %v1259, 0.0
    %v1324 = vmax.f32 %v1260, 0.0
    %v1325 = vmax.f32 %v1261, 0.0
    %v1326 = vmax.f32 %v1262, 0.0
    %v1327 = vmax.f32 %v1263, 0.0
    %v1328 = vmax.f32 %v1264, 0.0
    %v1329 = vmax.f32 %v1265, 0.0
    %v1330 = vmax.f32 %v1266, 0.0
    %v1331 = vmax.f32 %v1267, 0.0
    %v1332 = vmax.f32 %v1268, 0.0
    %v1333 = vmax.f32 %v1269, 0.0
    %v1334 = vmax.f32 %v1270, 0.0
    %v1335 = vmax.f32 %v1271, 0.0
    %v1336 = vmax.f32 %v1272, 0.0
    %v1337 = vmax.f32 %v1273, 0.0
    %v1338 = vmax.f32 %v1274, 0.0
    %v1339 = vmax.f32 %v1275, 0.0
    %v1340 = vmax.f32 %v1276, 0.0
    %v1341 = vmax.f32 %v1277, 0.0
    %v1342 = vpack.c.bf16 %v1279, %v1278
    %v1343 = vpack.c.bf16 %v1281, %v1280
    %v1344 = vpack.c.bf16 %v1283, %v1282
    %v1345 = vpack.c.bf16 %v1285, %v1284
    %v1346 = vpack.c.bf16 %v1287, %v1286
    %v1347 = vpack.c.bf16 %v1289, %v1288
    %v1348 = vpack.c.bf16 %v1291, %v1290
    %v1349 = vpack.c.bf16 %v1293, %v1292
    %v1350 = vpack.c.bf16 %v1295, %v1294
    %v1351 = vpack.c.bf16 %v1297, %v1296
    %v1352 = vpack.c.bf16 %v1299, %v1298
    %v1353 = vpack.c.bf16 %v1301, %v1300
    %v1354 = vpack.c.bf16 %v1303, %v1302
    %v1355 = vpack.c.bf16 %v1305, %v1304
    %v1356 = vpack.c.bf16 %v1307, %v1306
    %v1357 = vpack.c.bf16 %v1309, %v1308
    %v1358 = vpack.c.bf16 %v1311, %v1310
    %v1359 = vpack.c.bf16 %v1313, %v1312
    %v1360 = vpack.c.bf16 %v1315, %v1314
    %v1361 = vpack.c.bf16 %v1317, %v1316
    %v1362 = vpack.c.bf16 %v1319, %v1318
    %v1363 = vpack.c.bf16 %v1321, %v1320
    %v1364 = vpack.c.bf16 %v1323, %v1322
    %v1365 = vpack.c.bf16 %v1325, %v1324
    %v1366 = vpack.c.bf16 %v1327, %v1326
    %v1367 = vpack.c.bf16 %v1329, %v1328
    %v1368 = vpack.c.bf16 %v1331, %v1330
    %v1369 = vpack.c.bf16 %v1333, %v1332
    %v1370 = vpack.c.bf16 %v1335, %v1334
    %v1371 = vpack.c.bf16 %v1337, %v1336
    %v1372 = vpack.c.bf16 %v1339, %v1338
    %v1373 = vpack.c.bf16 %v1341, %v1340
    %v1406 = vunpack.c.l.b16 %v1342
    %v1407 = vunpack.c.h.b16 %v1342
    %v1408 = vunpack.c.l.b16 %v1343
    %v1409 = vunpack.c.h.b16 %v1343
    %v1410 = vunpack.c.l.b16 %v1344
    %v1411 = vunpack.c.h.b16 %v1344
    %v1412 = vunpack.c.l.b16 %v1345
    %v1413 = vunpack.c.h.b16 %v1345
    %v1414 = vunpack.c.l.b16 %v1346
    %v1415 = vunpack.c.h.b16 %v1346
    %v1416 = vunpack.c.l.b16 %v1347
    %v1417 = vunpack.c.h.b16 %v1347
    %v1418 = vunpack.c.l.b16 %v1348
    %v1419 = vunpack.c.h.b16 %v1348
    %v1420 = vunpack.c.l.b16 %v1349
    %v1421 = vunpack.c.h.b16 %v1349
    %v1422 = vunpack.c.l.b16 %v1350
    %v1423 = vunpack.c.h.b16 %v1350
    %v1424 = vunpack.c.l.b16 %v1351
    %v1425 = vunpack.c.h.b16 %v1351
    %v1426 = vunpack.c.l.b16 %v1352
    %v1427 = vunpack.c.h.b16 %v1352
    %v1428 = vunpack.c.l.b16 %v1353
    %v1429 = vunpack.c.h.b16 %v1353
    %v1430 = vunpack.c.l.b16 %v1354
    %v1431 = vunpack.c.h.b16 %v1354
    %v1432 = vunpack.c.l.b16 %v1355
    %v1433 = vunpack.c.h.b16 %v1355
    %v1434 = vunpack.c.l.b16 %v1356
    %v1435 = vunpack.c.h.b16 %v1356
    %v1436 = vunpack.c.l.b16 %v1357
    %v1437 = vunpack.c.h.b16 %v1357
    %v1438 = vunpack.c.l.b16 %v1358
    %v1439 = vunpack.c.h.b16 %v1358
    %v1440 = vunpack.c.l.b16 %v1359
    %v1441 = vunpack.c.h.b16 %v1359
    %v1442 = vunpack.c.l.b16 %v1360
    %v1443 = vunpack.c.h.b16 %v1360
    %v1444 = vunpack.c.l.b16 %v1361
    %v1445 = vunpack.c.h.b16 %v1361
    %v1446 = vunpack.c.l.b16 %v1362
    %v1447 = vunpack.c.h.b16 %v1362
    %v1448 = vunpack.c.l.b16 %v1363
    %v1449 = vunpack.c.h.b16 %v1363
    %v1450 = vunpack.c.l.b16 %v1364
    %v1451 = vunpack.c.h.b16 %v1364
    %v1452 = vunpack.c.l.b16 %v1365
    %v1453 = vunpack.c.h.b16 %v1365
    %v1454 = vunpack.c.l.b16 %v1366
    %v1455 = vunpack.c.h.b16 %v1366
    %v1456 = vunpack.c.l.b16 %v1367
    %v1457 = vunpack.c.h.b16 %v1367
    %v1458 = vunpack.c.l.b16 %v1368
    %v1459 = vunpack.c.h.b16 %v1368
    %v1460 = vunpack.c.l.b16 %v1369
    %v1461 = vunpack.c.h.b16 %v1369
    %v1462 = vunpack.c.l.b16 %v1370
    %v1463 = vunpack.c.h.b16 %v1370
    %v1464 = vunpack.c.l.b16 %v1371
    %v1465 = vunpack.c.h.b16 %v1371
    %v1466 = vunpack.c.l.b16 %v1372
    %v1467 = vunpack.c.h.b16 %v1372
    %v1468 = vunpack.c.l.b16 %v1373
    %v1469 = vunpack.c.h.b16 %v1373
    %v1470 = vpack.c.b16 %v1406, %v1406
    %v1471 = vpack.c.b16 %v1407, %v1407
    %v1472 = vpack.c.b16 %v1408, %v1408
    %v1473 = vpack.c.b16 %v1409, %v1409
    %v1474 = vpack.c.b16 %v1410, %v1410
    %v1475 = vpack.c.b16 %v1411, %v1411
    %v1476 = vpack.c.b16 %v1412, %v1412
    %v1477 = vpack.c.b16 %v1413, %v1413
    %v1478 = vpack.c.b16 %v1414, %v1414
    %v1479 = vpack.c.b16 %v1415, %v1415
    %v1480 = vpack.c.b16 %v1416, %v1416
    %v1481 = vpack.c.b16 %v1417, %v1417
    %v1482 = vpack.c.b16 %v1418, %v1418
    %v1483 = vpack.c.b16 %v1419, %v1419
    %v1484 = vpack.c.b16 %v1420, %v1420
    %v1485 = vpack.c.b16 %v1421, %v1421
    %v1486 = vpack.c.b16 %v1422, %v1422
    %v1487 = vpack.c.b16 %v1423, %v1423
    %v1488 = vpack.c.b16 %v1424, %v1424
    %v1489 = vpack.c.b16 %v1425, %v1425
    %v1490 = vpack.c.b16 %v1426, %v1426
    %v1491 = vpack.c.b16 %v1427, %v1427
    %v1492 = vpack.c.b16 %v1428, %v1428
    %v1493 = vpack.c.b16 %v1429, %v1429
    %v1494 = vpack.c.b16 %v1430, %v1430
    %v1495 = vpack.c.b16 %v1431, %v1431
    %v1496 = vpack.c.b16 %v1432, %v1432
    %v1497 = vpack.c.b16 %v1433, %v1433
    %v1498 = vpack.c.b16 %v1434, %v1434
    %v1499 = vpack.c.b16 %v1435, %v1435
    %v1500 = vpack.c.b16 %v1436, %v1436
    %v1501 = vpack.c.b16 %v1437, %v1437
    %v1502 = vpack.c.b16 %v1438, %v1438
    %v1503 = vpack.c.b16 %v1439, %v1439
    %v1504 = vpack.c.b16 %v1440, %v1440
    %v1505 = vpack.c.b16 %v1441, %v1441
    %v1506 = vpack.c.b16 %v1442, %v1442
    %v1507 = vpack.c.b16 %v1443, %v1443
    %v1508 = vpack.c.b16 %v1444, %v1444
    %v1509 = vpack.c.b16 %v1445, %v1445
    %v1510 = vpack.c.b16 %v1446, %v1446
    %v1511 = vpack.c.b16 %v1447, %v1447
    %v1512 = vpack.c.b16 %v1448, %v1448
    %v1513 = vpack.c.b16 %v1449, %v1449
    %v1514 = vpack.c.b16 %v1450, %v1450
    %v1515 = vpack.c.b16 %v1451, %v1451
    %v1516 = vpack.c.b16 %v1452, %v1452
    %v1517 = vpack.c.b16 %v1453, %v1453
    %v1518 = vpack.c.b16 %v1454, %v1454
    %v1519 = vpack.c.b16 %v1455, %v1455
    %v1520 = vpack.c.b16 %v1456, %v1456
    %v1521 = vpack.c.b16 %v1457, %v1457
    %v1522 = vpack.c.b16 %v1458, %v1458
    %v1523 = vpack.c.b16 %v1459, %v1459
    %v1524 = vpack.c.b16 %v1460, %v1460
    %v1525 = vpack.c.b16 %v1461, %v1461
    %v1526 = vpack.c.b16 %v1462, %v1462
    %v1527 = vpack.c.b16 %v1463, %v1463
    %v1528 = vpack.c.b16 %v1464, %v1464
    %v1529 = vpack.c.b16 %v1465, %v1465
    %v1530 = vpack.c.b16 %v1466, %v1466
    %v1531 = vpack.c.b16 %v1467, %v1467
    %v1532 = vpack.c.b16 %v1468, %v1468
    %v1533 = vpack.c.b16 %v1469, %v1469
    %1598 = vst [vmem:[%s3] sm:$0xf] %v1470
    %1599 = vst [vmem:[%s3 + $0x4] sm:$0xf] %v1471
    %1600 = vst [vmem:[%s3 + $0x8] sm:$0xf] %v1472
    %1601 = vst [vmem:[%s3 + $0xc] sm:$0xf] %v1473
    %1602 = vst [vmem:[%s3 + $0x10] sm:$0xf] %v1474
    %1603 = vst [vmem:[%s3 + $0x14] sm:$0xf] %v1475
    %1604 = vst [vmem:[%s3 + $0x18] sm:$0xf] %v1476
    %1605 = vst [vmem:[%s3 + $0x1c] sm:$0xf] %v1477
    %1606 = vst [vmem:[%s3 + $0x20] sm:$0xf] %v1478
    %1607 = vst [vmem:[%s3 + $0x24] sm:$0xf] %v1479
    %1608 = vst [vmem:[%s3 + $0x28] sm:$0xf] %v1480
    %1609 = vst [vmem:[%s3 + $0x2c] sm:$0xf] %v1481
    %1610 = vst [vmem:[%s3 + $0x30] sm:$0xf] %v1482
    %1611 = vst [vmem:[%s3 + $0x34] sm:$0xf] %v1483
    %1612 = vst [vmem:[%s3 + $0x38] sm:$0xf] %v1484
    %1613 = vst [vmem:[%s3 + $0x3c] sm:$0xf] %v1485
    %1614 = vst [vmem:[%s3 + $0x40] sm:$0xf] %v1486
    %1615 = vst [vmem:[%s3 + $0x44] sm:$0xf] %v1487
    %1616 = vst [vmem:[%s3 + $0x48] sm:$0xf] %v1488
    %1617 = vst [vmem:[%s3 + $0x4c] sm:$0xf] %v1489
    %1618 = vst [vmem:[%s3 + $0x50] sm:$0xf] %v1490
    %1619 = vst [vmem:[%s3 + $0x54] sm:$0xf] %v1491
    %1620 = vst [vmem:[%s3 + $0x58] sm:$0xf] %v1492
    %1621 = vst [vmem:[%s3 + $0x5c] sm:$0xf] %v1493
    %1622 = vst [vmem:[%s3 + $0x60] sm:$0xf] %v1494
    %1623 = vst [vmem:[%s3 + $0x64] sm:$0xf] %v1495
    %1624 = vst [vmem:[%s3 + $0x68] sm:$0xf] %v1496
    %1625 = vst [vmem:[%s3 + $0x6c] sm:$0xf] %v1497
    %1626 = vst [vmem:[%s3 + $0x70] sm:$0xf] %v1498
    %1627 = vst [vmem:[%s3 + $0x74] sm:$0xf] %v1499
    %1628 = vst [vmem:[%s3 + $0x78] sm:$0xf] %v1500
    %1629 = vst [vmem:[%s3 + $0x7c] sm:$0xf] %v1501
    %1630 = vst [vmem:[%s3 + $0x80] sm:$0xf] %v1502
    %1631 = vst [vmem:[%s3 + $0x84] sm:$0xf] %v1503
    %1632 = vst [vmem:[%s3 + $0x88] sm:$0xf] %v1504
    %1633 = vst [vmem:[%s3 + $0x8c] sm:$0xf] %v1505
    %1634 = vst [vmem:[%s3 + $0x90] sm:$0xf] %v1506
    %1635 = vst [vmem:[%s3 + $0x94] sm:$0xf] %v1507
    %1636 = vst [vmem:[%s3 + $0x98] sm:$0xf] %v1508
    %1637 = vst [vmem:[%s3 + $0x9c] sm:$0xf] %v1509
    %1638 = vst [vmem:[%s3 + $0xa0] sm:$0xf] %v1510
    %1639 = vst [vmem:[%s3 + $0xa4] sm:$0xf] %v1511
    %1640 = vst [vmem:[%s3 + $0xa8] sm:$0xf] %v1512
    %1641 = vst [vmem:[%s3 + $0xac] sm:$0xf] %v1513
    %1642 = vst [vmem:[%s3 + $0xb0] sm:$0xf] %v1514
    %1643 = vst [vmem:[%s3 + $0xb4] sm:$0xf] %v1515
    %1644 = vst [vmem:[%s3 + $0xb8] sm:$0xf] %v1516
    %1645 = vst [vmem:[%s3 + $0xbc] sm:$0xf] %v1517
    %1646 = vst [vmem:[%s3 + $0xc0] sm:$0xf] %v1518
    %1647 = vst [vmem:[%s3 + $0xc4] sm:$0xf] %v1519
    %1648 = vst [vmem:[%s3 + $0xc8] sm:$0xf] %v1520
    %1649 = vst [vmem:[%s3 + $0xcc] sm:$0xf] %v1521
    %1650 = vst [vmem:[%s3 + $0xd0] sm:$0xf] %v1522
    %1651 = vst [vmem:[%s3 + $0xd4] sm:$0xf] %v1523
    %1652 = vst [vmem:[%s3 + $0xd8] sm:$0xf] %v1524
    %1653 = vst [vmem:[%s3 + $0xdc] sm:$0xf] %v1525
    %1654 = vst [vmem:[%s3 + $0xe0] sm:$0xf] %v1526
    %1655 = vst [vmem:[%s3 + $0xe4] sm:$0xf] %v1527
    %1656 = vst [vmem:[%s3 + $0xe8] sm:$0xf] %v1528
    %1657 = vst [vmem:[%s3 + $0xec] sm:$0xf] %v1529
    %1658 = vst [vmem:[%s3 + $0xf0] sm:$0xf] %v1530
    %1659 = vst [vmem:[%s3 + $0xf4] sm:$0xf] %v1531
    %1660 = vst [vmem:[%s3 + $0xf8] sm:$0xf] %v1532
    %1661 = vst [vmem:[%s3 + $0xfc] sm:$0xf] %v1533
  $region21: #{res_up_forward.6} parent=0 // pred_fallthru
    _
  // Predicated region
  $region22: #{res_up_forward.6} parent=0 // pred_check
    _
  $region23: #{res_up_forward.6} parent=0 // pred_check_branch
    %1663 = sbr.rel (0) target = $region25
  $region24: #{res_up_forward.6} parent=0 // pred_region
    _
  $region25: #{res_up_forward.6} parent=0 // pred_fallthru
    _
  // Predicated region
  $region26: #{res_up_forward.6} parent=0 // pred_check
    _
  $region27: #{res_up_forward.6} parent=0 // pred_check_branch
    %1665 = sbr.rel (0) target = $region29
  $region28: #{res_up_forward.6} parent=0 // pred_region
    _
  $region29: #{res_up_forward.6} parent=0 // pred_fallthru
    _

// kernel: res_up_forward.5
$region0: #{res_up_forward.5}
  #allocation0 [shape = 'u32[]', space=smem, size = 0x4, offset = 0x4, fixed_abs, tag = 'smem constant byte address 0x4 - core index']
  #allocation1 [shape = 'u32[144,128]{1,0:T(1,128)}', space=vmem, size = 0x12000, scoped, tag = 'internal scratch']
  #allocation2 [shape = 'f32[512,128]{1,0:T(8,128)}', space=vmem, size = 0x40000, scoped, tag = 'scratch operand']
  %s0 = inlined_call_operand.vmem [shape: bf16[512,128], index: 0, kind: input, shape index: {}]
  %s1 = inlined_call_operand.vmem [shape: bf16[128,128], index: 1, kind: input, shape index: {}]
  %s2 = inlined_call_operand.vmem [shape: f32[1,128], index: 2, kind: input, shape index: {}]
  %s3 = inlined_call_operand.vmem [shape: f32[512,128], index: 3, kind: output, shape index: {}]
  %s4 = sld [smem:[#allocation0]]
  $region30: #{res_up_forward.5} parent=0
    _
  %s6 = ssub.s32 1, %s4
  %s7 = scalar_select 0, %s6, %s4
  // Predicated region
  $region2: #{res_up_forward.5} parent=0 // pred_check
    _
  $region3: #{res_up_forward.5} parent=0 // pred_check_branch
    %9 = sbr.rel (0) target = $region5
  $region4: #{res_up_forward.5} parent=0 // pred_region
    _
  $region5: #{res_up_forward.5} parent=0 // pred_fallthru
    _
  // Predicated region
  $region6: #{res_up_forward.5} parent=0 // pred_check
    _
  $region7: #{res_up_forward.5} parent=0 // pred_check_branch
    %11 = sbr.rel (0) target = $region9
  $region8: #{res_up_forward.5} parent=0 // pred_region
    _
  $region9: #{res_up_forward.5} parent=0 // pred_fallthru
    _
  // Predicated region
  $region10: #{res_up_forward.5} parent=0 // pred_check
    _
  $region11: #{res_up_forward.5} parent=0 // pred_check_branch
    %13 = sbr.rel (0) target = $region13
  $region12: #{res_up_forward.5} parent=0 // pred_region
    _
  $region13: #{res_up_forward.5} parent=0 // pred_fallthru
    _
  %p15 = scmp.eq.s32.totalorder 0, 0
  // Predicated region
  $region14: #{res_up_forward.5} parent=0 // pred_check
    %p16 = pneg %p15
  $region15: #{res_up_forward.5} parent=0 // pred_check_branch
    %18 = sbr.rel (%p16) target = $region17
  $region16: #{res_up_forward.5} parent=0 // pred_region
    %19 = vst [vmem:[#allocation2] sm:$0xff] 0.0
    %20 = vst [vmem:[#allocation2 + $0x8] sm:$0xff] 0.0
    %21 = vst [vmem:[#allocation2 + $0x10] sm:$0xff] 0.0
    %22 = vst [vmem:[#allocation2 + $0x18] sm:$0xff] 0.0
    %23 = vst [vmem:[#allocation2 + $0x20] sm:$0xff] 0.0
    %24 = vst [vmem:[#allocation2 + $0x28] sm:$0xff] 0.0
    %25 = vst [vmem:[#allocation2 + $0x30] sm:$0xff] 0.0
    %26 = vst [vmem:[#allocation2 + $0x38] sm:$0xff] 0.0
    %27 = vst [vmem:[#allocation2 + $0x40] sm:$0xff] 0.0
    %28 = vst [vmem:[#allocation2 + $0x48] sm:$0xff] 0.0
    %29 = vst [vmem:[#allocation2 + $0x50] sm:$0xff] 0.0
    %30 = vst [vmem:[#allocation2 + $0x58] sm:$0xff] 0.0
    %31 = vst [vmem:[#allocation2 + $0x60] sm:$0xff] 0.0
    %32 = vst [vmem:[#allocation2 + $0x68] sm:$0xff] 0.0
    %33 = vst [vmem:[#allocation2 + $0x70] sm:$0xff] 0.0
    %34 = vst [vmem:[#allocation2 + $0x78] sm:$0xff] 0.0
    %35 = vst [vmem:[#allocation2 + $0x80] sm:$0xff] 0.0
    %36 = vst [vmem:[#allocation2 + $0x88] sm:$0xff] 0.0
    %37 = vst [vmem:[#allocation2 + $0x90] sm:$0xff] 0.0
    %38 = vst [vmem:[#allocation2 + $0x98] sm:$0xff] 0.0
    %39 = vst [vmem:[#allocation2 + $0xa0] sm:$0xff] 0.0
    %40 = vst [vmem:[#allocation2 + $0xa8] sm:$0xff] 0.0
    %41 = vst [vmem:[#allocation2 + $0xb0] sm:$0xff] 0.0
    %42 = vst [vmem:[#allocation2 + $0xb8] sm:$0xff] 0.0
    %43 = vst [vmem:[#allocation2 + $0xc0] sm:$0xff] 0.0
    %44 = vst [vmem:[#allocation2 + $0xc8] sm:$0xff] 0.0
    %45 = vst [vmem:[#allocation2 + $0xd0] sm:$0xff] 0.0
    %46 = vst [vmem:[#allocation2 + $0xd8] sm:$0xff] 0.0
    %47 = vst [vmem:[#allocation2 + $0xe0] sm:$0xff] 0.0
    %48 = vst [vmem:[#allocation2 + $0xe8] sm:$0xff] 0.0
    %49 = vst [vmem:[#allocation2 + $0xf0] sm:$0xff] 0.0
    %50 = vst [vmem:[#allocation2 + $0xf8] sm:$0xff] 0.0
    %51 = vst [vmem:[#allocation2 + $0x100] sm:$0xff] 0.0
    %52 = vst [vmem:[#allocation2 + $0x108] sm:$0xff] 0.0
    %53 = vst [vmem:[#allocation2 + $0x110] sm:$0xff] 0.0
    %54 = vst [vmem:[#allocation2 + $0x118] sm:$0xff] 0.0
    %55 = vst [vmem:[#allocation2 + $0x120] sm:$0xff] 0.0
    %56 = vst [vmem:[#allocation2 + $0x128] sm:$0xff] 0.0
    %57 = vst [vmem:[#allocation2 + $0x130] sm:$0xff] 0.0
    %58 = vst [vmem:[#allocation2 + $0x138] sm:$0xff] 0.0
    %59 = vst [vmem:[#allocation2 + $0x140] sm:$0xff] 0.0
    %60 = vst [vmem:[#allocation2 + $0x148] sm:$0xff] 0.0
    %61 = vst [vmem:[#allocation2 + $0x150] sm:$0xff] 0.0
    %62 = vst [vmem:[#allocation2 + $0x158] sm:$0xff] 0.0
    %63 = vst [vmem:[#allocation2 + $0x160] sm:$0xff] 0.0
    %64 = vst [vmem:[#allocation2 + $0x168] sm:$0xff] 0.0
    %65 = vst [vmem:[#allocation2 + $0x170] sm:$0xff] 0.0
    %66 = vst [vmem:[#allocation2 + $0x178] sm:$0xff] 0.0
    %67 = vst [vmem:[#allocation2 + $0x180] sm:$0xff] 0.0
    %68 = vst [vmem:[#allocation2 + $0x188] sm:$0xff] 0.0
    %69 = vst [vmem:[#allocation2 + $0x190] sm:$0xff] 0.0
    %70 = vst [vmem:[#allocation2 + $0x198] sm:$0xff] 0.0
    %71 = vst [vmem:[#allocation2 + $0x1a0] sm:$0xff] 0.0
    %72 = vst [vmem:[#allocation2 + $0x1a8] sm:$0xff] 0.0
    %73 = vst [vmem:[#allocation2 + $0x1b0] sm:$0xff] 0.0
    %74 = vst [vmem:[#allocation2 + $0x1b8] sm:$0xff] 0.0
    %75 = vst [vmem:[#allocation2 + $0x1c0] sm:$0xff] 0.0
    %76 = vst [vmem:[#allocation2 + $0x1c8] sm:$0xff] 0.0
    %77 = vst [vmem:[#allocation2 + $0x1d0] sm:$0xff] 0.0
    %78 = vst [vmem:[#allocation2 + $0x1d8] sm:$0xff] 0.0
    %79 = vst [vmem:[#allocation2 + $0x1e0] sm:$0xff] 0.0
    %80 = vst [vmem:[#allocation2 + $0x1e8] sm:$0xff] 0.0
    %81 = vst [vmem:[#allocation2 + $0x1f0] sm:$0xff] 0.0
    %82 = vst [vmem:[#allocation2 + $0x1f8] sm:$0xff] 0.0
  $region17: #{res_up_forward.5} parent=0 // pred_fallthru
    _
  %v83 = vld [vmem:[#allocation2] sm:$0xff]
  %v84 = vld [vmem:[#allocation2 + $0x8] sm:$0xff]
  %v85 = vld [vmem:[#allocation2 + $0x10] sm:$0xff]
  %v86 = vld [vmem:[#allocation2 + $0x18] sm:$0xff]
  %v87 = vld [vmem:[#allocation2 + $0x20] sm:$0xff]
  %v88 = vld [vmem:[#allocation2 + $0x28] sm:$0xff]
  %v89 = vld [vmem:[#allocation2 + $0x30] sm:$0xff]
  %v90 = vld [vmem:[#allocation2 + $0x38] sm:$0xff]
  %v91 = vld [vmem:[#allocation2 + $0x40] sm:$0xff]
  %v92 = vld [vmem:[#allocation2 + $0x48] sm:$0xff]
  %v93 = vld [vmem:[#allocation2 + $0x50] sm:$0xff]
  %v94 = vld [vmem:[#allocation2 + $0x58] sm:$0xff]
  %v95 = vld [vmem:[#allocation2 + $0x60] sm:$0xff]
  %v96 = vld [vmem:[#allocation2 + $0x68] sm:$0xff]
  %v97 = vld [vmem:[#allocation2 + $0x70] sm:$0xff]
  %v98 = vld [vmem:[#allocation2 + $0x78] sm:$0xff]
  %v99 = vld [vmem:[#allocation2 + $0x80] sm:$0xff]
  %v100 = vld [vmem:[#allocation2 + $0x88] sm:$0xff]
  %v101 = vld [vmem:[#allocation2 + $0x90] sm:$0xff]
  %v102 = vld [vmem:[#allocation2 + $0x98] sm:$0xff]
  %v103 = vld [vmem:[#allocation2 + $0xa0] sm:$0xff]
  %v104 = vld [vmem:[#allocation2 + $0xa8] sm:$0xff]
  %v105 = vld [vmem:[#allocation2 + $0xb0] sm:$0xff]
  %v106 = vld [vmem:[#allocation2 + $0xb8] sm:$0xff]
  %v107 = vld [vmem:[#allocation2 + $0xc0] sm:$0xff]
  %v108 = vld [vmem:[#allocation2 + $0xc8] sm:$0xff]
  %v109 = vld [vmem:[#allocation2 + $0xd0] sm:$0xff]
  %v110 = vld [vmem:[#allocation2 + $0xd8] sm:$0xff]
  %v111 = vld [vmem:[#allocation2 + $0xe0] sm:$0xff]
  %v112 = vld [vmem:[#allocation2 + $0xe8] sm:$0xff]
  %v113 = vld [vmem:[#allocation2 + $0xf0] sm:$0xff]
  %v114 = vld [vmem:[#allocation2 + $0xf8] sm:$0xff]
  %v115 = vld [vmem:[#allocation2 + $0x100] sm:$0xff]
  %v116 = vld [vmem:[#allocation2 + $0x108] sm:$0xff]
  %v117 = vld [vmem:[#allocation2 + $0x110] sm:$0xff]
  %v118 = vld [vmem:[#allocation2 + $0x118] sm:$0xff]
  %v119 = vld [vmem:[#allocation2 + $0x120] sm:$0xff]
  %v120 = vld [vmem:[#allocation2 + $0x128] sm:$0xff]
  %v121 = vld [vmem:[#allocation2 + $0x130] sm:$0xff]
  %v122 = vld [vmem:[#allocation2 + $0x138] sm:$0xff]
  %v123 = vld [vmem:[#allocation2 + $0x140] sm:$0xff]
  %v124 = vld [vmem:[#allocation2 + $0x148] sm:$0xff]
  %v125 = vld [vmem:[#allocation2 + $0x150] sm:$0xff]
  %v126 = vld [vmem:[#allocation2 + $0x158] sm:$0xff]
  %v127 = vld [vmem:[#allocation2 + $0x160] sm:$0xff]
  %v128 = vld [vmem:[#allocation2 + $0x168] sm:$0xff]
  %v129 = vld [vmem:[#allocation2 + $0x170] sm:$0xff]
  %v130 = vld [vmem:[#allocation2 + $0x178] sm:$0xff]
  %v131 = vld [vmem:[#allocation2 + $0x180] sm:$0xff]
  %v132 = vld [vmem:[#allocation2 + $0x188] sm:$0xff]
  %v133 = vld [vmem:[#allocation2 + $0x190] sm:$0xff]
  %v134 = vld [vmem:[#allocation2 + $0x198] sm:$0xff]
  %v135 = vld [vmem:[#allocation2 + $0x1a0] sm:$0xff]
  %v136 = vld [vmem:[#allocation2 + $0x1a8] sm:$0xff]
  %v137 = vld [vmem:[#allocation2 + $0x1b0] sm:$0xff]
  %v138 = vld [vmem:[#allocation2 + $0x1b8] sm:$0xff]
  %v139 = vld [vmem:[#allocation2 + $0x1c0] sm:$0xff]
  %v140 = vld [vmem:[#allocation2 + $0x1c8] sm:$0xff]
  %v141 = vld [vmem:[#allocation2 + $0x1d0] sm:$0xff]
  %v142 = vld [vmem:[#allocation2 + $0x1d8] sm:$0xff]
  %v143 = vld [vmem:[#allocation2 + $0x1e0] sm:$0xff]
  %v144 = vld [vmem:[#allocation2 + $0x1e8] sm:$0xff]
  %v145 = vld [vmem:[#allocation2 + $0x1f0] sm:$0xff]
  %v146 = vld [vmem:[#allocation2 + $0x1f8] sm:$0xff]
  %v147 = vld [vmem:[%s0] sm:$0xf]
  %v148 = vld [vmem:[%s0 + $0x4] sm:$0xf]
  %v149 = vld [vmem:[%s0 + $0x8] sm:$0xf]
  %v150 = vld [vmem:[%s0 + $0xc] sm:$0xf]
  %v151 = vld [vmem:[%s0 + $0x10] sm:$0xf]
  %v152 = vld [vmem:[%s0 + $0x14] sm:$0xf]
  %v153 = vld [vmem:[%s0 + $0x18] sm:$0xf]
  %v154 = vld [vmem:[%s0 + $0x1c] sm:$0xf]
  %v155 = vld [vmem:[%s0 + $0x20] sm:$0xf]
  %v156 = vld [vmem:[%s0 + $0x24] sm:$0xf]
  %v157 = vld [vmem:[%s0 + $0x28] sm:$0xf]
  %v158 = vld [vmem:[%s0 + $0x2c] sm:$0xf]
  %v159 = vld [vmem:[%s0 + $0x30] sm:$0xf]
  %v160 = vld [vmem:[%s0 + $0x34] sm:$0xf]
  %v161 = vld [vmem:[%s0 + $0x38] sm:$0xf]
  %v162 = vld [vmem:[%s0 + $0x3c] sm:$0xf]
  %v163 = vld [vmem:[%s0 + $0x40] sm:$0xf]
  %v164 = vld [vmem:[%s0 + $0x44] sm:$0xf]
  %v165 = vld [vmem:[%s0 + $0x48] sm:$0xf]
  %v166 = vld [vmem:[%s0 + $0x4c] sm:$0xf]
  %v167 = vld [vmem:[%s0 + $0x50] sm:$0xf]
  %v168 = vld [vmem:[%s0 + $0x54] sm:$0xf]
  %v169 = vld [vmem:[%s0 + $0x58] sm:$0xf]
  %v170 = vld [vmem:[%s0 + $0x5c] sm:$0xf]
  %v171 = vld [vmem:[%s0 + $0x60] sm:$0xf]
  %v172 = vld [vmem:[%s0 + $0x64] sm:$0xf]
  %v173 = vld [vmem:[%s0 + $0x68] sm:$0xf]
  %v174 = vld [vmem:[%s0 + $0x6c] sm:$0xf]
  %v175 = vld [vmem:[%s0 + $0x70] sm:$0xf]
  %v176 = vld [vmem:[%s0 + $0x74] sm:$0xf]
  %v177 = vld [vmem:[%s0 + $0x78] sm:$0xf]
  %v178 = vld [vmem:[%s0 + $0x7c] sm:$0xf]
  %v179 = vld [vmem:[%s0 + $0x80] sm:$0xf]
  %v180 = vld [vmem:[%s0 + $0x84] sm:$0xf]
  %v181 = vld [vmem:[%s0 + $0x88] sm:$0xf]
  %v182 = vld [vmem:[%s0 + $0x8c] sm:$0xf]
  %v183 = vld [vmem:[%s0 + $0x90] sm:$0xf]
  %v184 = vld [vmem:[%s0 + $0x94] sm:$0xf]
  %v185 = vld [vmem:[%s0 + $0x98] sm:$0xf]
  %v186 = vld [vmem:[%s0 + $0x9c] sm:$0xf]
  %v187 = vld [vmem:[%s0 + $0xa0] sm:$0xf]
  %v188 = vld [vmem:[%s0 + $0xa4] sm:$0xf]
  %v189 = vld [vmem:[%s0 + $0xa8] sm:$0xf]
  %v190 = vld [vmem:[%s0 + $0xac] sm:$0xf]
  %v191 = vld [vmem:[%s0 + $0xb0] sm:$0xf]
  %v192 = vld [vmem:[%s0 + $0xb4] sm:$0xf]
  %v193 = vld [vmem:[%s0 + $0xb8] sm:$0xf]
  %v194 = vld [vmem:[%s0 + $0xbc] sm:$0xf]
  %v195 = vld [vmem:[%s0 + $0xc0] sm:$0xf]
  %v196 = vld [vmem:[%s0 + $0xc4] sm:$0xf]
  %v197 = vld [vmem:[%s0 + $0xc8] sm:$0xf]
  %v198 = vld [vmem:[%s0 + $0xcc] sm:$0xf]
  %v199 = vld [vmem:[%s0 + $0xd0] sm:$0xf]
  %v200 = vld [vmem:[%s0 + $0xd4] sm:$0xf]
  %v201 = vld [vmem:[%s0 + $0xd8] sm:$0xf]
  %v202 = vld [vmem:[%s0 + $0xdc] sm:$0xf]
  %v203 = vld [vmem:[%s0 + $0xe0] sm:$0xf]
  %v204 = vld [vmem:[%s0 + $0xe4] sm:$0xf]
  %v205 = vld [vmem:[%s0 + $0xe8] sm:$0xf]
  %v206 = vld [vmem:[%s0 + $0xec] sm:$0xf]
  %v207 = vld [vmem:[%s0 + $0xf0] sm:$0xf]
  %v208 = vld [vmem:[%s0 + $0xf4] sm:$0xf]
  %v209 = vld [vmem:[%s0 + $0xf8] sm:$0xf]
  %v210 = vld [vmem:[%s0 + $0xfc] sm:$0xf]
  %v211 = vld [vmem:[%s1] sm:$0xf]
  %v212 = vld [vmem:[%s1 + $0x4] sm:$0xf]
  %v213 = vld [vmem:[%s1 + $0x8] sm:$0xf]
  %v214 = vld [vmem:[%s1 + $0xc] sm:$0xf]
  %v215 = vld [vmem:[%s1 + $0x10] sm:$0xf]
  %v216 = vld [vmem:[%s1 + $0x14] sm:$0xf]
  %v217 = vld [vmem:[%s1 + $0x18] sm:$0xf]
  %v218 = vld [vmem:[%s1 + $0x1c] sm:$0xf]
  %v219 = vld [vmem:[%s1 + $0x20] sm:$0xf]
  %v220 = vld [vmem:[%s1 + $0x24] sm:$0xf]
  %v221 = vld [vmem:[%s1 + $0x28] sm:$0xf]
  %v222 = vld [vmem:[%s1 + $0x2c] sm:$0xf]
  %v223 = vld [vmem:[%s1 + $0x30] sm:$0xf]
  %v224 = vld [vmem:[%s1 + $0x34] sm:$0xf]
  %v225 = vld [vmem:[%s1 + $0x38] sm:$0xf]
  %v226 = vld [vmem:[%s1 + $0x3c] sm:$0xf]
  %v291 = vunpack.c.l.b16 %v147
  %v292 = vunpack.c.l.b16 %v148
  %v293 = vunpack.c.l.b16 %v149
  %v294 = vunpack.c.l.b16 %v150
  %v295 = vunpack.c.l.b16 %v151
  %v296 = vunpack.c.l.b16 %v152
  %v297 = vunpack.c.l.b16 %v153
  %v298 = vunpack.c.l.b16 %v154
  %v299 = vunpack.c.l.b16 %v155
  %v300 = vunpack.c.l.b16 %v156
  %v301 = vunpack.c.l.b16 %v157
  %v302 = vunpack.c.l.b16 %v158
  %v303 = vunpack.c.l.b16 %v159
  %v304 = vunpack.c.l.b16 %v160
  %v305 = vunpack.c.l.b16 %v161
  %v306 = vunpack.c.l.b16 %v162
  %v307 = vunpack.c.l.b16 %v163
  %v308 = vunpack.c.l.b16 %v164
  %v309 = vunpack.c.l.b16 %v165
  %v310 = vunpack.c.l.b16 %v166
  %v311 = vunpack.c.l.b16 %v167
  %v312 = vunpack.c.l.b16 %v168
  %v313 = vunpack.c.l.b16 %v169
  %v314 = vunpack.c.l.b16 %v170
  %v315 = vunpack.c.l.b16 %v171
  %v316 = vunpack.c.l.b16 %v172
  %v317 = vunpack.c.l.b16 %v173
  %v318 = vunpack.c.l.b16 %v174
  %v319 = vunpack.c.l.b16 %v175
  %v320 = vunpack.c.l.b16 %v176
  %v321 = vunpack.c.l.b16 %v177
  %v322 = vunpack.c.l.b16 %v178
  %v323 = vunpack.c.l.b16 %v179
  %v324 = vunpack.c.l.b16 %v180
  %v325 = vunpack.c.l.b16 %v181
  %v326 = vunpack.c.l.b16 %v182
  %v327 = vunpack.c.l.b16 %v183
  %v328 = vunpack.c.l.b16 %v184
  %v329 = vunpack.c.l.b16 %v185
  %v330 = vunpack.c.l.b16 %v186
  %v331 = vunpack.c.l.b16 %v187
  %v332 = vunpack.c.l.b16 %v188
  %v333 = vunpack.c.l.b16 %v189
  %v334 = vunpack.c.l.b16 %v190
  %v335 = vunpack.c.l.b16 %v191
  %v336 = vunpack.c.l.b16 %v192
  %v337 = vunpack.c.l.b16 %v193
  %v338 = vunpack.c.l.b16 %v194
  %v339 = vunpack.c.l.b16 %v195
  %v340 = vunpack.c.l.b16 %v196
  %v341 = vunpack.c.l.b16 %v197
  %v342 = vunpack.c.l.b16 %v198
  %v343 = vunpack.c.l.b16 %v199
  %v344 = vunpack.c.l.b16 %v200
  %v345 = vunpack.c.l.b16 %v201
  %v346 = vunpack.c.l.b16 %v202
  %v347 = vunpack.c.l.b16 %v203
  %v348 = vunpack.c.l.b16 %v204
  %v349 = vunpack.c.l.b16 %v205
  %v350 = vunpack.c.l.b16 %v206
  %v351 = vunpack.c.l.b16 %v207
  %v352 = vunpack.c.l.b16 %v208
  %v353 = vunpack.c.l.b16 %v209
  %v354 = vunpack.c.l.b16 %v210
  %v355 = vpack.c.b16 %v292, %v291
  %v356 = vpack.c.b16 %v294, %v293
  %v357 = vpack.c.b16 %v296, %v295
  %v358 = vpack.c.b16 %v298, %v297
  %v359 = vpack.c.b16 %v300, %v299
  %v360 = vpack.c.b16 %v302, %v301
  %v361 = vpack.c.b16 %v304, %v303
  %v362 = vpack.c.b16 %v306, %v305
  %v363 = vpack.c.b16 %v308, %v307
  %v364 = vpack.c.b16 %v310, %v309
  %v365 = vpack.c.b16 %v312, %v311
  %v366 = vpack.c.b16 %v314, %v313
  %v367 = vpack.c.b16 %v316, %v315
  %v368 = vpack.c.b16 %v318, %v317
  %v369 = vpack.c.b16 %v320, %v319
  %v370 = vpack.c.b16 %v322, %v321
  %v371 = vpack.c.b16 %v324, %v323
  %v372 = vpack.c.b16 %v326, %v325
  %v373 = vpack.c.b16 %v328, %v327
  %v374 = vpack.c.b16 %v330, %v329
  %v375 = vpack.c.b16 %v332, %v331
  %v376 = vpack.c.b16 %v334, %v333
  %v377 = vpack.c.b16 %v336, %v335
  %v378 = vpack.c.b16 %v338, %v337
  %v379 = vpack.c.b16 %v340, %v339
  %v380 = vpack.c.b16 %v342, %v341
  %v381 = vpack.c.b16 %v344, %v343
  %v382 = vpack.c.b16 %v346, %v345
  %v383 = vpack.c.b16 %v348, %v347
  %v384 = vpack.c.b16 %v350, %v349
  %v385 = vpack.c.b16 %v352, %v351
  %v386 = vpack.c.b16 %v354, %v353
  %v435 = vunpack.c.l.b16 %v211
  %v436 = vunpack.c.l.b16 %v212
  %v437 = vunpack.c.l.b16 %v213
  %v438 = vunpack.c.l.b16 %v214
  %v439 = vunpack.c.l.b16 %v215
  %v440 = vunpack.c.l.b16 %v216
  %v441 = vunpack.c.l.b16 %v217
  %v442 = vunpack.c.l.b16 %v218
  %v443 = vunpack.c.l.b16 %v219
  %v444 = vunpack.c.l.b16 %v220
  %v445 = vunpack.c.l.b16 %v221
  %v446 = vunpack.c.l.b16 %v222
  %v447 = vunpack.c.l.b16 %v223
  %v448 = vunpack.c.l.b16 %v224
  %v449 = vunpack.c.l.b16 %v225
  %v450 = vunpack.c.l.b16 %v226
  %v451 = vpack.c.b16 %v436, %v435
  %v452 = vpack.c.b16 %v438, %v437
  %v453 = vpack.c.b16 %v440, %v439
  %v454 = vpack.c.b16 %v442, %v441
  %v455 = vpack.c.b16 %v444, %v443
  %v456 = vpack.c.b16 %v446, %v445
  %v457 = vpack.c.b16 %v448, %v447
  %v458 = vpack.c.b16 %v450, %v449
  %467 = vmatprep.subr.bf16.mxu0 0
  %468 = vmatpush1.bf16.msra.mxu0 %v458
  %469 = vmatprep.subr.bf16.mxu0 0
  %470 = vmatpush1.bf16.msra.mxu0 %v457
  %471 = vmatprep.subr.bf16.mxu0 0
  %472 = vmatpush1.bf16.msra.mxu0 %v456
  %473 = vmatprep.subr.bf16.mxu0 0
  %474 = vmatpush1.bf16.msra.mxu0 %v455
  %475 = vmatprep.subr.bf16.mxu0 0
  %476 = vmatpush1.bf16.msra.mxu0 %v454
  %477 = vmatprep.subr.bf16.mxu0 0
  %478 = vmatpush1.bf16.msra.mxu0 %v453
  %479 = vmatprep.subr.bf16.mxu0 0
  %480 = vmatpush1.bf16.msra.mxu0 %v452
  %481 = vmatprep.subr.bf16.mxu0 0
  %482 = vmatpush1.bf16.msra.mxu0 %v451
  %483 = vmatprep.subr.bf16.mxu0 0
  %484 = vmatpush2.bf16.msra.mxu0 0
  %485 = vmatprep.subr.bf16.mxu0 0
  %486 = vmatpush2.bf16.msra.mxu0 0
  %487 = vmatprep.subr.bf16.mxu0 0
  %488 = vmatpush2.bf16.msra.mxu0 0
  %489 = vmatprep.subr.bf16.mxu0 0
  %490 = vmatpush2.bf16.msra.mxu0 0
  %491 = vmatprep.subr.bf16.mxu0 0
  %492 = vmatpush2.bf16.msra.mxu0 0
  %493 = vmatprep.subr.bf16.mxu0 0
  %494 = vmatpush2.bf16.msra.mxu0 0
  %495 = vmatprep.subr.bf16.mxu0 0
  %496 = vmatpush2.bf16.msra.mxu0 0
  %497 = vmatprep.subr.bf16.mxu0 0
  %498 = vmatpush2.bf16.msra.mxu0 0
  %499 = vmatprep.mubr.bf16.mxu0 0
  %500 = vmatmul.mubr.bf16.gmra.mxu0 %v355
  %v501 = vpop.f32.mrf.mxu0
  %v502 = vadd.f32 0.0, %v501
  %v503 = vpop.f32.mrf.mxu0
  %v504 = vpop.f32.mrf.mxu0
  %v505 = vadd.f32 0.0, %v504
  %v506 = vpop.f32.mrf.mxu0
  %507 = vmatprep.mubr.bf16.mxu0 0
  %508 = vmatmul.mubr.bf16.gmra.mxu0 %v356
  %v509 = vpop.f32.mrf.mxu0
  %v510 = vadd.f32 0.0, %v509
  %v511 = vpop.f32.mrf.mxu0
  %v512 = vpop.f32.mrf.mxu0
  %v513 = vadd.f32 0.0, %v512
  %v514 = vpop.f32.mrf.mxu0
  %515 = vmatprep.mubr.bf16.mxu0 0
  %516 = vmatmul.mubr.bf16.gmra.mxu0 %v357
  %v517 = vpop.f32.mrf.mxu0
  %v518 = vadd.f32 0.0, %v517
  %v519 = vpop.f32.mrf.mxu0
  %v520 = vpop.f32.mrf.mxu0
  %v521 = vadd.f32 0.0, %v520
  %v522 = vpop.f32.mrf.mxu0
  %523 = vmatprep.mubr.bf16.mxu0 0
  %524 = vmatmul.mubr.bf16.gmra.mxu0 %v358
  %v525 = vpop.f32.mrf.mxu0
  %v526 = vadd.f32 0.0, %v525
  %v527 = vpop.f32.mrf.mxu0
  %v528 = vpop.f32.mrf.mxu0
  %v529 = vadd.f32 0.0, %v528
  %v530 = vpop.f32.mrf.mxu0
  %531 = vmatprep.mubr.bf16.mxu0 0
  %532 = vmatmul.mubr.bf16.gmra.mxu0 %v359
  %v533 = vpop.f32.mrf.mxu0
  %v534 = vadd.f32 0.0, %v533
  %v535 = vpop.f32.mrf.mxu0
  %v536 = vpop.f32.mrf.mxu0
  %v537 = vadd.f32 0.0, %v536
  %v538 = vpop.f32.mrf.mxu0
  %539 = vmatprep.mubr.bf16.mxu0 0
  %540 = vmatmul.mubr.bf16.gmra.mxu0 %v360
  %v541 = vpop.f32.mrf.mxu0
  %v542 = vadd.f32 0.0, %v541
  %v543 = vpop.f32.mrf.mxu0
  %v544 = vpop.f32.mrf.mxu0
  %v545 = vadd.f32 0.0, %v544
  %v546 = vpop.f32.mrf.mxu0
  %547 = vmatprep.mubr.bf16.mxu0 0
  %548 = vmatmul.mubr.bf16.gmra.mxu0 %v361
  %v549 = vpop.f32.mrf.mxu0
  %v550 = vadd.f32 0.0, %v549
  %v551 = vpop.f32.mrf.mxu0
  %v552 = vpop.f32.mrf.mxu0
  %v553 = vadd.f32 0.0, %v552
  %v554 = vpop.f32.mrf.mxu0
  %555 = vmatprep.mubr.bf16.mxu0 0
  %556 = vmatmul.mubr.bf16.gmra.mxu0 %v362
  %v557 = vpop.f32.mrf.mxu0
  %v558 = vadd.f32 0.0, %v557
  %v559 = vpop.f32.mrf.mxu0
  %v560 = vpop.f32.mrf.mxu0
  %v561 = vadd.f32 0.0, %v560
  %v562 = vpop.f32.mrf.mxu0
  %563 = vmatprep.mubr.bf16.mxu0 0
  %564 = vmatmul.mubr.bf16.gmra.mxu0 %v363
  %v565 = vpop.f32.mrf.mxu0
  %v566 = vadd.f32 0.0, %v565
  %v567 = vpop.f32.mrf.mxu0
  %v568 = vpop.f32.mrf.mxu0
  %v569 = vadd.f32 0.0, %v568
  %v570 = vpop.f32.mrf.mxu0
  %571 = vmatprep.mubr.bf16.mxu0 0
  %572 = vmatmul.mubr.bf16.gmra.mxu0 %v364
  %v573 = vpop.f32.mrf.mxu0
  %v574 = vadd.f32 0.0, %v573
  %v575 = vpop.f32.mrf.mxu0
  %v576 = vpop.f32.mrf.mxu0
  %v577 = vadd.f32 0.0, %v576
  %v578 = vpop.f32.mrf.mxu0
  %579 = vmatprep.mubr.bf16.mxu0 0
  %580 = vmatmul.mubr.bf16.gmra.mxu0 %v365
  %v581 = vpop.f32.mrf.mxu0
  %v582 = vadd.f32 0.0, %v581
  %v583 = vpop.f32.mrf.mxu0
  %v584 = vpop.f32.mrf.mxu0
  %v585 = vadd.f32 0.0, %v584
  %v586 = vpop.f32.mrf.mxu0
  %587 = vmatprep.mubr.bf16.mxu0 0
  %588 = vmatmul.mubr.bf16.gmra.mxu0 %v366
  %v589 = vpop.f32.mrf.mxu0
  %v590 = vadd.f32 0.0, %v589
  %v591 = vpop.f32.mrf.mxu0
  %v592 = vpop.f32.mrf.mxu0
  %v593 = vadd.f32 0.0, %v592
  %v594 = vpop.f32.mrf.mxu0
  %595 = vmatprep.mubr.bf16.mxu0 0
  %596 = vmatmul.mubr.bf16.gmra.mxu0 %v367
  %v597 = vpop.f32.mrf.mxu0
  %v598 = vadd.f32 0.0, %v597
  %v599 = vpop.f32.mrf.mxu0
  %v600 = vpop.f32.mrf.mxu0
  %v601 = vadd.f32 0.0, %v600
  %v602 = vpop.f32.mrf.mxu0
  %603 = vmatprep.mubr.bf16.mxu0 0
  %604 = vmatmul.mubr.bf16.gmra.mxu0 %v368
  %v605 = vpop.f32.mrf.mxu0
  %v606 = vadd.f32 0.0, %v605
  %v607 = vpop.f32.mrf.mxu0
  %v608 = vpop.f32.mrf.mxu0
  %v609 = vadd.f32 0.0, %v608
  %v610 = vpop.f32.mrf.mxu0
  %611 = vmatprep.mubr.bf16.mxu0 0
  %612 = vmatmul.mubr.bf16.gmra.mxu0 %v369
  %v613 = vpop.f32.mrf.mxu0
  %v614 = vadd.f32 0.0, %v613
  %v615 = vpop.f32.mrf.mxu0
  %v616 = vpop.f32.mrf.mxu0
  %v617 = vadd.f32 0.0, %v616
  %v618 = vpop.f32.mrf.mxu0
  %619 = vmatprep.mubr.bf16.mxu0 0
  %620 = vmatmul.mubr.bf16.gmra.mxu0 %v370
  %v621 = vpop.f32.mrf.mxu0
  %v622 = vadd.f32 0.0, %v621
  %v623 = vpop.f32.mrf.mxu0
  %v624 = vpop.f32.mrf.mxu0
  %v625 = vadd.f32 0.0, %v624
  %v626 = vpop.f32.mrf.mxu0
  %627 = vmatprep.mubr.bf16.mxu0 0
  %628 = vmatmul.mubr.bf16.gmra.mxu0 %v371
  %v629 = vpop.f32.mrf.mxu0
  %v630 = vadd.f32 0.0, %v629
  %v631 = vpop.f32.mrf.mxu0
  %v632 = vpop.f32.mrf.mxu0
  %v633 = vadd.f32 0.0, %v632
  %v634 = vpop.f32.mrf.mxu0
  %635 = vmatprep.mubr.bf16.mxu0 0
  %636 = vmatmul.mubr.bf16.gmra.mxu0 %v372
  %v637 = vpop.f32.mrf.mxu0
  %v638 = vadd.f32 0.0, %v637
  %v639 = vpop.f32.mrf.mxu0
  %v640 = vpop.f32.mrf.mxu0
  %v641 = vadd.f32 0.0, %v640
  %v642 = vpop.f32.mrf.mxu0
  %643 = vmatprep.mubr.bf16.mxu0 0
  %644 = vmatmul.mubr.bf16.gmra.mxu0 %v373
  %v645 = vpop.f32.mrf.mxu0
  %v646 = vadd.f32 0.0, %v645
  %v647 = vpop.f32.mrf.mxu0
  %v648 = vpop.f32.mrf.mxu0
  %v649 = vadd.f32 0.0, %v648
  %v650 = vpop.f32.mrf.mxu0
  %651 = vmatprep.mubr.bf16.mxu0 0
  %652 = vmatmul.mubr.bf16.gmra.mxu0 %v374
  %v653 = vpop.f32.mrf.mxu0
  %v654 = vadd.f32 0.0, %v653
  %v655 = vpop.f32.mrf.mxu0
  %v656 = vpop.f32.mrf.mxu0
  %v657 = vadd.f32 0.0, %v656
  %v658 = vpop.f32.mrf.mxu0
  %659 = vmatprep.mubr.bf16.mxu0 0
  %660 = vmatmul.mubr.bf16.gmra.mxu0 %v375
  %v661 = vpop.f32.mrf.mxu0
  %v662 = vadd.f32 0.0, %v661
  %v663 = vpop.f32.mrf.mxu0
  %v664 = vpop.f32.mrf.mxu0
  %v665 = vadd.f32 0.0, %v664
  %v666 = vpop.f32.mrf.mxu0
  %667 = vmatprep.mubr.bf16.mxu0 0
  %668 = vmatmul.mubr.bf16.gmra.mxu0 %v376
  %v669 = vpop.f32.mrf.mxu0
  %v670 = vadd.f32 0.0, %v669
  %v671 = vpop.f32.mrf.mxu0
  %v672 = vpop.f32.mrf.mxu0
  %v673 = vadd.f32 0.0, %v672
  %v674 = vpop.f32.mrf.mxu0
  %675 = vmatprep.mubr.bf16.mxu0 0
  %676 = vmatmul.mubr.bf16.gmra.mxu0 %v377
  %v677 = vpop.f32.mrf.mxu0
  %v678 = vadd.f32 0.0, %v677
  %v679 = vpop.f32.mrf.mxu0
  %v680 = vpop.f32.mrf.mxu0
  %v681 = vadd.f32 0.0, %v680
  %v682 = vpop.f32.mrf.mxu0
  %683 = vmatprep.mubr.bf16.mxu0 0
  %684 = vmatmul.mubr.bf16.gmra.mxu0 %v378
  %v685 = vpop.f32.mrf.mxu0
  %v686 = vadd.f32 0.0, %v685
  %v687 = vpop.f32.mrf.mxu0
  %v688 = vpop.f32.mrf.mxu0
  %v689 = vadd.f32 0.0, %v688
  %v690 = vpop.f32.mrf.mxu0
  %691 = vmatprep.mubr.bf16.mxu0 0
  %692 = vmatmul.mubr.bf16.gmra.mxu0 %v379
  %v693 = vpop.f32.mrf.mxu0
  %v694 = vadd.f32 0.0, %v693
  %v695 = vpop.f32.mrf.mxu0
  %v696 = vpop.f32.mrf.mxu0
  %v697 = vadd.f32 0.0, %v696
  %v698 = vpop.f32.mrf.mxu0
  %699 = vmatprep.mubr.bf16.mxu0 0
  %700 = vmatmul.mubr.bf16.gmra.mxu0 %v380
  %v701 = vpop.f32.mrf.mxu0
  %v702 = vadd.f32 0.0, %v701
  %v703 = vpop.f32.mrf.mxu0
  %v704 = vpop.f32.mrf.mxu0
  %v705 = vadd.f32 0.0, %v704
  %v706 = vpop.f32.mrf.mxu0
  %707 = vmatprep.mubr.bf16.mxu0 0
  %708 = vmatmul.mubr.bf16.gmra.mxu0 %v381
  %v709 = vpop.f32.mrf.mxu0
  %v710 = vadd.f32 0.0, %v709
  %v711 = vpop.f32.mrf.mxu0
  %v712 = vpop.f32.mrf.mxu0
  %v713 = vadd.f32 0.0, %v712
  %v714 = vpop.f32.mrf.mxu0
  %715 = vmatprep.mubr.bf16.mxu0 0
  %716 = vmatmul.mubr.bf16.gmra.mxu0 %v382
  %v717 = vpop.f32.mrf.mxu0
  %v718 = vadd.f32 0.0, %v717
  %v719 = vpop.f32.mrf.mxu0
  %v720 = vpop.f32.mrf.mxu0
  %v721 = vadd.f32 0.0, %v720
  %v722 = vpop.f32.mrf.mxu0
  %723 = vmatprep.mubr.bf16.mxu0 0
  %724 = vmatmul.mubr.bf16.gmra.mxu0 %v383
  %v725 = vpop.f32.mrf.mxu0
  %v726 = vadd.f32 0.0, %v725
  %v727 = vpop.f32.mrf.mxu0
  %v728 = vpop.f32.mrf.mxu0
  %v729 = vadd.f32 0.0, %v728
  %v730 = vpop.f32.mrf.mxu0
  %731 = vmatprep.mubr.bf16.mxu0 0
  %732 = vmatmul.mubr.bf16.gmra.mxu0 %v384
  %v733 = vpop.f32.mrf.mxu0
  %v734 = vadd.f32 0.0, %v733
  %v735 = vpop.f32.mrf.mxu0
  %v736 = vpop.f32.mrf.mxu0
  %v737 = vadd.f32 0.0, %v736
  %v738 = vpop.f32.mrf.mxu0
  %739 = vmatprep.mubr.bf16.mxu0 0
  %740 = vmatmul.mubr.bf16.gmra.mxu0 %v385
  %v741 = vpop.f32.mrf.mxu0
  %v742 = vadd.f32 0.0, %v741
  %v743 = vpop.f32.mrf.mxu0
  %v744 = vpop.f32.mrf.mxu0
  %v745 = vadd.f32 0.0, %v744
  %v746 = vpop.f32.mrf.mxu0
  %747 = vmatprep.mubr.bf16.mxu0 0
  %748 = vmatmul.mubr.bf16.gmra.mxu0 %v386
  %v749 = vpop.f32.mrf.mxu0
  %v750 = vadd.f32 0.0, %v749
  %v751 = vpop.f32.mrf.mxu0
  %v752 = vpop.f32.mrf.mxu0
  %v753 = vadd.f32 0.0, %v752
  %v754 = vpop.f32.mrf.mxu0
  %755 = vdwg.mxu0
  %v756 = vadd.f32 %v83, %v502
  %v757 = vadd.f32 %v84, %v505
  %v758 = vadd.f32 %v85, %v510
  %v759 = vadd.f32 %v86, %v513
  %v760 = vadd.f32 %v87, %v518
  %v761 = vadd.f32 %v88, %v521
  %v762 = vadd.f32 %v89, %v526
  %v763 = vadd.f32 %v90, %v529
  %v764 = vadd.f32 %v91, %v534
  %v765 = vadd.f32 %v92, %v537
  %v766 = vadd.f32 %v93, %v542
  %v767 = vadd.f32 %v94, %v545
  %v768 = vadd.f32 %v95, %v550
  %v769 = vadd.f32 %v96, %v553
  %v770 = vadd.f32 %v97, %v558
  %v771 = vadd.f32 %v98, %v561
  %v772 = vadd.f32 %v99, %v566
  %v773 = vadd.f32 %v100, %v569
  %v774 = vadd.f32 %v101, %v574
  %v775 = vadd.f32 %v102, %v577
  %v776 = vadd.f32 %v103, %v582
  %v777 = vadd.f32 %v104, %v585
  %v778 = vadd.f32 %v105, %v590
  %v779 = vadd.f32 %v106, %v593
  %v780 = vadd.f32 %v107, %v598
  %v781 = vadd.f32 %v108, %v601
  %v782 = vadd.f32 %v109, %v606
  %v783 = vadd.f32 %v110, %v609
  %v784 = vadd.f32 %v111, %v614
  %v785 = vadd.f32 %v112, %v617
  %v786 = vadd.f32 %v113, %v622
  %v787 = vadd.f32 %v114, %v625
  %v788 = vadd.f32 %v115, %v630
  %v789 = vadd.f32 %v116, %v633
  %v790 = vadd.f32 %v117, %v638
  %v791 = vadd.f32 %v118, %v641
  %v792 = vadd.f32 %v119, %v646
  %v793 = vadd.f32 %v120, %v649
  %v794 = vadd.f32 %v121, %v654
  %v795 = vadd.f32 %v122, %v657
  %v796 = vadd.f32 %v123, %v662
  %v797 = vadd.f32 %v124, %v665
  %v798 = vadd.f32 %v125, %v670
  %v799 = vadd.f32 %v126, %v673
  %v800 = vadd.f32 %v127, %v678
  %v801 = vadd.f32 %v128, %v681
  %v802 = vadd.f32 %v129, %v686
  %v803 = vadd.f32 %v130, %v689
  %v804 = vadd.f32 %v131, %v694
  %v805 = vadd.f32 %v132, %v697
  %v806 = vadd.f32 %v133, %v702
  %v807 = vadd.f32 %v134, %v705
  %v808 = vadd.f32 %v135, %v710
  %v809 = vadd.f32 %v136, %v713
  %v810 = vadd.f32 %v137, %v718
  %v811 = vadd.f32 %v138, %v721
  %v812 = vadd.f32 %v139, %v726
  %v813 = vadd.f32 %v140, %v729
  %v814 = vadd.f32 %v141, %v734
  %v815 = vadd.f32 %v142, %v737
  %v816 = vadd.f32 %v143, %v742
  %v817 = vadd.f32 %v144, %v745
  %v818 = vadd.f32 %v145, %v750
  %v819 = vadd.f32 %v146, %v753
  %820 = vst [vmem:[#allocation2] sm:$0xff] %v756
  %821 = vst [vmem:[#allocation2 + $0x8] sm:$0xff] %v757
  %822 = vst [vmem:[#allocation2 + $0x10] sm:$0xff] %v758
  %823 = vst [vmem:[#allocation2 + $0x18] sm:$0xff] %v759
  %824 = vst [vmem:[#allocation2 + $0x20] sm:$0xff] %v760
  %825 = vst [vmem:[#allocation2 + $0x28] sm:$0xff] %v761
  %826 = vst [vmem:[#allocation2 + $0x30] sm:$0xff] %v762
  %827 = vst [vmem:[#allocation2 + $0x38] sm:$0xff] %v763
  %828 = vst [vmem:[#allocation2 + $0x40] sm:$0xff] %v764
  %829 = vst [vmem:[#allocation2 + $0x48] sm:$0xff] %v765
  %830 = vst [vmem:[#allocation2 + $0x50] sm:$0xff] %v766
  %831 = vst [vmem:[#allocation2 + $0x58] sm:$0xff] %v767
  %832 = vst [vmem:[#allocation2 + $0x60] sm:$0xff] %v768
  %833 = vst [vmem:[#allocation2 + $0x68] sm:$0xff] %v769
  %834 = vst [vmem:[#allocation2 + $0x70] sm:$0xff] %v770
  %835 = vst [vmem:[#allocation2 + $0x78] sm:$0xff] %v771
  %836 = vst [vmem:[#allocation2 + $0x80] sm:$0xff] %v772
  %837 = vst [vmem:[#allocation2 + $0x88] sm:$0xff] %v773
  %838 = vst [vmem:[#allocation2 + $0x90] sm:$0xff] %v774
  %839 = vst [vmem:[#allocation2 + $0x98] sm:$0xff] %v775
  %840 = vst [vmem:[#allocation2 + $0xa0] sm:$0xff] %v776
  %841 = vst [vmem:[#allocation2 + $0xa8] sm:$0xff] %v777
  %842 = vst [vmem:[#allocation2 + $0xb0] sm:$0xff] %v778
  %843 = vst [vmem:[#allocation2 + $0xb8] sm:$0xff] %v779
  %844 = vst [vmem:[#allocation2 + $0xc0] sm:$0xff] %v780
  %845 = vst [vmem:[#allocation2 + $0xc8] sm:$0xff] %v781
  %846 = vst [vmem:[#allocation2 + $0xd0] sm:$0xff] %v782
  %847 = vst [vmem:[#allocation2 + $0xd8] sm:$0xff] %v783
  %848 = vst [vmem:[#allocation2 + $0xe0] sm:$0xff] %v784
  %849 = vst [vmem:[#allocation2 + $0xe8] sm:$0xff] %v785
  %850 = vst [vmem:[#allocation2 + $0xf0] sm:$0xff] %v786
  %851 = vst [vmem:[#allocation2 + $0xf8] sm:$0xff] %v787
  %852 = vst [vmem:[#allocation2 + $0x100] sm:$0xff] %v788
  %853 = vst [vmem:[#allocation2 + $0x108] sm:$0xff] %v789
  %854 = vst [vmem:[#allocation2 + $0x110] sm:$0xff] %v790
  %855 = vst [vmem:[#allocation2 + $0x118] sm:$0xff] %v791
  %856 = vst [vmem:[#allocation2 + $0x120] sm:$0xff] %v792
  %857 = vst [vmem:[#allocation2 + $0x128] sm:$0xff] %v793
  %858 = vst [vmem:[#allocation2 + $0x130] sm:$0xff] %v794
  %859 = vst [vmem:[#allocation2 + $0x138] sm:$0xff] %v795
  %860 = vst [vmem:[#allocation2 + $0x140] sm:$0xff] %v796
  %861 = vst [vmem:[#allocation2 + $0x148] sm:$0xff] %v797
  %862 = vst [vmem:[#allocation2 + $0x150] sm:$0xff] %v798
  %863 = vst [vmem:[#allocation2 + $0x158] sm:$0xff] %v799
  %864 = vst [vmem:[#allocation2 + $0x160] sm:$0xff] %v800
  %865 = vst [vmem:[#allocation2 + $0x168] sm:$0xff] %v801
  %866 = vst [vmem:[#allocation2 + $0x170] sm:$0xff] %v802
  %867 = vst [vmem:[#allocation2 + $0x178] sm:$0xff] %v803
  %868 = vst [vmem:[#allocation2 + $0x180] sm:$0xff] %v804
  %869 = vst [vmem:[#allocation2 + $0x188] sm:$0xff] %v805
  %870 = vst [vmem:[#allocation2 + $0x190] sm:$0xff] %v806
  %871 = vst [vmem:[#allocation2 + $0x198] sm:$0xff] %v807
  %872 = vst [vmem:[#allocation2 + $0x1a0] sm:$0xff] %v808
  %873 = vst [vmem:[#allocation2 + $0x1a8] sm:$0xff] %v809
  %874 = vst [vmem:[#allocation2 + $0x1b0] sm:$0xff] %v810
  %875 = vst [vmem:[#allocation2 + $0x1b8] sm:$0xff] %v811
  %876 = vst [vmem:[#allocation2 + $0x1c0] sm:$0xff] %v812
  %877 = vst [vmem:[#allocation2 + $0x1c8] sm:$0xff] %v813
  %878 = vst [vmem:[#allocation2 + $0x1d0] sm:$0xff] %v814
  %879 = vst [vmem:[#allocation2 + $0x1d8] sm:$0xff] %v815
  %880 = vst [vmem:[#allocation2 + $0x1e0] sm:$0xff] %v816
  %881 = vst [vmem:[#allocation2 + $0x1e8] sm:$0xff] %v817
  %882 = vst [vmem:[#allocation2 + $0x1f0] sm:$0xff] %v818
  %883 = vst [vmem:[#allocation2 + $0x1f8] sm:$0xff] %v819
  // Predicated region
  $region18: #{res_up_forward.5} parent=0 // pred_check
    %p884 = pneg %p15
  $region19: #{res_up_forward.5} parent=0 // pred_check_branch
    %886 = sbr.rel (%p884) target = $region21
  $region20: #{res_up_forward.5} parent=0 // pred_region
    %v887 = vld [vmem:[#allocation2] sm:$0xff]
    %v888 = vld [vmem:[#allocation2 + $0x8] sm:$0xff]
    %v889 = vld [vmem:[#allocation2 + $0x10] sm:$0xff]
    %v890 = vld [vmem:[#allocation2 + $0x18] sm:$0xff]
    %v891 = vld [vmem:[#allocation2 + $0x20] sm:$0xff]
    %v892 = vld [vmem:[#allocation2 + $0x28] sm:$0xff]
    %v893 = vld [vmem:[#allocation2 + $0x30] sm:$0xff]
    %v894 = vld [vmem:[#allocation2 + $0x38] sm:$0xff]
    %v895 = vld [vmem:[#allocation2 + $0x40] sm:$0xff]
    %v896 = vld [vmem:[#allocation2 + $0x48] sm:$0xff]
    %v897 = vld [vmem:[#allocation2 + $0x50] sm:$0xff]
    %v898 = vld [vmem:[#allocation2 + $0x58] sm:$0xff]
    %v899 = vld [vmem:[#allocation2 + $0x60] sm:$0xff]
    %v900 = vld [vmem:[#allocation2 + $0x68] sm:$0xff]
    %v901 = vld [vmem:[#allocation2 + $0x70] sm:$0xff]
    %v902 = vld [vmem:[#allocation2 + $0x78] sm:$0xff]
    %v903 = vld [vmem:[#allocation2 + $0x80] sm:$0xff]
    %v904 = vld [vmem:[#allocation2 + $0x88] sm:$0xff]
    %v905 = vld [vmem:[#allocation2 + $0x90] sm:$0xff]
    %v906 = vld [vmem:[#allocation2 + $0x98] sm:$0xff]
    %v907 = vld [vmem:[#allocation2 + $0xa0] sm:$0xff]
    %v908 = vld [vmem:[#allocation2 + $0xa8] sm:$0xff]
    %v909 = vld [vmem:[#allocation2 + $0xb0] sm:$0xff]
    %v910 = vld [vmem:[#allocation2 + $0xb8] sm:$0xff]
    %v911 = vld [vmem:[#allocation2 + $0xc0] sm:$0xff]
    %v912 = vld [vmem:[#allocation2 + $0xc8] sm:$0xff]
    %v913 = vld [vmem:[#allocation2 + $0xd0] sm:$0xff]
    %v914 = vld [vmem:[#allocation2 + $0xd8] sm:$0xff]
    %v915 = vld [vmem:[#allocation2 + $0xe0] sm:$0xff]
    %v916 = vld [vmem:[#allocation2 + $0xe8] sm:$0xff]
    %v917 = vld [vmem:[#allocation2 + $0xf0] sm:$0xff]
    %v918 = vld [vmem:[#allocation2 + $0xf8] sm:$0xff]
    %v919 = vld [vmem:[#allocation2 + $0x100] sm:$0xff]
    %v920 = vld [vmem:[#allocation2 + $0x108] sm:$0xff]
    %v921 = vld [vmem:[#allocation2 + $0x110] sm:$0xff]
    %v922 = vld [vmem:[#allocation2 + $0x118] sm:$0xff]
    %v923 = vld [vmem:[#allocation2 + $0x120] sm:$0xff]
    %v924 = vld [vmem:[#allocation2 + $0x128] sm:$0xff]
    %v925 = vld [vmem:[#allocation2 + $0x130] sm:$0xff]
    %v926 = vld [vmem:[#allocation2 + $0x138] sm:$0xff]
    %v927 = vld [vmem:[#allocation2 + $0x140] sm:$0xff]
    %v928 = vld [vmem:[#allocation2 + $0x148] sm:$0xff]
    %v929 = vld [vmem:[#allocation2 + $0x150] sm:$0xff]
    %v930 = vld [vmem:[#allocation2 + $0x158] sm:$0xff]
    %v931 = vld [vmem:[#allocation2 + $0x160] sm:$0xff]
    %v932 = vld [vmem:[#allocation2 + $0x168] sm:$0xff]
    %v933 = vld [vmem:[#allocation2 + $0x170] sm:$0xff]
    %v934 = vld [vmem:[#allocation2 + $0x178] sm:$0xff]
    %v935 = vld [vmem:[#allocation2 + $0x180] sm:$0xff]
    %v936 = vld [vmem:[#allocation2 + $0x188] sm:$0xff]
    %v937 = vld [vmem:[#allocation2 + $0x190] sm:$0xff]
    %v938 = vld [vmem:[#allocation2 + $0x198] sm:$0xff]
    %v939 = vld [vmem:[#allocation2 + $0x1a0] sm:$0xff]
    %v940 = vld [vmem:[#allocation2 + $0x1a8] sm:$0xff]
    %v941 = vld [vmem:[#allocation2 + $0x1b0] sm:$0xff]
    %v942 = vld [vmem:[#allocation2 + $0x1b8] sm:$0xff]
    %v943 = vld [vmem:[#allocation2 + $0x1c0] sm:$0xff]
    %v944 = vld [vmem:[#allocation2 + $0x1c8] sm:$0xff]
    %v945 = vld [vmem:[#allocation2 + $0x1d0] sm:$0xff]
    %v946 = vld [vmem:[#allocation2 + $0x1d8] sm:$0xff]
    %v947 = vld [vmem:[#allocation2 + $0x1e0] sm:$0xff]
    %v948 = vld [vmem:[#allocation2 + $0x1e8] sm:$0xff]
    %v949 = vld [vmem:[#allocation2 + $0x1f0] sm:$0xff]
    %v950 = vld [vmem:[#allocation2 + $0x1f8] sm:$0xff]
    %v951 = vld [vmem:[%s2] sm:$0x1]
    %v953 = vlaneseq
    %v954 = vshrl.u32 %v953, 7
    %v955 = vsub.s32 0, %v954
    %v956 = vrot.slane %v951, %v955
    %v958 = vadd.f32 %v887, %v956
    %v959 = vadd.f32 %v888, %v956
    %v960 = vadd.f32 %v889, %v956
    %v961 = vadd.f32 %v890, %v956
    %v962 = vadd.f32 %v891, %v956
    %v963 = vadd.f32 %v892, %v956
    %v964 = vadd.f32 %v893, %v956
    %v965 = vadd.f32 %v894, %v956
    %v966 = vadd.f32 %v895, %v956
    %v967 = vadd.f32 %v896, %v956
    %v968 = vadd.f32 %v897, %v956
    %v969 = vadd.f32 %v898, %v956
    %v970 = vadd.f32 %v899, %v956
    %v971 = vadd.f32 %v900, %v956
    %v972 = vadd.f32 %v901, %v956
    %v973 = vadd.f32 %v902, %v956
    %v974 = vadd.f32 %v903, %v956
    %v975 = vadd.f32 %v904, %v956
    %v976 = vadd.f32 %v905, %v956
    %v977 = vadd.f32 %v906, %v956
    %v978 = vadd.f32 %v907, %v956
    %v979 = vadd.f32 %v908, %v956
    %v980 = vadd.f32 %v909, %v956
    %v981 = vadd.f32 %v910, %v956
    %v982 = vadd.f32 %v911, %v956
    %v983 = vadd.f32 %v912, %v956
    %v984 = vadd.f32 %v913, %v956
    %v985 = vadd.f32 %v914, %v956
    %v986 = vadd.f32 %v915, %v956
    %v987 = vadd.f32 %v916, %v956
    %v988 = vadd.f32 %v917, %v956
    %v989 = vadd.f32 %v918, %v956
    %v990 = vadd.f32 %v919, %v956
    %v991 = vadd.f32 %v920, %v956
    %v992 = vadd.f32 %v921, %v956
    %v993 = vadd.f32 %v922, %v956
    %v994 = vadd.f32 %v923, %v956
    %v995 = vadd.f32 %v924, %v956
    %v996 = vadd.f32 %v925, %v956
    %v997 = vadd.f32 %v926, %v956
    %v998 = vadd.f32 %v927, %v956
    %v999 = vadd.f32 %v928, %v956
    %v1000 = vadd.f32 %v929, %v956
    %v1001 = vadd.f32 %v930, %v956
    %v1002 = vadd.f32 %v931, %v956
    %v1003 = vadd.f32 %v932, %v956
    %v1004 = vadd.f32 %v933, %v956
    %v1005 = vadd.f32 %v934, %v956
    %v1006 = vadd.f32 %v935, %v956
    %v1007 = vadd.f32 %v936, %v956
    %v1008 = vadd.f32 %v937, %v956
    %v1009 = vadd.f32 %v938, %v956
    %v1010 = vadd.f32 %v939, %v956
    %v1011 = vadd.f32 %v940, %v956
    %v1012 = vadd.f32 %v941, %v956
    %v1013 = vadd.f32 %v942, %v956
    %v1014 = vadd.f32 %v943, %v956
    %v1015 = vadd.f32 %v944, %v956
    %v1016 = vadd.f32 %v945, %v956
    %v1017 = vadd.f32 %v946, %v956
    %v1018 = vadd.f32 %v947, %v956
    %v1019 = vadd.f32 %v948, %v956
    %v1020 = vadd.f32 %v949, %v956
    %v1021 = vadd.f32 %v950, %v956
    %1022 = vst [vmem:[%s3] sm:$0xff] %v958
    %1023 = vst [vmem:[%s3 + $0x8] sm:$0xff] %v959
    %1024 = vst [vmem:[%s3 + $0x10] sm:$0xff] %v960
    %1025 = vst [vmem:[%s3 + $0x18] sm:$0xff] %v961
    %1026 = vst [vmem:[%s3 + $0x20] sm:$0xff] %v962
    %1027 = vst [vmem:[%s3 + $0x28] sm:$0xff] %v963
    %1028 = vst [vmem:[%s3 + $0x30] sm:$0xff] %v964
    %1029 = vst [vmem:[%s3 + $0x38] sm:$0xff] %v965
    %1030 = vst [vmem:[%s3 + $0x40] sm:$0xff] %v966
    %1031 = vst [vmem:[%s3 + $0x48] sm:$0xff] %v967
    %1032 = vst [vmem:[%s3 + $0x50] sm:$0xff] %v968
    %1033 = vst [vmem:[%s3 + $0x58] sm:$0xff] %v969
    %1034 = vst [vmem:[%s3 + $0x60] sm:$0xff] %v970
    %1035 = vst [vmem:[%s3 + $0x68] sm:$0xff] %v971
    %1036 = vst [vmem:[%s3 + $0x70] sm:$0xff] %v972
    %1037 = vst [vmem:[%s3 + $0x78] sm:$0xff] %v973
    %1038 = vst [vmem:[%s3 + $0x80] sm:$0xff] %v974
    %1039 = vst [vmem:[%s3 + $0x88] sm:$0xff] %v975
    %1040 = vst [vmem:[%s3 + $0x90] sm:$0xff] %v976
    %1041 = vst [vmem:[%s3 + $0x98] sm:$0xff] %v977
    %1042 = vst [vmem:[%s3 + $0xa0] sm:$0xff] %v978
    %1043 = vst [vmem:[%s3 + $0xa8] sm:$0xff] %v979
    %1044 = vst [vmem:[%s3 + $0xb0] sm:$0xff] %v980
    %1045 = vst [vmem:[%s3 + $0xb8] sm:$0xff] %v981
    %1046 = vst [vmem:[%s3 + $0xc0] sm:$0xff] %v982
    %1047 = vst [vmem:[%s3 + $0xc8] sm:$0xff] %v983
    %1048 = vst [vmem:[%s3 + $0xd0] sm:$0xff] %v984
    %1049 = vst [vmem:[%s3 + $0xd8] sm:$0xff] %v985
    %1050 = vst [vmem:[%s3 + $0xe0] sm:$0xff] %v986
    %1051 = vst [vmem:[%s3 + $0xe8] sm:$0xff] %v987
    %1052 = vst [vmem:[%s3 + $0xf0] sm:$0xff] %v988
    %1053 = vst [vmem:[%s3 + $0xf8] sm:$0xff] %v989
    %1054 = vst [vmem:[%s3 + $0x100] sm:$0xff] %v990
    %1055 = vst [vmem:[%s3 + $0x108] sm:$0xff] %v991
    %1056 = vst [vmem:[%s3 + $0x110] sm:$0xff] %v992
    %1057 = vst [vmem:[%s3 + $0x118] sm:$0xff] %v993
    %1058 = vst [vmem:[%s3 + $0x120] sm:$0xff] %v994
    %1059 = vst [vmem:[%s3 + $0x128] sm:$0xff] %v995
    %1060 = vst [vmem:[%s3 + $0x130] sm:$0xff] %v996
    %1061 = vst [vmem:[%s3 + $0x138] sm:$0xff] %v997
    %1062 = vst [vmem:[%s3 + $0x140] sm:$0xff] %v998
    %1063 = vst [vmem:[%s3 + $0x148] sm:$0xff] %v999
    %1064 = vst [vmem:[%s3 + $0x150] sm:$0xff] %v1000
    %1065 = vst [vmem:[%s3 + $0x158] sm:$0xff] %v1001
    %1066 = vst [vmem:[%s3 + $0x160] sm:$0xff] %v1002
    %1067 = vst [vmem:[%s3 + $0x168] sm:$0xff] %v1003
    %1068 = vst [vmem:[%s3 + $0x170] sm:$0xff] %v1004
    %1069 = vst [vmem:[%s3 + $0x178] sm:$0xff] %v1005
    %1070 = vst [vmem:[%s3 + $0x180] sm:$0xff] %v1006
    %1071 = vst [vmem:[%s3 + $0x188] sm:$0xff] %v1007
    %1072 = vst [vmem:[%s3 + $0x190] sm:$0xff] %v1008
    %1073 = vst [vmem:[%s3 + $0x198] sm:$0xff] %v1009
    %1074 = vst [vmem:[%s3 + $0x1a0] sm:$0xff] %v1010
    %1075 = vst [vmem:[%s3 + $0x1a8] sm:$0xff] %v1011
    %1076 = vst [vmem:[%s3 + $0x1b0] sm:$0xff] %v1012
    %1077 = vst [vmem:[%s3 + $0x1b8] sm:$0xff] %v1013
    %1078 = vst [vmem:[%s3 + $0x1c0] sm:$0xff] %v1014
    %1079 = vst [vmem:[%s3 + $0x1c8] sm:$0xff] %v1015
    %1080 = vst [vmem:[%s3 + $0x1d0] sm:$0xff] %v1016
    %1081 = vst [vmem:[%s3 + $0x1d8] sm:$0xff] %v1017
    %1082 = vst [vmem:[%s3 + $0x1e0] sm:$0xff] %v1018
    %1083 = vst [vmem:[%s3 + $0x1e8] sm:$0xff] %v1019
    %1084 = vst [vmem:[%s3 + $0x1f0] sm:$0xff] %v1020
    %1085 = vst [vmem:[%s3 + $0x1f8] sm:$0xff] %v1021
  $region21: #{res_up_forward.5} parent=0 // pred_fallthru
    _
  // Predicated region
  $region22: #{res_up_forward.5} parent=0 // pred_check
    _
  $region23: #{res_up_forward.5} parent=0 // pred_check_branch
    %1087 = sbr.rel (0) target = $region25
  $region24: #{res_up_forward.5} parent=0 // pred_region
    _
  $region25: #{res_up_forward.5} parent=0 // pred_fallthru
    _
  // Predicated region
  $region26: #{res_up_forward.5} parent=0 // pred_check
    _
  $region27: #{res_up_forward.5} parent=0 // pred_check_branch
    %1089 = sbr.rel (0) target = $region29
  $region28: #{res_up_forward.5} parent=0 // pred_region
    _
  $region29: #{res_up_forward.5} parent=0 // pred_fallthru
    _

// kernel: res_up_forward.7
$region0: #{res_up_forward.7}
  #allocation0 [shape = 'u32[]', space=smem, size = 0x4, offset = 0x4, fixed_abs, tag = 'smem constant byte address 0x4 - core index']
  #allocation1 [shape = 'u32[144,128]{1,0:T(1,128)}', space=vmem, size = 0x12000, scoped, tag = 'internal scratch']
  #allocation2 [shape = 'f32[512,128]{1,0:T(8,128)}', space=vmem, size = 0x40000, scoped, tag = 'scratch operand']
  %s0 = inlined_call_operand.vmem [shape: bf16[512,128], index: 0, kind: input, shape index: {}]
  %s1 = inlined_call_operand.vmem [shape: bf16[128,128], index: 1, kind: input, shape index: {}]
  %s2 = inlined_call_operand.vmem [shape: f32[1,128], index: 2, kind: input, shape index: {}]
  %s3 = inlined_call_operand.vmem [shape: f32[512,128], index: 3, kind: input, shape index: {}]
  %s4 = inlined_call_operand.vmem [shape: f32[512,128], index: 4, kind: output, shape index: {}]
  %s5 = sld [smem:[#allocation0]]
  $region34: #{res_up_forward.7} parent=0
    _
  %s7 = ssub.s32 1, %s5
  %s8 = scalar_select 0, %s7, %s5
  // Predicated region
  $region2: #{res_up_forward.7} parent=0 // pred_check
    _
  $region3: #{res_up_forward.7} parent=0 // pred_check_branch
    %10 = sbr.rel (0) target = $region5
  $region4: #{res_up_forward.7} parent=0 // pred_region
    _
  $region5: #{res_up_forward.7} parent=0 // pred_fallthru
    _
  // Predicated region
  $region6: #{res_up_forward.7} parent=0 // pred_check
    _
  $region7: #{res_up_forward.7} parent=0 // pred_check_branch
    %12 = sbr.rel (0) target = $region9
  $region8: #{res_up_forward.7} parent=0 // pred_region
    _
  $region9: #{res_up_forward.7} parent=0 // pred_fallthru
    _
  // Predicated region
  $region10: #{res_up_forward.7} parent=0 // pred_check
    _
  $region11: #{res_up_forward.7} parent=0 // pred_check_branch
    %14 = sbr.rel (0) target = $region13
  $region12: #{res_up_forward.7} parent=0 // pred_region
    _
  $region13: #{res_up_forward.7} parent=0 // pred_fallthru
    _
  // Predicated region
  $region14: #{res_up_forward.7} parent=0 // pred_check
    _
  $region15: #{res_up_forward.7} parent=0 // pred_check_branch
    %16 = sbr.rel (0) target = $region17
  $region16: #{res_up_forward.7} parent=0 // pred_region
    _
  $region17: #{res_up_forward.7} parent=0 // pred_fallthru
    _
  %p18 = scmp.eq.s32.totalorder 0, 0
  // Predicated region
  $region18: #{res_up_forward.7} parent=0 // pred_check
    %p19 = pneg %p18
  $region19: #{res_up_forward.7} parent=0 // pred_check_branch
    %21 = sbr.rel (%p19) target = $region21
  $region20: #{res_up_forward.7} parent=0 // pred_region
    %22 = vst [vmem:[#allocation2] sm:$0xff] 0.0
    %23 = vst [vmem:[#allocation2 + $0x8] sm:$0xff] 0.0
    %24 = vst [vmem:[#allocation2 + $0x10] sm:$0xff] 0.0
    %25 = vst [vmem:[#allocation2 + $0x18] sm:$0xff] 0.0
    %26 = vst [vmem:[#allocation2 + $0x20] sm:$0xff] 0.0
    %27 = vst [vmem:[#allocation2 + $0x28] sm:$0xff] 0.0
    %28 = vst [vmem:[#allocation2 + $0x30] sm:$0xff] 0.0
    %29 = vst [vmem:[#allocation2 + $0x38] sm:$0xff] 0.0
    %30 = vst [vmem:[#allocation2 + $0x40] sm:$0xff] 0.0
    %31 = vst [vmem:[#allocation2 + $0x48] sm:$0xff] 0.0
    %32 = vst [vmem:[#allocation2 + $0x50] sm:$0xff] 0.0
    %33 = vst [vmem:[#allocation2 + $0x58] sm:$0xff] 0.0
    %34 = vst [vmem:[#allocation2 + $0x60] sm:$0xff] 0.0
    %35 = vst [vmem:[#allocation2 + $0x68] sm:$0xff] 0.0
    %36 = vst [vmem:[#allocation2 + $0x70] sm:$0xff] 0.0
    %37 = vst [vmem:[#allocation2 + $0x78] sm:$0xff] 0.0
    %38 = vst [vmem:[#allocation2 + $0x80] sm:$0xff] 0.0
    %39 = vst [vmem:[#allocation2 + $0x88] sm:$0xff] 0.0
    %40 = vst [vmem:[#allocation2 + $0x90] sm:$0xff] 0.0
    %41 = vst [vmem:[#allocation2 + $0x98] sm:$0xff] 0.0
    %42 = vst [vmem:[#allocation2 + $0xa0] sm:$0xff] 0.0
    %43 = vst [vmem:[#allocation2 + $0xa8] sm:$0xff] 0.0
    %44 = vst [vmem:[#allocation2 + $0xb0] sm:$0xff] 0.0
    %45 = vst [vmem:[#allocation2 + $0xb8] sm:$0xff] 0.0
    %46 = vst [vmem:[#allocation2 + $0xc0] sm:$0xff] 0.0
    %47 = vst [vmem:[#allocation2 + $0xc8] sm:$0xff] 0.0
    %48 = vst [vmem:[#allocation2 + $0xd0] sm:$0xff] 0.0
    %49 = vst [vmem:[#allocation2 + $0xd8] sm:$0xff] 0.0
    %50 = vst [vmem:[#allocation2 + $0xe0] sm:$0xff] 0.0
    %51 = vst [vmem:[#allocation2 + $0xe8] sm:$0xff] 0.0
    %52 = vst [vmem:[#allocation2 + $0xf0] sm:$0xff] 0.0
    %53 = vst [vmem:[#allocation2 + $0xf8] sm:$0xff] 0.0
    %54 = vst [vmem:[#allocation2 + $0x100] sm:$0xff] 0.0
    %55 = vst [vmem:[#allocation2 + $0x108] sm:$0xff] 0.0
    %56 = vst [vmem:[#allocation2 + $0x110] sm:$0xff] 0.0
    %57 = vst [vmem:[#allocation2 + $0x118] sm:$0xff] 0.0
    %58 = vst [vmem:[#allocation2 + $0x120] sm:$0xff] 0.0
    %59 = vst [vmem:[#allocation2 + $0x128] sm:$0xff] 0.0
    %60 = vst [vmem:[#allocation2 + $0x130] sm:$0xff] 0.0
    %61 = vst [vmem:[#allocation2 + $0x138] sm:$0xff] 0.0
    %62 = vst [vmem:[#allocation2 + $0x140] sm:$0xff] 0.0
    %63 = vst [vmem:[#allocation2 + $0x148] sm:$0xff] 0.0
    %64 = vst [vmem:[#allocation2 + $0x150] sm:$0xff] 0.0
    %65 = vst [vmem:[#allocation2 + $0x158] sm:$0xff] 0.0
    %66 = vst [vmem:[#allocation2 + $0x160] sm:$0xff] 0.0
    %67 = vst [vmem:[#allocation2 + $0x168] sm:$0xff] 0.0
    %68 = vst [vmem:[#allocation2 + $0x170] sm:$0xff] 0.0
    %69 = vst [vmem:[#allocation2 + $0x178] sm:$0xff] 0.0
    %70 = vst [vmem:[#allocation2 + $0x180] sm:$0xff] 0.0
    %71 = vst [vmem:[#allocation2 + $0x188] sm:$0xff] 0.0
    %72 = vst [vmem:[#allocation2 + $0x190] sm:$0xff] 0.0
    %73 = vst [vmem:[#allocation2 + $0x198] sm:$0xff] 0.0
    %74 = vst [vmem:[#allocation2 + $0x1a0] sm:$0xff] 0.0
    %75 = vst [vmem:[#allocation2 + $0x1a8] sm:$0xff] 0.0
    %76 = vst [vmem:[#allocation2 + $0x1b0] sm:$0xff] 0.0
    %77 = vst [vmem:[#allocation2 + $0x1b8] sm:$0xff] 0.0
    %78 = vst [vmem:[#allocation2 + $0x1c0] sm:$0xff] 0.0
    %79 = vst [vmem:[#allocation2 + $0x1c8] sm:$0xff] 0.0
    %80 = vst [vmem:[#allocation2 + $0x1d0] sm:$0xff] 0.0
    %81 = vst [vmem:[#allocation2 + $0x1d8] sm:$0xff] 0.0
    %82 = vst [vmem:[#allocation2 + $0x1e0] sm:$0xff] 0.0
    %83 = vst [vmem:[#allocation2 + $0x1e8] sm:$0xff] 0.0
    %84 = vst [vmem:[#allocation2 + $0x1f0] sm:$0xff] 0.0
    %85 = vst [vmem:[#allocation2 + $0x1f8] sm:$0xff] 0.0
  $region21: #{res_up_forward.7} parent=0 // pred_fallthru
    _
  %v86 = vld [vmem:[#allocation2] sm:$0xff]
  %v87 = vld [vmem:[#allocation2 + $0x8] sm:$0xff]
  %v88 = vld [vmem:[#allocation2 + $0x10] sm:$0xff]
  %v89 = vld [vmem:[#allocation2 + $0x18] sm:$0xff]
  %v90 = vld [vmem:[#allocation2 + $0x20] sm:$0xff]
  %v91 = vld [vmem:[#allocation2 + $0x28] sm:$0xff]
  %v92 = vld [vmem:[#allocation2 + $0x30] sm:$0xff]
  %v93 = vld [vmem:[#allocation2 + $0x38] sm:$0xff]
  %v94 = vld [vmem:[#allocation2 + $0x40] sm:$0xff]
  %v95 = vld [vmem:[#allocation2 + $0x48] sm:$0xff]
  %v96 = vld [vmem:[#allocation2 + $0x50] sm:$0xff]
  %v97 = vld [vmem:[#allocation2 + $0x58] sm:$0xff]
  %v98 = vld [vmem:[#allocation2 + $0x60] sm:$0xff]
  %v99 = vld [vmem:[#allocation2 + $0x68] sm:$0xff]
  %v100 = vld [vmem:[#allocation2 + $0x70] sm:$0xff]
  %v101 = vld [vmem:[#allocation2 + $0x78] sm:$0xff]
  %v102 = vld [vmem:[#allocation2 + $0x80] sm:$0xff]
  %v103 = vld [vmem:[#allocation2 + $0x88] sm:$0xff]
  %v104 = vld [vmem:[#allocation2 + $0x90] sm:$0xff]
  %v105 = vld [vmem:[#allocation2 + $0x98] sm:$0xff]
  %v106 = vld [vmem:[#allocation2 + $0xa0] sm:$0xff]
  %v107 = vld [vmem:[#allocation2 + $0xa8] sm:$0xff]
  %v108 = vld [vmem:[#allocation2 + $0xb0] sm:$0xff]
  %v109 = vld [vmem:[#allocation2 + $0xb8] sm:$0xff]
  %v110 = vld [vmem:[#allocation2 + $0xc0] sm:$0xff]
  %v111 = vld [vmem:[#allocation2 + $0xc8] sm:$0xff]
  %v112 = vld [vmem:[#allocation2 + $0xd0] sm:$0xff]
  %v113 = vld [vmem:[#allocation2 + $0xd8] sm:$0xff]
  %v114 = vld [vmem:[#allocation2 + $0xe0] sm:$0xff]
  %v115 = vld [vmem:[#allocation2 + $0xe8] sm:$0xff]
  %v116 = vld [vmem:[#allocation2 + $0xf0] sm:$0xff]
  %v117 = vld [vmem:[#allocation2 + $0xf8] sm:$0xff]
  %v118 = vld [vmem:[#allocation2 + $0x100] sm:$0xff]
  %v119 = vld [vmem:[#allocation2 + $0x108] sm:$0xff]
  %v120 = vld [vmem:[#allocation2 + $0x110] sm:$0xff]
  %v121 = vld [vmem:[#allocation2 + $0x118] sm:$0xff]
  %v122 = vld [vmem:[#allocation2 + $0x120] sm:$0xff]
  %v123 = vld [vmem:[#allocation2 + $0x128] sm:$0xff]
  %v124 = vld [vmem:[#allocation2 + $0x130] sm:$0xff]
  %v125 = vld [vmem:[#allocation2 + $0x138] sm:$0xff]
  %v126 = vld [vmem:[#allocation2 + $0x140] sm:$0xff]
  %v127 = vld [vmem:[#allocation2 + $0x148] sm:$0xff]
  %v128 = vld [vmem:[#allocation2 + $0x150] sm:$0xff]
  %v129 = vld [vmem:[#allocation2 + $0x158] sm:$0xff]
  %v130 = vld [vmem:[#allocation2 + $0x160] sm:$0xff]
  %v131 = vld [vmem:[#allocation2 + $0x168] sm:$0xff]
  %v132 = vld [vmem:[#allocation2 + $0x170] sm:$0xff]
  %v133 = vld [vmem:[#allocation2 + $0x178] sm:$0xff]
  %v134 = vld [vmem:[#allocation2 + $0x180] sm:$0xff]
  %v135 = vld [vmem:[#allocation2 + $0x188] sm:$0xff]
  %v136 = vld [vmem:[#allocation2 + $0x190] sm:$0xff]
  %v137 = vld [vmem:[#allocation2 + $0x198] sm:$0xff]
  %v138 = vld [vmem:[#allocation2 + $0x1a0] sm:$0xff]
  %v139 = vld [vmem:[#allocation2 + $0x1a8] sm:$0xff]
  %v140 = vld [vmem:[#allocation2 + $0x1b0] sm:$0xff]
  %v141 = vld [vmem:[#allocation2 + $0x1b8] sm:$0xff]
  %v142 = vld [vmem:[#allocation2 + $0x1c0] sm:$0xff]
  %v143 = vld [vmem:[#allocation2 + $0x1c8] sm:$0xff]
  %v144 = vld [vmem:[#allocation2 + $0x1d0] sm:$0xff]
  %v145 = vld [vmem:[#allocation2 + $0x1d8] sm:$0xff]
  %v146 = vld [vmem:[#allocation2 + $0x1e0] sm:$0xff]
  %v147 = vld [vmem:[#allocation2 + $0x1e8] sm:$0xff]
  %v148 = vld [vmem:[#allocation2 + $0x1f0] sm:$0xff]
  %v149 = vld [vmem:[#allocation2 + $0x1f8] sm:$0xff]
  %v150 = vld [vmem:[%s0] sm:$0xf]
  %v151 = vld [vmem:[%s0 + $0x4] sm:$0xf]
  %v152 = vld [vmem:[%s0 + $0x8] sm:$0xf]
  %v153 = vld [vmem:[%s0 + $0xc] sm:$0xf]
  %v154 = vld [vmem:[%s0 + $0x10] sm:$0xf]
  %v155 = vld [vmem:[%s0 + $0x14] sm:$0xf]
  %v156 = vld [vmem:[%s0 + $0x18] sm:$0xf]
  %v157 = vld [vmem:[%s0 + $0x1c] sm:$0xf]
  %v158 = vld [vmem:[%s0 + $0x20] sm:$0xf]
  %v159 = vld [vmem:[%s0 + $0x24] sm:$0xf]
  %v160 = vld [vmem:[%s0 + $0x28] sm:$0xf]
  %v161 = vld [vmem:[%s0 + $0x2c] sm:$0xf]
  %v162 = vld [vmem:[%s0 + $0x30] sm:$0xf]
  %v163 = vld [vmem:[%s0 + $0x34] sm:$0xf]
  %v164 = vld [vmem:[%s0 + $0x38] sm:$0xf]
  %v165 = vld [vmem:[%s0 + $0x3c] sm:$0xf]
  %v166 = vld [vmem:[%s0 + $0x40] sm:$0xf]
  %v167 = vld [vmem:[%s0 + $0x44] sm:$0xf]
  %v168 = vld [vmem:[%s0 + $0x48] sm:$0xf]
  %v169 = vld [vmem:[%s0 + $0x4c] sm:$0xf]
  %v170 = vld [vmem:[%s0 + $0x50] sm:$0xf]
  %v171 = vld [vmem:[%s0 + $0x54] sm:$0xf]
  %v172 = vld [vmem:[%s0 + $0x58] sm:$0xf]
  %v173 = vld [vmem:[%s0 + $0x5c] sm:$0xf]
  %v174 = vld [vmem:[%s0 + $0x60] sm:$0xf]
  %v175 = vld [vmem:[%s0 + $0x64] sm:$0xf]
  %v176 = vld [vmem:[%s0 + $0x68] sm:$0xf]
  %v177 = vld [vmem:[%s0 + $0x6c] sm:$0xf]
  %v178 = vld [vmem:[%s0 + $0x70] sm:$0xf]
  %v179 = vld [vmem:[%s0 + $0x74] sm:$0xf]
  %v180 = vld [vmem:[%s0 + $0x78] sm:$0xf]
  %v181 = vld [vmem:[%s0 + $0x7c] sm:$0xf]
  %v182 = vld [vmem:[%s0 + $0x80] sm:$0xf]
  %v183 = vld [vmem:[%s0 + $0x84] sm:$0xf]
  %v184 = vld [vmem:[%s0 + $0x88] sm:$0xf]
  %v185 = vld [vmem:[%s0 + $0x8c] sm:$0xf]
  %v186 = vld [vmem:[%s0 + $0x90] sm:$0xf]
  %v187 = vld [vmem:[%s0 + $0x94] sm:$0xf]
  %v188 = vld [vmem:[%s0 + $0x98] sm:$0xf]
  %v189 = vld [vmem:[%s0 + $0x9c] sm:$0xf]
  %v190 = vld [vmem:[%s0 + $0xa0] sm:$0xf]
  %v191 = vld [vmem:[%s0 + $0xa4] sm:$0xf]
  %v192 = vld [vmem:[%s0 + $0xa8] sm:$0xf]
  %v193 = vld [vmem:[%s0 + $0xac] sm:$0xf]
  %v194 = vld [vmem:[%s0 + $0xb0] sm:$0xf]
  %v195 = vld [vmem:[%s0 + $0xb4] sm:$0xf]
  %v196 = vld [vmem:[%s0 + $0xb8] sm:$0xf]
  %v197 = vld [vmem:[%s0 + $0xbc] sm:$0xf]
  %v198 = vld [vmem:[%s0 + $0xc0] sm:$0xf]
  %v199 = vld [vmem:[%s0 + $0xc4] sm:$0xf]
  %v200 = vld [vmem:[%s0 + $0xc8] sm:$0xf]
  %v201 = vld [vmem:[%s0 + $0xcc] sm:$0xf]
  %v202 = vld [vmem:[%s0 + $0xd0] sm:$0xf]
  %v203 = vld [vmem:[%s0 + $0xd4] sm:$0xf]
  %v204 = vld [vmem:[%s0 + $0xd8] sm:$0xf]
  %v205 = vld [vmem:[%s0 + $0xdc] sm:$0xf]
  %v206 = vld [vmem:[%s0 + $0xe0] sm:$0xf]
  %v207 = vld [vmem:[%s0 + $0xe4] sm:$0xf]
  %v208 = vld [vmem:[%s0 + $0xe8] sm:$0xf]
  %v209 = vld [vmem:[%s0 + $0xec] sm:$0xf]
  %v210 = vld [vmem:[%s0 + $0xf0] sm:$0xf]
  %v211 = vld [vmem:[%s0 + $0xf4] sm:$0xf]
  %v212 = vld [vmem:[%s0 + $0xf8] sm:$0xf]
  %v213 = vld [vmem:[%s0 + $0xfc] sm:$0xf]
  %v214 = vld [vmem:[%s1] sm:$0xf]
  %v215 = vld [vmem:[%s1 + $0x4] sm:$0xf]
  %v216 = vld [vmem:[%s1 + $0x8] sm:$0xf]
  %v217 = vld [vmem:[%s1 + $0xc] sm:$0xf]
  %v218 = vld [vmem:[%s1 + $0x10] sm:$0xf]
  %v219 = vld [vmem:[%s1 + $0x14] sm:$0xf]
  %v220 = vld [vmem:[%s1 + $0x18] sm:$0xf]
  %v221 = vld [vmem:[%s1 + $0x1c] sm:$0xf]
  %v222 = vld [vmem:[%s1 + $0x20] sm:$0xf]
  %v223 = vld [vmem:[%s1 + $0x24] sm:$0xf]
  %v224 = vld [vmem:[%s1 + $0x28] sm:$0xf]
  %v225 = vld [vmem:[%s1 + $0x2c] sm:$0xf]
  %v226 = vld [vmem:[%s1 + $0x30] sm:$0xf]
  %v227 = vld [vmem:[%s1 + $0x34] sm:$0xf]
  %v228 = vld [vmem:[%s1 + $0x38] sm:$0xf]
  %v229 = vld [vmem:[%s1 + $0x3c] sm:$0xf]
  %v294 = vunpack.c.l.b16 %v150
  %v295 = vunpack.c.l.b16 %v151
  %v296 = vunpack.c.l.b16 %v152
  %v297 = vunpack.c.l.b16 %v153
  %v298 = vunpack.c.l.b16 %v154
  %v299 = vunpack.c.l.b16 %v155
  %v300 = vunpack.c.l.b16 %v156
  %v301 = vunpack.c.l.b16 %v157
  %v302 = vunpack.c.l.b16 %v158
  %v303 = vunpack.c.l.b16 %v159
  %v304 = vunpack.c.l.b16 %v160
  %v305 = vunpack.c.l.b16 %v161
  %v306 = vunpack.c.l.b16 %v162
  %v307 = vunpack.c.l.b16 %v163
  %v308 = vunpack.c.l.b16 %v164
  %v309 = vunpack.c.l.b16 %v165
  %v310 = vunpack.c.l.b16 %v166
  %v311 = vunpack.c.l.b16 %v167
  %v312 = vunpack.c.l.b16 %v168
  %v313 = vunpack.c.l.b16 %v169
  %v314 = vunpack.c.l.b16 %v170
  %v315 = vunpack.c.l.b16 %v171
  %v316 = vunpack.c.l.b16 %v172
  %v317 = vunpack.c.l.b16 %v173
  %v318 = vunpack.c.l.b16 %v174
  %v319 = vunpack.c.l.b16 %v175
  %v320 = vunpack.c.l.b16 %v176
  %v321 = vunpack.c.l.b16 %v177
  %v322 = vunpack.c.l.b16 %v178
  %v323 = vunpack.c.l.b16 %v179
  %v324 = vunpack.c.l.b16 %v180
  %v325 = vunpack.c.l.b16 %v181
  %v326 = vunpack.c.l.b16 %v182
  %v327 = vunpack.c.l.b16 %v183
  %v328 = vunpack.c.l.b16 %v184
  %v329 = vunpack.c.l.b16 %v185
  %v330 = vunpack.c.l.b16 %v186
  %v331 = vunpack.c.l.b16 %v187
  %v332 = vunpack.c.l.b16 %v188
  %v333 = vunpack.c.l.b16 %v189
  %v334 = vunpack.c.l.b16 %v190
  %v335 = vunpack.c.l.b16 %v191
  %v336 = vunpack.c.l.b16 %v192
  %v337 = vunpack.c.l.b16 %v193
  %v338 = vunpack.c.l.b16 %v194
  %v339 = vunpack.c.l.b16 %v195
  %v340 = vunpack.c.l.b16 %v196
  %v341 = vunpack.c.l.b16 %v197
  %v342 = vunpack.c.l.b16 %v198
  %v343 = vunpack.c.l.b16 %v199
  %v344 = vunpack.c.l.b16 %v200
  %v345 = vunpack.c.l.b16 %v201
  %v346 = vunpack.c.l.b16 %v202
  %v347 = vunpack.c.l.b16 %v203
  %v348 = vunpack.c.l.b16 %v204
  %v349 = vunpack.c.l.b16 %v205
  %v350 = vunpack.c.l.b16 %v206
  %v351 = vunpack.c.l.b16 %v207
  %v352 = vunpack.c.l.b16 %v208
  %v353 = vunpack.c.l.b16 %v209
  %v354 = vunpack.c.l.b16 %v210
  %v355 = vunpack.c.l.b16 %v211
  %v356 = vunpack.c.l.b16 %v212
  %v357 = vunpack.c.l.b16 %v213
  %v358 = vpack.c.b16 %v295, %v294
  %v359 = vpack.c.b16 %v297, %v296
  %v360 = vpack.c.b16 %v299, %v298
  %v361 = vpack.c.b16 %v301, %v300
  %v362 = vpack.c.b16 %v303, %v302
  %v363 = vpack.c.b16 %v305, %v304
  %v364 = vpack.c.b16 %v307, %v306
  %v365 = vpack.c.b16 %v309, %v308
  %v366 = vpack.c.b16 %v311, %v310
  %v367 = vpack.c.b16 %v313, %v312
  %v368 = vpack.c.b16 %v315, %v314
  %v369 = vpack.c.b16 %v317, %v316
  %v370 = vpack.c.b16 %v319, %v318
  %v371 = vpack.c.b16 %v321, %v320
  %v372 = vpack.c.b16 %v323, %v322
  %v373 = vpack.c.b16 %v325, %v324
  %v374 = vpack.c.b16 %v327, %v326
  %v375 = vpack.c.b16 %v329, %v328
  %v376 = vpack.c.b16 %v331, %v330
  %v377 = vpack.c.b16 %v333, %v332
  %v378 = vpack.c.b16 %v335, %v334
  %v379 = vpack.c.b16 %v337, %v336
  %v380 = vpack.c.b16 %v339, %v338
  %v381 = vpack.c.b16 %v341, %v340
  %v382 = vpack.c.b16 %v343, %v342
  %v383 = vpack.c.b16 %v345, %v344
  %v384 = vpack.c.b16 %v347, %v346
  %v385 = vpack.c.b16 %v349, %v348
  %v386 = vpack.c.b16 %v351, %v350
  %v387 = vpack.c.b16 %v353, %v352
  %v388 = vpack.c.b16 %v355, %v354
  %v389 = vpack.c.b16 %v357, %v356
  %v438 = vunpack.c.l.b16 %v214
  %v439 = vunpack.c.l.b16 %v215
  %v440 = vunpack.c.l.b16 %v216
  %v441 = vunpack.c.l.b16 %v217
  %v442 = vunpack.c.l.b16 %v218
  %v443 = vunpack.c.l.b16 %v219
  %v444 = vunpack.c.l.b16 %v220
  %v445 = vunpack.c.l.b16 %v221
  %v446 = vunpack.c.l.b16 %v222
  %v447 = vunpack.c.l.b16 %v223
  %v448 = vunpack.c.l.b16 %v224
  %v449 = vunpack.c.l.b16 %v225
  %v450 = vunpack.c.l.b16 %v226
  %v451 = vunpack.c.l.b16 %v227
  %v452 = vunpack.c.l.b16 %v228
  %v453 = vunpack.c.l.b16 %v229
  %v454 = vpack.c.b16 %v439, %v438
  %v455 = vpack.c.b16 %v441, %v440
  %v456 = vpack.c.b16 %v443, %v442
  %v457 = vpack.c.b16 %v445, %v444
  %v458 = vpack.c.b16 %v447, %v446
  %v459 = vpack.c.b16 %v449, %v448
  %v460 = vpack.c.b16 %v451, %v450
  %v461 = vpack.c.b16 %v453, %v452
  %470 = vmatprep.subr.bf16.mxu0 0
  %471 = vmatpush1.bf16.msra.mxu0 %v461
  %472 = vmatprep.subr.bf16.mxu0 0
  %473 = vmatpush1.bf16.msra.mxu0 %v460
  %474 = vmatprep.subr.bf16.mxu0 0
  %475 = vmatpush1.bf16.msra.mxu0 %v459
  %476 = vmatprep.subr.bf16.mxu0 0
  %477 = vmatpush1.bf16.msra.mxu0 %v458
  %478 = vmatprep.subr.bf16.mxu0 0
  %479 = vmatpush1.bf16.msra.mxu0 %v457
  %480 = vmatprep.subr.bf16.mxu0 0
  %481 = vmatpush1.bf16.msra.mxu0 %v456
  %482 = vmatprep.subr.bf16.mxu0 0
  %483 = vmatpush1.bf16.msra.mxu0 %v455
  %484 = vmatprep.subr.bf16.mxu0 0
  %485 = vmatpush1.bf16.msra.mxu0 %v454
  %486 = vmatprep.subr.bf16.mxu0 0
  %487 = vmatpush2.bf16.msra.mxu0 0
  %488 = vmatprep.subr.bf16.mxu0 0
  %489 = vmatpush2.bf16.msra.mxu0 0
  %490 = vmatprep.subr.bf16.mxu0 0
  %491 = vmatpush2.bf16.msra.mxu0 0
  %492 = vmatprep.subr.bf16.mxu0 0
  %493 = vmatpush2.bf16.msra.mxu0 0
  %494 = vmatprep.subr.bf16.mxu0 0
  %495 = vmatpush2.bf16.msra.mxu0 0
  %496 = vmatprep.subr.bf16.mxu0 0
  %497 = vmatpush2.bf16.msra.mxu0 0
  %498 = vmatprep.subr.bf16.mxu0 0
  %499 = vmatpush2.bf16.msra.mxu0 0
  %500 = vmatprep.subr.bf16.mxu0 0
  %501 = vmatpush2.bf16.msra.mxu0 0
  %502 = vmatprep.mubr.bf16.mxu0 0
  %503 = vmatmul.mubr.bf16.gmra.mxu0 %v358
  %v504 = vpop.f32.mrf.mxu0
  %v505 = vadd.f32 0.0, %v504
  %v506 = vpop.f32.mrf.mxu0
  %v507 = vpop.f32.mrf.mxu0
  %v508 = vadd.f32 0.0, %v507
  %v509 = vpop.f32.mrf.mxu0
  %510 = vmatprep.mubr.bf16.mxu0 0
  %511 = vmatmul.mubr.bf16.gmra.mxu0 %v359
  %v512 = vpop.f32.mrf.mxu0
  %v513 = vadd.f32 0.0, %v512
  %v514 = vpop.f32.mrf.mxu0
  %v515 = vpop.f32.mrf.mxu0
  %v516 = vadd.f32 0.0, %v515
  %v517 = vpop.f32.mrf.mxu0
  %518 = vmatprep.mubr.bf16.mxu0 0
  %519 = vmatmul.mubr.bf16.gmra.mxu0 %v360
  %v520 = vpop.f32.mrf.mxu0
  %v521 = vadd.f32 0.0, %v520
  %v522 = vpop.f32.mrf.mxu0
  %v523 = vpop.f32.mrf.mxu0
  %v524 = vadd.f32 0.0, %v523
  %v525 = vpop.f32.mrf.mxu0
  %526 = vmatprep.mubr.bf16.mxu0 0
  %527 = vmatmul.mubr.bf16.gmra.mxu0 %v361
  %v528 = vpop.f32.mrf.mxu0
  %v529 = vadd.f32 0.0, %v528
  %v530 = vpop.f32.mrf.mxu0
  %v531 = vpop.f32.mrf.mxu0
  %v532 = vadd.f32 0.0, %v531
  %v533 = vpop.f32.mrf.mxu0
  %534 = vmatprep.mubr.bf16.mxu0 0
  %535 = vmatmul.mubr.bf16.gmra.mxu0 %v362
  %v536 = vpop.f32.mrf.mxu0
  %v537 = vadd.f32 0.0, %v536
  %v538 = vpop.f32.mrf.mxu0
  %v539 = vpop.f32.mrf.mxu0
  %v540 = vadd.f32 0.0, %v539
  %v541 = vpop.f32.mrf.mxu0
  %542 = vmatprep.mubr.bf16.mxu0 0
  %543 = vmatmul.mubr.bf16.gmra.mxu0 %v363
  %v544 = vpop.f32.mrf.mxu0
  %v545 = vadd.f32 0.0, %v544
  %v546 = vpop.f32.mrf.mxu0
  %v547 = vpop.f32.mrf.mxu0
  %v548 = vadd.f32 0.0, %v547
  %v549 = vpop.f32.mrf.mxu0
  %550 = vmatprep.mubr.bf16.mxu0 0
  %551 = vmatmul.mubr.bf16.gmra.mxu0 %v364
  %v552 = vpop.f32.mrf.mxu0
  %v553 = vadd.f32 0.0, %v552
  %v554 = vpop.f32.mrf.mxu0
  %v555 = vpop.f32.mrf.mxu0
  %v556 = vadd.f32 0.0, %v555
  %v557 = vpop.f32.mrf.mxu0
  %558 = vmatprep.mubr.bf16.mxu0 0
  %559 = vmatmul.mubr.bf16.gmra.mxu0 %v365
  %v560 = vpop.f32.mrf.mxu0
  %v561 = vadd.f32 0.0, %v560
  %v562 = vpop.f32.mrf.mxu0
  %v563 = vpop.f32.mrf.mxu0
  %v564 = vadd.f32 0.0, %v563
  %v565 = vpop.f32.mrf.mxu0
  %566 = vmatprep.mubr.bf16.mxu0 0
  %567 = vmatmul.mubr.bf16.gmra.mxu0 %v366
  %v568 = vpop.f32.mrf.mxu0
  %v569 = vadd.f32 0.0, %v568
  %v570 = vpop.f32.mrf.mxu0
  %v571 = vpop.f32.mrf.mxu0
  %v572 = vadd.f32 0.0, %v571
  %v573 = vpop.f32.mrf.mxu0
  %574 = vmatprep.mubr.bf16.mxu0 0
  %575 = vmatmul.mubr.bf16.gmra.mxu0 %v367
  %v576 = vpop.f32.mrf.mxu0
  %v577 = vadd.f32 0.0, %v576
  %v578 = vpop.f32.mrf.mxu0
  %v579 = vpop.f32.mrf.mxu0
  %v580 = vadd.f32 0.0, %v579
  %v581 = vpop.f32.mrf.mxu0
  %582 = vmatprep.mubr.bf16.mxu0 0
  %583 = vmatmul.mubr.bf16.gmra.mxu0 %v368
  %v584 = vpop.f32.mrf.mxu0
  %v585 = vadd.f32 0.0, %v584
  %v586 = vpop.f32.mrf.mxu0
  %v587 = vpop.f32.mrf.mxu0
  %v588 = vadd.f32 0.0, %v587
  %v589 = vpop.f32.mrf.mxu0
  %590 = vmatprep.mubr.bf16.mxu0 0
  %591 = vmatmul.mubr.bf16.gmra.mxu0 %v369
  %v592 = vpop.f32.mrf.mxu0
  %v593 = vadd.f32 0.0, %v592
  %v594 = vpop.f32.mrf.mxu0
  %v595 = vpop.f32.mrf.mxu0
  %v596 = vadd.f32 0.0, %v595
  %v597 = vpop.f32.mrf.mxu0
  %598 = vmatprep.mubr.bf16.mxu0 0
  %599 = vmatmul.mubr.bf16.gmra.mxu0 %v370
  %v600 = vpop.f32.mrf.mxu0
  %v601 = vadd.f32 0.0, %v600
  %v602 = vpop.f32.mrf.mxu0
  %v603 = vpop.f32.mrf.mxu0
  %v604 = vadd.f32 0.0, %v603
  %v605 = vpop.f32.mrf.mxu0
  %606 = vmatprep.mubr.bf16.mxu0 0
  %607 = vmatmul.mubr.bf16.gmra.mxu0 %v371
  %v608 = vpop.f32.mrf.mxu0
  %v609 = vadd.f32 0.0, %v608
  %v610 = vpop.f32.mrf.mxu0
  %v611 = vpop.f32.mrf.mxu0
  %v612 = vadd.f32 0.0, %v611
  %v613 = vpop.f32.mrf.mxu0
  %614 = vmatprep.mubr.bf16.mxu0 0
  %615 = vmatmul.mubr.bf16.gmra.mxu0 %v372
  %v616 = vpop.f32.mrf.mxu0
  %v617 = vadd.f32 0.0, %v616
  %v618 = vpop.f32.mrf.mxu0
  %v619 = vpop.f32.mrf.mxu0
  %v620 = vadd.f32 0.0, %v619
  %v621 = vpop.f32.mrf.mxu0
  %622 = vmatprep.mubr.bf16.mxu0 0
  %623 = vmatmul.mubr.bf16.gmra.mxu0 %v373
  %v624 = vpop.f32.mrf.mxu0
  %v625 = vadd.f32 0.0, %v624
  %v626 = vpop.f32.mrf.mxu0
  %v627 = vpop.f32.mrf.mxu0
  %v628 = vadd.f32 0.0, %v627
  %v629 = vpop.f32.mrf.mxu0
  %630 = vmatprep.mubr.bf16.mxu0 0
  %631 = vmatmul.mubr.bf16.gmra.mxu0 %v374
  %v632 = vpop.f32.mrf.mxu0
  %v633 = vadd.f32 0.0, %v632
  %v634 = vpop.f32.mrf.mxu0
  %v635 = vpop.f32.mrf.mxu0
  %v636 = vadd.f32 0.0, %v635
  %v637 = vpop.f32.mrf.mxu0
  %638 = vmatprep.mubr.bf16.mxu0 0
  %639 = vmatmul.mubr.bf16.gmra.mxu0 %v375
  %v640 = vpop.f32.mrf.mxu0
  %v641 = vadd.f32 0.0, %v640
  %v642 = vpop.f32.mrf.mxu0
  %v643 = vpop.f32.mrf.mxu0
  %v644 = vadd.f32 0.0, %v643
  %v645 = vpop.f32.mrf.mxu0
  %646 = vmatprep.mubr.bf16.mxu0 0
  %647 = vmatmul.mubr.bf16.gmra.mxu0 %v376
  %v648 = vpop.f32.mrf.mxu0
  %v649 = vadd.f32 0.0, %v648
  %v650 = vpop.f32.mrf.mxu0
  %v651 = vpop.f32.mrf.mxu0
  %v652 = vadd.f32 0.0, %v651
  %v653 = vpop.f32.mrf.mxu0
  %654 = vmatprep.mubr.bf16.mxu0 0
  %655 = vmatmul.mubr.bf16.gmra.mxu0 %v377
  %v656 = vpop.f32.mrf.mxu0
  %v657 = vadd.f32 0.0, %v656
  %v658 = vpop.f32.mrf.mxu0
  %v659 = vpop.f32.mrf.mxu0
  %v660 = vadd.f32 0.0, %v659
  %v661 = vpop.f32.mrf.mxu0
  %662 = vmatprep.mubr.bf16.mxu0 0
  %663 = vmatmul.mubr.bf16.gmra.mxu0 %v378
  %v664 = vpop.f32.mrf.mxu0
  %v665 = vadd.f32 0.0, %v664
  %v666 = vpop.f32.mrf.mxu0
  %v667 = vpop.f32.mrf.mxu0
  %v668 = vadd.f32 0.0, %v667
  %v669 = vpop.f32.mrf.mxu0
  %670 = vmatprep.mubr.bf16.mxu0 0
  %671 = vmatmul.mubr.bf16.gmra.mxu0 %v379
  %v672 = vpop.f32.mrf.mxu0
  %v673 = vadd.f32 0.0, %v672
  %v674 = vpop.f32.mrf.mxu0
  %v675 = vpop.f32.mrf.mxu0
  %v676 = vadd.f32 0.0, %v675
  %v677 = vpop.f32.mrf.mxu0
  %678 = vmatprep.mubr.bf16.mxu0 0
  %679 = vmatmul.mubr.bf16.gmra.mxu0 %v380
  %v680 = vpop.f32.mrf.mxu0
  %v681 = vadd.f32 0.0, %v680
  %v682 = vpop.f32.mrf.mxu0
  %v683 = vpop.f32.mrf.mxu0
  %v684 = vadd.f32 0.0, %v683
  %v685 = vpop.f32.mrf.mxu0
  %686 = vmatprep.mubr.bf16.mxu0 0
  %687 = vmatmul.mubr.bf16.gmra.mxu0 %v381
  %v688 = vpop.f32.mrf.mxu0
  %v689 = vadd.f32 0.0, %v688
  %v690 = vpop.f32.mrf.mxu0
  %v691 = vpop.f32.mrf.mxu0
  %v692 = vadd.f32 0.0, %v691
  %v693 = vpop.f32.mrf.mxu0
  %694 = vmatprep.mubr.bf16.mxu0 0
  %695 = vmatmul.mubr.bf16.gmra.mxu0 %v382
  %v696 = vpop.f32.mrf.mxu0
  %v697 = vadd.f32 0.0, %v696
  %v698 = vpop.f32.mrf.mxu0
  %v699 = vpop.f32.mrf.mxu0
  %v700 = vadd.f32 0.0, %v699
  %v701 = vpop.f32.mrf.mxu0
  %702 = vmatprep.mubr.bf16.mxu0 0
  %703 = vmatmul.mubr.bf16.gmra.mxu0 %v383
  %v704 = vpop.f32.mrf.mxu0
  %v705 = vadd.f32 0.0, %v704
  %v706 = vpop.f32.mrf.mxu0
  %v707 = vpop.f32.mrf.mxu0
  %v708 = vadd.f32 0.0, %v707
  %v709 = vpop.f32.mrf.mxu0
  %710 = vmatprep.mubr.bf16.mxu0 0
  %711 = vmatmul.mubr.bf16.gmra.mxu0 %v384
  %v712 = vpop.f32.mrf.mxu0
  %v713 = vadd.f32 0.0, %v712
  %v714 = vpop.f32.mrf.mxu0
  %v715 = vpop.f32.mrf.mxu0
  %v716 = vadd.f32 0.0, %v715
  %v717 = vpop.f32.mrf.mxu0
  %718 = vmatprep.mubr.bf16.mxu0 0
  %719 = vmatmul.mubr.bf16.gmra.mxu0 %v385
  %v720 = vpop.f32.mrf.mxu0
  %v721 = vadd.f32 0.0, %v720
  %v722 = vpop.f32.mrf.mxu0
  %v723 = vpop.f32.mrf.mxu0
  %v724 = vadd.f32 0.0, %v723
  %v725 = vpop.f32.mrf.mxu0
  %726 = vmatprep.mubr.bf16.mxu0 0
  %727 = vmatmul.mubr.bf16.gmra.mxu0 %v386
  %v728 = vpop.f32.mrf.mxu0
  %v729 = vadd.f32 0.0, %v728
  %v730 = vpop.f32.mrf.mxu0
  %v731 = vpop.f32.mrf.mxu0
  %v732 = vadd.f32 0.0, %v731
  %v733 = vpop.f32.mrf.mxu0
  %734 = vmatprep.mubr.bf16.mxu0 0
  %735 = vmatmul.mubr.bf16.gmra.mxu0 %v387
  %v736 = vpop.f32.mrf.mxu0
  %v737 = vadd.f32 0.0, %v736
  %v738 = vpop.f32.mrf.mxu0
  %v739 = vpop.f32.mrf.mxu0
  %v740 = vadd.f32 0.0, %v739
  %v741 = vpop.f32.mrf.mxu0
  %742 = vmatprep.mubr.bf16.mxu0 0
  %743 = vmatmul.mubr.bf16.gmra.mxu0 %v388
  %v744 = vpop.f32.mrf.mxu0
  %v745 = vadd.f32 0.0, %v744
  %v746 = vpop.f32.mrf.mxu0
  %v747 = vpop.f32.mrf.mxu0
  %v748 = vadd.f32 0.0, %v747
  %v749 = vpop.f32.mrf.mxu0
  %750 = vmatprep.mubr.bf16.mxu0 0
  %751 = vmatmul.mubr.bf16.gmra.mxu0 %v389
  %v752 = vpop.f32.mrf.mxu0
  %v753 = vadd.f32 0.0, %v752
  %v754 = vpop.f32.mrf.mxu0
  %v755 = vpop.f32.mrf.mxu0
  %v756 = vadd.f32 0.0, %v755
  %v757 = vpop.f32.mrf.mxu0
  %758 = vdwg.mxu0
  %v759 = vadd.f32 %v86, %v505
  %v760 = vadd.f32 %v87, %v508
  %v761 = vadd.f32 %v88, %v513
  %v762 = vadd.f32 %v89, %v516
  %v763 = vadd.f32 %v90, %v521
  %v764 = vadd.f32 %v91, %v524
  %v765 = vadd.f32 %v92, %v529
  %v766 = vadd.f32 %v93, %v532
  %v767 = vadd.f32 %v94, %v537
  %v768 = vadd.f32 %v95, %v540
  %v769 = vadd.f32 %v96, %v545
  %v770 = vadd.f32 %v97, %v548
  %v771 = vadd.f32 %v98, %v553
  %v772 = vadd.f32 %v99, %v556
  %v773 = vadd.f32 %v100, %v561
  %v774 = vadd.f32 %v101, %v564
  %v775 = vadd.f32 %v102, %v569
  %v776 = vadd.f32 %v103, %v572
  %v777 = vadd.f32 %v104, %v577
  %v778 = vadd.f32 %v105, %v580
  %v779 = vadd.f32 %v106, %v585
  %v780 = vadd.f32 %v107, %v588
  %v781 = vadd.f32 %v108, %v593
  %v782 = vadd.f32 %v109, %v596
  %v783 = vadd.f32 %v110, %v601
  %v784 = vadd.f32 %v111, %v604
  %v785 = vadd.f32 %v112, %v609
  %v786 = vadd.f32 %v113, %v612
  %v787 = vadd.f32 %v114, %v617
  %v788 = vadd.f32 %v115, %v620
  %v789 = vadd.f32 %v116, %v625
  %v790 = vadd.f32 %v117, %v628
  %v791 = vadd.f32 %v118, %v633
  %v792 = vadd.f32 %v119, %v636
  %v793 = vadd.f32 %v120, %v641
  %v794 = vadd.f32 %v121, %v644
  %v795 = vadd.f32 %v122, %v649
  %v796 = vadd.f32 %v123, %v652
  %v797 = vadd.f32 %v124, %v657
  %v798 = vadd.f32 %v125, %v660
  %v799 = vadd.f32 %v126, %v665
  %v800 = vadd.f32 %v127, %v668
  %v801 = vadd.f32 %v128, %v673
  %v802 = vadd.f32 %v129, %v676
  %v803 = vadd.f32 %v130, %v681
  %v804 = vadd.f32 %v131, %v684
  %v805 = vadd.f32 %v132, %v689
  %v806 = vadd.f32 %v133, %v692
  %v807 = vadd.f32 %v134, %v697
  %v808 = vadd.f32 %v135, %v700
  %v809 = vadd.f32 %v136, %v705
  %v810 = vadd.f32 %v137, %v708
  %v811 = vadd.f32 %v138, %v713
  %v812 = vadd.f32 %v139, %v716
  %v813 = vadd.f32 %v140, %v721
  %v814 = vadd.f32 %v141, %v724
  %v815 = vadd.f32 %v142, %v729
  %v816 = vadd.f32 %v143, %v732
  %v817 = vadd.f32 %v144, %v737
  %v818 = vadd.f32 %v145, %v740
  %v819 = vadd.f32 %v146, %v745
  %v820 = vadd.f32 %v147, %v748
  %v821 = vadd.f32 %v148, %v753
  %v822 = vadd.f32 %v149, %v756
  %823 = vst [vmem:[#allocation2] sm:$0xff] %v759
  %824 = vst [vmem:[#allocation2 + $0x8] sm:$0xff] %v760
  %825 = vst [vmem:[#allocation2 + $0x10] sm:$0xff] %v761
  %826 = vst [vmem:[#allocation2 + $0x18] sm:$0xff] %v762
  %827 = vst [vmem:[#allocation2 + $0x20] sm:$0xff] %v763
  %828 = vst [vmem:[#allocation2 + $0x28] sm:$0xff] %v764
  %829 = vst [vmem:[#allocation2 + $0x30] sm:$0xff] %v765
  %830 = vst [vmem:[#allocation2 + $0x38] sm:$0xff] %v766
  %831 = vst [vmem:[#allocation2 + $0x40] sm:$0xff] %v767
  %832 = vst [vmem:[#allocation2 + $0x48] sm:$0xff] %v768
  %833 = vst [vmem:[#allocation2 + $0x50] sm:$0xff] %v769
  %834 = vst [vmem:[#allocation2 + $0x58] sm:$0xff] %v770
  %835 = vst [vmem:[#allocation2 + $0x60] sm:$0xff] %v771
  %836 = vst [vmem:[#allocation2 + $0x68] sm:$0xff] %v772
  %837 = vst [vmem:[#allocation2 + $0x70] sm:$0xff] %v773
  %838 = vst [vmem:[#allocation2 + $0x78] sm:$0xff] %v774
  %839 = vst [vmem:[#allocation2 + $0x80] sm:$0xff] %v775
  %840 = vst [vmem:[#allocation2 + $0x88] sm:$0xff] %v776
  %841 = vst [vmem:[#allocation2 + $0x90] sm:$0xff] %v777
  %842 = vst [vmem:[#allocation2 + $0x98] sm:$0xff] %v778
  %843 = vst [vmem:[#allocation2 + $0xa0] sm:$0xff] %v779
  %844 = vst [vmem:[#allocation2 + $0xa8] sm:$0xff] %v780
  %845 = vst [vmem:[#allocation2 + $0xb0] sm:$0xff] %v781
  %846 = vst [vmem:[#allocation2 + $0xb8] sm:$0xff] %v782
  %847 = vst [vmem:[#allocation2 + $0xc0] sm:$0xff] %v783
  %848 = vst [vmem:[#allocation2 + $0xc8] sm:$0xff] %v784
  %849 = vst [vmem:[#allocation2 + $0xd0] sm:$0xff] %v785
  %850 = vst [vmem:[#allocation2 + $0xd8] sm:$0xff] %v786
  %851 = vst [vmem:[#allocation2 + $0xe0] sm:$0xff] %v787
  %852 = vst [vmem:[#allocation2 + $0xe8] sm:$0xff] %v788
  %853 = vst [vmem:[#allocation2 + $0xf0] sm:$0xff] %v789
  %854 = vst [vmem:[#allocation2 + $0xf8] sm:$0xff] %v790
  %855 = vst [vmem:[#allocation2 + $0x100] sm:$0xff] %v791
  %856 = vst [vmem:[#allocation2 + $0x108] sm:$0xff] %v792
  %857 = vst [vmem:[#allocation2 + $0x110] sm:$0xff] %v793
  %858 = vst [vmem:[#allocation2 + $0x118] sm:$0xff] %v794
  %859 = vst [vmem:[#allocation2 + $0x120] sm:$0xff] %v795
  %860 = vst [vmem:[#allocation2 + $0x128] sm:$0xff] %v796
  %861 = vst [vmem:[#allocation2 + $0x130] sm:$0xff] %v797
  %862 = vst [vmem:[#allocation2 + $0x138] sm:$0xff] %v798
  %863 = vst [vmem:[#allocation2 + $0x140] sm:$0xff] %v799
  %864 = vst [vmem:[#allocation2 + $0x148] sm:$0xff] %v800
  %865 = vst [vmem:[#allocation2 + $0x150] sm:$0xff] %v801
  %866 = vst [vmem:[#allocation2 + $0x158] sm:$0xff] %v802
  %867 = vst [vmem:[#allocation2 + $0x160] sm:$0xff] %v803
  %868 = vst [vmem:[#allocation2 + $0x168] sm:$0xff] %v804
  %869 = vst [vmem:[#allocation2 + $0x170] sm:$0xff] %v805
  %870 = vst [vmem:[#allocation2 + $0x178] sm:$0xff] %v806
  %871 = vst [vmem:[#allocation2 + $0x180] sm:$0xff] %v807
  %872 = vst [vmem:[#allocation2 + $0x188] sm:$0xff] %v808
  %873 = vst [vmem:[#allocation2 + $0x190] sm:$0xff] %v809
  %874 = vst [vmem:[#allocation2 + $0x198] sm:$0xff] %v810
  %875 = vst [vmem:[#allocation2 + $0x1a0] sm:$0xff] %v811
  %876 = vst [vmem:[#allocation2 + $0x1a8] sm:$0xff] %v812
  %877 = vst [vmem:[#allocation2 + $0x1b0] sm:$0xff] %v813
  %878 = vst [vmem:[#allocation2 + $0x1b8] sm:$0xff] %v814
  %879 = vst [vmem:[#allocation2 + $0x1c0] sm:$0xff] %v815
  %880 = vst [vmem:[#allocation2 + $0x1c8] sm:$0xff] %v816
  %881 = vst [vmem:[#allocation2 + $0x1d0] sm:$0xff] %v817
  %882 = vst [vmem:[#allocation2 + $0x1d8] sm:$0xff] %v818
  %883 = vst [vmem:[#allocation2 + $0x1e0] sm:$0xff] %v819
  %884 = vst [vmem:[#allocation2 + $0x1e8] sm:$0xff] %v820
  %885 = vst [vmem:[#allocation2 + $0x1f0] sm:$0xff] %v821
  %886 = vst [vmem:[#allocation2 + $0x1f8] sm:$0xff] %v822
  // Predicated region
  $region22: #{res_up_forward.7} parent=0 // pred_check
    %p887 = pneg %p18
  $region23: #{res_up_forward.7} parent=0 // pred_check_branch
    %889 = sbr.rel (%p887) target = $region25
  $region24: #{res_up_forward.7} parent=0 // pred_region
    %v890 = vld [vmem:[#allocation2] sm:$0xff]
    %v891 = vld [vmem:[#allocation2 + $0x8] sm:$0xff]
    %v892 = vld [vmem:[#allocation2 + $0x10] sm:$0xff]
    %v893 = vld [vmem:[#allocation2 + $0x18] sm:$0xff]
    %v894 = vld [vmem:[#allocation2 + $0x20] sm:$0xff]
    %v895 = vld [vmem:[#allocation2 + $0x28] sm:$0xff]
    %v896 = vld [vmem:[#allocation2 + $0x30] sm:$0xff]
    %v897 = vld [vmem:[#allocation2 + $0x38] sm:$0xff]
    %v898 = vld [vmem:[#allocation2 + $0x40] sm:$0xff]
    %v899 = vld [vmem:[#allocation2 + $0x48] sm:$0xff]
    %v900 = vld [vmem:[#allocation2 + $0x50] sm:$0xff]
    %v901 = vld [vmem:[#allocation2 + $0x58] sm:$0xff]
    %v902 = vld [vmem:[#allocation2 + $0x60] sm:$0xff]
    %v903 = vld [vmem:[#allocation2 + $0x68] sm:$0xff]
    %v904 = vld [vmem:[#allocation2 + $0x70] sm:$0xff]
    %v905 = vld [vmem:[#allocation2 + $0x78] sm:$0xff]
    %v906 = vld [vmem:[#allocation2 + $0x80] sm:$0xff]
    %v907 = vld [vmem:[#allocation2 + $0x88] sm:$0xff]
    %v908 = vld [vmem:[#allocation2 + $0x90] sm:$0xff]
    %v909 = vld [vmem:[#allocation2 + $0x98] sm:$0xff]
    %v910 = vld [vmem:[#allocation2 + $0xa0] sm:$0xff]
    %v911 = vld [vmem:[#allocation2 + $0xa8] sm:$0xff]
    %v912 = vld [vmem:[#allocation2 + $0xb0] sm:$0xff]
    %v913 = vld [vmem:[#allocation2 + $0xb8] sm:$0xff]
    %v914 = vld [vmem:[#allocation2 + $0xc0] sm:$0xff]
    %v915 = vld [vmem:[#allocation2 + $0xc8] sm:$0xff]
    %v916 = vld [vmem:[#allocation2 + $0xd0] sm:$0xff]
    %v917 = vld [vmem:[#allocation2 + $0xd8] sm:$0xff]
    %v918 = vld [vmem:[#allocation2 + $0xe0] sm:$0xff]
    %v919 = vld [vmem:[#allocation2 + $0xe8] sm:$0xff]
    %v920 = vld [vmem:[#allocation2 + $0xf0] sm:$0xff]
    %v921 = vld [vmem:[#allocation2 + $0xf8] sm:$0xff]
    %v922 = vld [vmem:[#allocation2 + $0x100] sm:$0xff]
    %v923 = vld [vmem:[#allocation2 + $0x108] sm:$0xff]
    %v924 = vld [vmem:[#allocation2 + $0x110] sm:$0xff]
    %v925 = vld [vmem:[#allocation2 + $0x118] sm:$0xff]
    %v926 = vld [vmem:[#allocation2 + $0x120] sm:$0xff]
    %v927 = vld [vmem:[#allocation2 + $0x128] sm:$0xff]
    %v928 = vld [vmem:[#allocation2 + $0x130] sm:$0xff]
    %v929 = vld [vmem:[#allocation2 + $0x138] sm:$0xff]
    %v930 = vld [vmem:[#allocation2 + $0x140] sm:$0xff]
    %v931 = vld [vmem:[#allocation2 + $0x148] sm:$0xff]
    %v932 = vld [vmem:[#allocation2 + $0x150] sm:$0xff]
    %v933 = vld [vmem:[#allocation2 + $0x158] sm:$0xff]
    %v934 = vld [vmem:[#allocation2 + $0x160] sm:$0xff]
    %v935 = vld [vmem:[#allocation2 + $0x168] sm:$0xff]
    %v936 = vld [vmem:[#allocation2 + $0x170] sm:$0xff]
    %v937 = vld [vmem:[#allocation2 + $0x178] sm:$0xff]
    %v938 = vld [vmem:[#allocation2 + $0x180] sm:$0xff]
    %v939 = vld [vmem:[#allocation2 + $0x188] sm:$0xff]
    %v940 = vld [vmem:[#allocation2 + $0x190] sm:$0xff]
    %v941 = vld [vmem:[#allocation2 + $0x198] sm:$0xff]
    %v942 = vld [vmem:[#allocation2 + $0x1a0] sm:$0xff]
    %v943 = vld [vmem:[#allocation2 + $0x1a8] sm:$0xff]
    %v944 = vld [vmem:[#allocation2 + $0x1b0] sm:$0xff]
    %v945 = vld [vmem:[#allocation2 + $0x1b8] sm:$0xff]
    %v946 = vld [vmem:[#allocation2 + $0x1c0] sm:$0xff]
    %v947 = vld [vmem:[#allocation2 + $0x1c8] sm:$0xff]
    %v948 = vld [vmem:[#allocation2 + $0x1d0] sm:$0xff]
    %v949 = vld [vmem:[#allocation2 + $0x1d8] sm:$0xff]
    %v950 = vld [vmem:[#allocation2 + $0x1e0] sm:$0xff]
    %v951 = vld [vmem:[#allocation2 + $0x1e8] sm:$0xff]
    %v952 = vld [vmem:[#allocation2 + $0x1f0] sm:$0xff]
    %v953 = vld [vmem:[#allocation2 + $0x1f8] sm:$0xff]
    %v954 = vld [vmem:[%s2] sm:$0x1]
    %v956 = vlaneseq
    %v957 = vshrl.u32 %v956, 7
    %v958 = vsub.s32 0, %v957
    %v959 = vrot.slane %v954, %v958
    %v961 = vadd.f32 %v890, %v959
    %v962 = vadd.f32 %v891, %v959
    %v963 = vadd.f32 %v892, %v959
    %v964 = vadd.f32 %v893, %v959
    %v965 = vadd.f32 %v894, %v959
    %v966 = vadd.f32 %v895, %v959
    %v967 = vadd.f32 %v896, %v959
    %v968 = vadd.f32 %v897, %v959
    %v969 = vadd.f32 %v898, %v959
    %v970 = vadd.f32 %v899, %v959
    %v971 = vadd.f32 %v900, %v959
    %v972 = vadd.f32 %v901, %v959
    %v973 = vadd.f32 %v902, %v959
    %v974 = vadd.f32 %v903, %v959
    %v975 = vadd.f32 %v904, %v959
    %v976 = vadd.f32 %v905, %v959
    %v977 = vadd.f32 %v906, %v959
    %v978 = vadd.f32 %v907, %v959
    %v979 = vadd.f32 %v908, %v959
    %v980 = vadd.f32 %v909, %v959
    %v981 = vadd.f32 %v910, %v959
    %v982 = vadd.f32 %v911, %v959
    %v983 = vadd.f32 %v912, %v959
    %v984 = vadd.f32 %v913, %v959
    %v985 = vadd.f32 %v914, %v959
    %v986 = vadd.f32 %v915, %v959
    %v987 = vadd.f32 %v916, %v959
    %v988 = vadd.f32 %v917, %v959
    %v989 = vadd.f32 %v918, %v959
    %v990 = vadd.f32 %v919, %v959
    %v991 = vadd.f32 %v920, %v959
    %v992 = vadd.f32 %v921, %v959
    %v993 = vadd.f32 %v922, %v959
    %v994 = vadd.f32 %v923, %v959
    %v995 = vadd.f32 %v924, %v959
    %v996 = vadd.f32 %v925, %v959
    %v997 = vadd.f32 %v926, %v959
    %v998 = vadd.f32 %v927, %v959
    %v999 = vadd.f32 %v928, %v959
    %v1000 = vadd.f32 %v929, %v959
    %v1001 = vadd.f32 %v930, %v959
    %v1002 = vadd.f32 %v931, %v959
    %v1003 = vadd.f32 %v932, %v959
    %v1004 = vadd.f32 %v933, %v959
    %v1005 = vadd.f32 %v934, %v959
    %v1006 = vadd.f32 %v935, %v959
    %v1007 = vadd.f32 %v936, %v959
    %v1008 = vadd.f32 %v937, %v959
    %v1009 = vadd.f32 %v938, %v959
    %v1010 = vadd.f32 %v939, %v959
    %v1011 = vadd.f32 %v940, %v959
    %v1012 = vadd.f32 %v941, %v959
    %v1013 = vadd.f32 %v942, %v959
    %v1014 = vadd.f32 %v943, %v959
    %v1015 = vadd.f32 %v944, %v959
    %v1016 = vadd.f32 %v945, %v959
    %v1017 = vadd.f32 %v946, %v959
    %v1018 = vadd.f32 %v947, %v959
    %v1019 = vadd.f32 %v948, %v959
    %v1020 = vadd.f32 %v949, %v959
    %v1021 = vadd.f32 %v950, %v959
    %v1022 = vadd.f32 %v951, %v959
    %v1023 = vadd.f32 %v952, %v959
    %v1024 = vadd.f32 %v953, %v959
    %v1025 = vmul.f32 %v961, 0.999995
    %v1026 = vmul.f32 %v962, 0.999995
    %v1027 = vmul.f32 %v963, 0.999995
    %v1028 = vmul.f32 %v964, 0.999995
    %v1029 = vmul.f32 %v965, 0.999995
    %v1030 = vmul.f32 %v966, 0.999995
    %v1031 = vmul.f32 %v967, 0.999995
    %v1032 = vmul.f32 %v968, 0.999995
    %v1033 = vmul.f32 %v969, 0.999995
    %v1034 = vmul.f32 %v970, 0.999995
    %v1035 = vmul.f32 %v971, 0.999995
    %v1036 = vmul.f32 %v972, 0.999995
    %v1037 = vmul.f32 %v973, 0.999995
    %v1038 = vmul.f32 %v974, 0.999995
    %v1039 = vmul.f32 %v975, 0.999995
    %v1040 = vmul.f32 %v976, 0.999995
    %v1041 = vmul.f32 %v977, 0.999995
    %v1042 = vmul.f32 %v978, 0.999995
    %v1043 = vmul.f32 %v979, 0.999995
    %v1044 = vmul.f32 %v980, 0.999995
    %v1045 = vmul.f32 %v981, 0.999995
    %v1046 = vmul.f32 %v982, 0.999995
    %v1047 = vmul.f32 %v983, 0.999995
    %v1048 = vmul.f32 %v984, 0.999995
    %v1049 = vmul.f32 %v985, 0.999995
    %v1050 = vmul.f32 %v986, 0.999995
    %v1051 = vmul.f32 %v987, 0.999995
    %v1052 = vmul.f32 %v988, 0.999995
    %v1053 = vmul.f32 %v989, 0.999995
    %v1054 = vmul.f32 %v990, 0.999995
    %v1055 = vmul.f32 %v991, 0.999995
    %v1056 = vmul.f32 %v992, 0.999995
    %v1057 = vmul.f32 %v993, 0.999995
    %v1058 = vmul.f32 %v994, 0.999995
    %v1059 = vmul.f32 %v995, 0.999995
    %v1060 = vmul.f32 %v996, 0.999995
    %v1061 = vmul.f32 %v997, 0.999995
    %v1062 = vmul.f32 %v998, 0.999995
    %v1063 = vmul.f32 %v999, 0.999995
    %v1064 = vmul.f32 %v1000, 0.999995
    %v1065 = vmul.f32 %v1001, 0.999995
    %v1066 = vmul.f32 %v1002, 0.999995
    %v1067 = vmul.f32 %v1003, 0.999995
    %v1068 = vmul.f32 %v1004, 0.999995
    %v1069 = vmul.f32 %v1005, 0.999995
    %v1070 = vmul.f32 %v1006, 0.999995
    %v1071 = vmul.f32 %v1007, 0.999995
    %v1072 = vmul.f32 %v1008, 0.999995
    %v1073 = vmul.f32 %v1009, 0.999995
    %v1074 = vmul.f32 %v1010, 0.999995
    %v1075 = vmul.f32 %v1011, 0.999995
    %v1076 = vmul.f32 %v1012, 0.999995
    %v1077 = vmul.f32 %v1013, 0.999995
    %v1078 = vmul.f32 %v1014, 0.999995
    %v1079 = vmul.f32 %v1015, 0.999995
    %v1080 = vmul.f32 %v1016, 0.999995
    %v1081 = vmul.f32 %v1017, 0.999995
    %v1082 = vmul.f32 %v1018, 0.999995
    %v1083 = vmul.f32 %v1019, 0.999995
    %v1084 = vmul.f32 %v1020, 0.999995
    %v1085 = vmul.f32 %v1021, 0.999995
    %v1086 = vmul.f32 %v1022, 0.999995
    %v1087 = vmul.f32 %v1023, 0.999995
    %v1088 = vmul.f32 %v1024, 0.999995
    %v1089 = vmax.f32 %v1025, 0.0
    %v1090 = vmax.f32 %v1026, 0.0
    %v1091 = vmax.f32 %v1027, 0.0
    %v1092 = vmax.f32 %v1028, 0.0
    %v1093 = vmax.f32 %v1029, 0.0
    %v1094 = vmax.f32 %v1030, 0.0
    %v1095 = vmax.f32 %v1031, 0.0
    %v1096 = vmax.f32 %v1032, 0.0
    %v1097 = vmax.f32 %v1033, 0.0
    %v1098 = vmax.f32 %v1034, 0.0
    %v1099 = vmax.f32 %v1035, 0.0
    %v1100 = vmax.f32 %v1036, 0.0
    %v1101 = vmax.f32 %v1037, 0.0
    %v1102 = vmax.f32 %v1038, 0.0
    %v1103 = vmax.f32 %v1039, 0.0
    %v1104 = vmax.f32 %v1040, 0.0
    %v1105 = vmax.f32 %v1041, 0.0
    %v1106 = vmax.f32 %v1042, 0.0
    %v1107 = vmax.f32 %v1043, 0.0
    %v1108 = vmax.f32 %v1044, 0.0
    %v1109 = vmax.f32 %v1045, 0.0
    %v1110 = vmax.f32 %v1046, 0.0
    %v1111 = vmax.f32 %v1047, 0.0
    %v1112 = vmax.f32 %v1048, 0.0
    %v1113 = vmax.f32 %v1049, 0.0
    %v1114 = vmax.f32 %v1050, 0.0
    %v1115 = vmax.f32 %v1051, 0.0
    %v1116 = vmax.f32 %v1052, 0.0
    %v1117 = vmax.f32 %v1053, 0.0
    %v1118 = vmax.f32 %v1054, 0.0
    %v1119 = vmax.f32 %v1055, 0.0
    %v1120 = vmax.f32 %v1056, 0.0
    %v1121 = vmax.f32 %v1057, 0.0
    %v1122 = vmax.f32 %v1058, 0.0
    %v1123 = vmax.f32 %v1059, 0.0
    %v1124 = vmax.f32 %v1060, 0.0
    %v1125 = vmax.f32 %v1061, 0.0
    %v1126 = vmax.f32 %v1062, 0.0
    %v1127 = vmax.f32 %v1063, 0.0
    %v1128 = vmax.f32 %v1064, 0.0
    %v1129 = vmax.f32 %v1065, 0.0
    %v1130 = vmax.f32 %v1066, 0.0
    %v1131 = vmax.f32 %v1067, 0.0
    %v1132 = vmax.f32 %v1068, 0.0
    %v1133 = vmax.f32 %v1069, 0.0
    %v1134 = vmax.f32 %v1070, 0.0
    %v1135 = vmax.f32 %v1071, 0.0
    %v1136 = vmax.f32 %v1072, 0.0
    %v1137 = vmax.f32 %v1073, 0.0
    %v1138 = vmax.f32 %v1074, 0.0
    %v1139 = vmax.f32 %v1075, 0.0
    %v1140 = vmax.f32 %v1076, 0.0
    %v1141 = vmax.f32 %v1077, 0.0
    %v1142 = vmax.f32 %v1078, 0.0
    %v1143 = vmax.f32 %v1079, 0.0
    %v1144 = vmax.f32 %v1080, 0.0
    %v1145 = vmax.f32 %v1081, 0.0
    %v1146 = vmax.f32 %v1082, 0.0
    %v1147 = vmax.f32 %v1083, 0.0
    %v1148 = vmax.f32 %v1084, 0.0
    %v1149 = vmax.f32 %v1085, 0.0
    %v1150 = vmax.f32 %v1086, 0.0
    %v1151 = vmax.f32 %v1087, 0.0
    %v1152 = vmax.f32 %v1088, 0.0
    %v1153 = vld [vmem:[%s3] sm:$0xff]
    %v1154 = vld [vmem:[%s3 + $0x8] sm:$0xff]
    %v1155 = vld [vmem:[%s3 + $0x10] sm:$0xff]
    %v1156 = vld [vmem:[%s3 + $0x18] sm:$0xff]
    %v1157 = vld [vmem:[%s3 + $0x20] sm:$0xff]
    %v1158 = vld [vmem:[%s3 + $0x28] sm:$0xff]
    %v1159 = vld [vmem:[%s3 + $0x30] sm:$0xff]
    %v1160 = vld [vmem:[%s3 + $0x38] sm:$0xff]
    %v1161 = vld [vmem:[%s3 + $0x40] sm:$0xff]
    %v1162 = vld [vmem:[%s3 + $0x48] sm:$0xff]
    %v1163 = vld [vmem:[%s3 + $0x50] sm:$0xff]
    %v1164 = vld [vmem:[%s3 + $0x58] sm:$0xff]
    %v1165 = vld [vmem:[%s3 + $0x60] sm:$0xff]
    %v1166 = vld [vmem:[%s3 + $0x68] sm:$0xff]
    %v1167 = vld [vmem:[%s3 + $0x70] sm:$0xff]
    %v1168 = vld [vmem:[%s3 + $0x78] sm:$0xff]
    %v1169 = vld [vmem:[%s3 + $0x80] sm:$0xff]
    %v1170 = vld [vmem:[%s3 + $0x88] sm:$0xff]
    %v1171 = vld [vmem:[%s3 + $0x90] sm:$0xff]
    %v1172 = vld [vmem:[%s3 + $0x98] sm:$0xff]
    %v1173 = vld [vmem:[%s3 + $0xa0] sm:$0xff]
    %v1174 = vld [vmem:[%s3 + $0xa8] sm:$0xff]
    %v1175 = vld [vmem:[%s3 + $0xb0] sm:$0xff]
    %v1176 = vld [vmem:[%s3 + $0xb8] sm:$0xff]
    %v1177 = vld [vmem:[%s3 + $0xc0] sm:$0xff]
    %v1178 = vld [vmem:[%s3 + $0xc8] sm:$0xff]
    %v1179 = vld [vmem:[%s3 + $0xd0] sm:$0xff]
    %v1180 = vld [vmem:[%s3 + $0xd8] sm:$0xff]
    %v1181 = vld [vmem:[%s3 + $0xe0] sm:$0xff]
    %v1182 = vld [vmem:[%s3 + $0xe8] sm:$0xff]
    %v1183 = vld [vmem:[%s3 + $0xf0] sm:$0xff]
    %v1184 = vld [vmem:[%s3 + $0xf8] sm:$0xff]
    %v1185 = vld [vmem:[%s3 + $0x100] sm:$0xff]
    %v1186 = vld [vmem:[%s3 + $0x108] sm:$0xff]
    %v1187 = vld [vmem:[%s3 + $0x110] sm:$0xff]
    %v1188 = vld [vmem:[%s3 + $0x118] sm:$0xff]
    %v1189 = vld [vmem:[%s3 + $0x120] sm:$0xff]
    %v1190 = vld [vmem:[%s3 + $0x128] sm:$0xff]
    %v1191 = vld [vmem:[%s3 + $0x130] sm:$0xff]
    %v1192 = vld [vmem:[%s3 + $0x138] sm:$0xff]
    %v1193 = vld [vmem:[%s3 + $0x140] sm:$0xff]
    %v1194 = vld [vmem:[%s3 + $0x148] sm:$0xff]
    %v1195 = vld [vmem:[%s3 + $0x150] sm:$0xff]
    %v1196 = vld [vmem:[%s3 + $0x158] sm:$0xff]
    %v1197 = vld [vmem:[%s3 + $0x160] sm:$0xff]
    %v1198 = vld [vmem:[%s3 + $0x168] sm:$0xff]
    %v1199 = vld [vmem:[%s3 + $0x170] sm:$0xff]
    %v1200 = vld [vmem:[%s3 + $0x178] sm:$0xff]
    %v1201 = vld [vmem:[%s3 + $0x180] sm:$0xff]
    %v1202 = vld [vmem:[%s3 + $0x188] sm:$0xff]
    %v1203 = vld [vmem:[%s3 + $0x190] sm:$0xff]
    %v1204 = vld [vmem:[%s3 + $0x198] sm:$0xff]
    %v1205 = vld [vmem:[%s3 + $0x1a0] sm:$0xff]
    %v1206 = vld [vmem:[%s3 + $0x1a8] sm:$0xff]
    %v1207 = vld [vmem:[%s3 + $0x1b0] sm:$0xff]
    %v1208 = vld [vmem:[%s3 + $0x1b8] sm:$0xff]
    %v1209 = vld [vmem:[%s3 + $0x1c0] sm:$0xff]
    %v1210 = vld [vmem:[%s3 + $0x1c8] sm:$0xff]
    %v1211 = vld [vmem:[%s3 + $0x1d0] sm:$0xff]
    %v1212 = vld [vmem:[%s3 + $0x1d8] sm:$0xff]
    %v1213 = vld [vmem:[%s3 + $0x1e0] sm:$0xff]
    %v1214 = vld [vmem:[%s3 + $0x1e8] sm:$0xff]
    %v1215 = vld [vmem:[%s3 + $0x1f0] sm:$0xff]
    %v1216 = vld [vmem:[%s3 + $0x1f8] sm:$0xff]
    %v1217 = vadd.f32 %v1089, %v1153
    %v1218 = vadd.f32 %v1090, %v1154
    %v1219 = vadd.f32 %v1091, %v1155
    %v1220 = vadd.f32 %v1092, %v1156
    %v1221 = vadd.f32 %v1093, %v1157
    %v1222 = vadd.f32 %v1094, %v1158
    %v1223 = vadd.f32 %v1095, %v1159
    %v1224 = vadd.f32 %v1096, %v1160
    %v1225 = vadd.f32 %v1097, %v1161
    %v1226 = vadd.f32 %v1098, %v1162
    %v1227 = vadd.f32 %v1099, %v1163
    %v1228 = vadd.f32 %v1100, %v1164
    %v1229 = vadd.f32 %v1101, %v1165
    %v1230 = vadd.f32 %v1102, %v1166
    %v1231 = vadd.f32 %v1103, %v1167
    %v1232 = vadd.f32 %v1104, %v1168
    %v1233 = vadd.f32 %v1105, %v1169
    %v1234 = vadd.f32 %v1106, %v1170
    %v1235 = vadd.f32 %v1107, %v1171
    %v1236 = vadd.f32 %v1108, %v1172
    %v1237 = vadd.f32 %v1109, %v1173
    %v1238 = vadd.f32 %v1110, %v1174
    %v1239 = vadd.f32 %v1111, %v1175
    %v1240 = vadd.f32 %v1112, %v1176
    %v1241 = vadd.f32 %v1113, %v1177
    %v1242 = vadd.f32 %v1114, %v1178
    %v1243 = vadd.f32 %v1115, %v1179
    %v1244 = vadd.f32 %v1116, %v1180
    %v1245 = vadd.f32 %v1117, %v1181
    %v1246 = vadd.f32 %v1118, %v1182
    %v1247 = vadd.f32 %v1119, %v1183
    %v1248 = vadd.f32 %v1120, %v1184
    %v1249 = vadd.f32 %v1121, %v1185
    %v1250 = vadd.f32 %v1122, %v1186
    %v1251 = vadd.f32 %v1123, %v1187
    %v1252 = vadd.f32 %v1124, %v1188
    %v1253 = vadd.f32 %v1125, %v1189
    %v1254 = vadd.f32 %v1126, %v1190
    %v1255 = vadd.f32 %v1127, %v1191
    %v1256 = vadd.f32 %v1128, %v1192
    %v1257 = vadd.f32 %v1129, %v1193
    %v1258 = vadd.f32 %v1130, %v1194
    %v1259 = vadd.f32 %v1131, %v1195
    %v1260 = vadd.f32 %v1132, %v1196
    %v1261 = vadd.f32 %v1133, %v1197
    %v1262 = vadd.f32 %v1134, %v1198
    %v1263 = vadd.f32 %v1135, %v1199
    %v1264 = vadd.f32 %v1136, %v1200
    %v1265 = vadd.f32 %v1137, %v1201
    %v1266 = vadd.f32 %v1138, %v1202
    %v1267 = vadd.f32 %v1139, %v1203
    %v1268 = vadd.f32 %v1140, %v1204
    %v1269 = vadd.f32 %v1141, %v1205
    %v1270 = vadd.f32 %v1142, %v1206
    %v1271 = vadd.f32 %v1143, %v1207
    %v1272 = vadd.f32 %v1144, %v1208
    %v1273 = vadd.f32 %v1145, %v1209
    %v1274 = vadd.f32 %v1146, %v1210
    %v1275 = vadd.f32 %v1147, %v1211
    %v1276 = vadd.f32 %v1148, %v1212
    %v1277 = vadd.f32 %v1149, %v1213
    %v1278 = vadd.f32 %v1150, %v1214
    %v1279 = vadd.f32 %v1151, %v1215
    %v1280 = vadd.f32 %v1152, %v1216
    %1281 = vst [vmem:[%s4] sm:$0xff] %v1217
    %1282 = vst [vmem:[%s4 + $0x8] sm:$0xff] %v1218
    %1283 = vst [vmem:[%s4 + $0x10] sm:$0xff] %v1219
    %1284 = vst [vmem:[%s4 + $0x18] sm:$0xff] %v1220
    %1285 = vst [vmem:[%s4 + $0x20] sm:$0xff] %v1221
    %1286 = vst [vmem:[%s4 + $0x28] sm:$0xff] %v1222
    %1287 = vst [vmem:[%s4 + $0x30] sm:$0xff] %v1223
    %1288 = vst [vmem:[%s4 + $0x38] sm:$0xff] %v1224
    %1289 = vst [vmem:[%s4 + $0x40] sm:$0xff] %v1225
    %1290 = vst [vmem:[%s4 + $0x48] sm:$0xff] %v1226
    %1291 = vst [vmem:[%s4 + $0x50] sm:$0xff] %v1227
    %1292 = vst [vmem:[%s4 + $0x58] sm:$0xff] %v1228
    %1293 = vst [vmem:[%s4 + $0x60] sm:$0xff] %v1229
    %1294 = vst [vmem:[%s4 + $0x68] sm:$0xff] %v1230
    %1295 = vst [vmem:[%s4 + $0x70] sm:$0xff] %v1231
    %1296 = vst [vmem:[%s4 + $0x78] sm:$0xff] %v1232
    %1297 = vst [vmem:[%s4 + $0x80] sm:$0xff] %v1233
    %1298 = vst [vmem:[%s4 + $0x88] sm:$0xff] %v1234
    %1299 = vst [vmem:[%s4 + $0x90] sm:$0xff] %v1235
    %1300 = vst [vmem:[%s4 + $0x98] sm:$0xff] %v1236
    %1301 = vst [vmem:[%s4 + $0xa0] sm:$0xff] %v1237
    %1302 = vst [vmem:[%s4 + $0xa8] sm:$0xff] %v1238
    %1303 = vst [vmem:[%s4 + $0xb0] sm:$0xff] %v1239
    %1304 = vst [vmem:[%s4 + $0xb8] sm:$0xff] %v1240
    %1305 = vst [vmem:[%s4 + $0xc0] sm:$0xff] %v1241
    %1306 = vst [vmem:[%s4 + $0xc8] sm:$0xff] %v1242
    %1307 = vst [vmem:[%s4 + $0xd0] sm:$0xff] %v1243
    %1308 = vst [vmem:[%s4 + $0xd8] sm:$0xff] %v1244
    %1309 = vst [vmem:[%s4 + $0xe0] sm:$0xff] %v1245
    %1310 = vst [vmem:[%s4 + $0xe8] sm:$0xff] %v1246
    %1311 = vst [vmem:[%s4 + $0xf0] sm:$0xff] %v1247
    %1312 = vst [vmem:[%s4 + $0xf8] sm:$0xff] %v1248
    %1313 = vst [vmem:[%s4 + $0x100] sm:$0xff] %v1249
    %1314 = vst [vmem:[%s4 + $0x108] sm:$0xff] %v1250
    %1315 = vst [vmem:[%s4 + $0x110] sm:$0xff] %v1251
    %1316 = vst [vmem:[%s4 + $0x118] sm:$0xff] %v1252
    %1317 = vst [vmem:[%s4 + $0x120] sm:$0xff] %v1253
    %1318 = vst [vmem:[%s4 + $0x128] sm:$0xff] %v1254
    %1319 = vst [vmem:[%s4 + $0x130] sm:$0xff] %v1255
    %1320 = vst [vmem:[%s4 + $0x138] sm:$0xff] %v1256
    %1321 = vst [vmem:[%s4 + $0x140] sm:$0xff] %v1257
    %1322 = vst [vmem:[%s4 + $0x148] sm:$0xff] %v1258
    %1323 = vst [vmem:[%s4 + $0x150] sm:$0xff] %v1259
    %1324 = vst [vmem:[%s4 + $0x158] sm:$0xff] %v1260
    %1325 = vst [vmem:[%s4 + $0x160] sm:$0xff] %v1261
    %1326 = vst [vmem:[%s4 + $0x168] sm:$0xff] %v1262
    %1327 = vst [vmem:[%s4 + $0x170] sm:$0xff] %v1263
    %1328 = vst [vmem:[%s4 + $0x178] sm:$0xff] %v1264
    %1329 = vst [vmem:[%s4 + $0x180] sm:$0xff] %v1265
    %1330 = vst [vmem:[%s4 + $0x188] sm:$0xff] %v1266
    %1331 = vst [vmem:[%s4 + $0x190] sm:$0xff] %v1267
    %1332 = vst [vmem:[%s4 + $0x198] sm:$0xff] %v1268
    %1333 = vst [vmem:[%s4 + $0x1a0] sm:$0xff] %v1269
    %1334 = vst [vmem:[%s4 + $0x1a8] sm:$0xff] %v1270
    %1335 = vst [vmem:[%s4 + $0x1b0] sm:$0xff] %v1271
    %1336 = vst [vmem:[%s4 + $0x1b8] sm:$0xff] %v1272
    %1337 = vst [vmem:[%s4 + $0x1c0] sm:$0xff] %v1273
    %1338 = vst [vmem:[%s4 + $0x1c8] sm:$0xff] %v1274
    %1339 = vst [vmem:[%s4 + $0x1d0] sm:$0xff] %v1275
    %1340 = vst [vmem:[%s4 + $0x1d8] sm:$0xff] %v1276
    %1341 = vst [vmem:[%s4 + $0x1e0] sm:$0xff] %v1277
    %1342 = vst [vmem:[%s4 + $0x1e8] sm:$0xff] %v1278
    %1343 = vst [vmem:[%s4 + $0x1f0] sm:$0xff] %v1279
    %1344 = vst [vmem:[%s4 + $0x1f8] sm:$0xff] %v1280
  $region25: #{res_up_forward.7} parent=0 // pred_fallthru
    _
  // Predicated region
  $region26: #{res_up_forward.7} parent=0 // pred_check
    _
  $region27: #{res_up_forward.7} parent=0 // pred_check_branch
    %1346 = sbr.rel (0) target = $region29
  $region28: #{res_up_forward.7} parent=0 // pred_region
    _
  $region29: #{res_up_forward.7} parent=0 // pred_fallthru
    _
  // Predicated region
  $region30: #{res_up_forward.7} parent=0 // pred_check
    _
  $region31: #{res_up_forward.7} parent=0 // pred_check_branch
    %1348 = sbr.rel (0) target = $region33
  $region32: #{res_up_forward.7} parent=0 // pred_region
    _
  $region33: #{res_up_forward.7} parent=0 // pred_fallthru
    _

</llo_original>
